<compile_context>
chip_gen: v7x
topology: tpu7x:2x2x1
jax: 0.10.0
libtpu: 0.0.40
codegen_flags: <defaults>
</compile_context>

<pallas_src>
import functools

import numpy as np

import jax
import jax.numpy as jnp
from jax.experimental import pallas as pl
from jax.experimental.pallas import tpu as pltpu


# ----------------------------------------------------------------------------
# Pallas kernel: upsample(x1) + pad + concat + (conv3x3 -> BN -> ReLU) x 2
# ----------------------------------------------------------------------------
def _up_double_conv_kernel(x2_ref, x1_ref, up_ref, w1a_ref, w1b_ref, b1_ref,
                           w2_ref, b2_ref, mask_ref, out_ref,
                           ext2_ref, ext1_ref, extm_ref, *, width, ext):
    # Per grid step (one batch image):
    #   x2_ref  : (1, C2, HW)      skip connection, flattened spatial
    #   x1_ref  : (1, C1, hw)      deeper feature map, flattened small grid
    #   up_ref  : (hw, HW)         fused bilinear-upsample + center-pad matrix
    #   w1a_ref : (9, Cm, C2)      conv1 taps (t = dy*3+dx) for x2, BN1-scaled
    #   w1b_ref : (9, Cm, C1)      conv1 taps for upsampled x1, BN1-scaled
    #   b1_ref  : (Cm, 1)          folded BN1 shift
    #   w2_ref  : (9, Co, Cm)      conv2 taps, BN2-scaled
    #   b2_ref  : (Co, 1)          folded BN2 shift
    #   mask_ref: (2, HW)          row0 zeroes col==0, row1 zeroes col==W-1
    #   out_ref : (1, Co, HW)      lane-dense output
    #   ext*_ref: (C, HW + 2*ext)  zero-extended flat staging buffers (VMEM)
    hw_out = out_ref.shape[2]
    c_mid = extm_ref.shape[0]

    def stage(dst_ref, value):
        # Zero only the two lane-aligned side extensions (needed so the
        # shifted windows below read zeros for row over/underflow); the
        # interior is fully overwritten every step -> no full-buffer memset.
        c = dst_ref.shape[0]
        dst_ref[:, 0:ext] = jnp.zeros((c, ext), jnp.float32)
        dst_ref[:, ext + hw_out:2 * ext + hw_out] = jnp.zeros((c, ext),
                                                              jnp.float32)
        dst_ref[:, ext:ext + hw_out] = value

    # Skip connection goes straight in; x1 is upsampled (bilinear x2,
    # align_corners=True) and center-padded by a single MXU matmul.
    stage(ext2_ref, x2_ref[0])
    stage(ext1_ref, jnp.dot(x1_ref[0], up_ref[...],
                            preferred_element_type=jnp.float32))

    mask_l = mask_ref[0:1, :]   # kills contributions that wrapped past col 0
    mask_r = mask_ref[1:2, :]   # kills contributions that wrapped past col W-1

    def conv3x3(operands, n_out, bias):
        # operands: list of (ext_ref, w_ref).  3x3 SAME conv on the flat
        # spatial axis: 9 shifted windows, each a [n_out, Cin] @ [Cin, HW]
        # MXU matmul with HW on lanes.  Row over/underflow reads the zero
        # extension; column wrap is removed by one mask multiply per
        # dx-group of taps (applied to the tiny partial accumulator).
        acc = jnp.zeros((n_out, hw_out), jnp.float32)
        for dx in range(3):
            part = jnp.zeros((n_out, hw_out), jnp.float32)
            for dy in range(3):
                t = dy * 3 + dx
                off = ext + (dy - 1) * width + (dx - 1)
                for ext_ref, w_ref in operands:
                    patch = ext_ref[:, off:off + hw_out]
                    part = part + jnp.dot(w_ref[t], patch,
                                          preferred_element_type=jnp.float32)
            if dx == 0:
                part = part * mask_l
            elif dx == 2:
                part = part * mask_r
            acc = acc + part
        return jnp.maximum(acc + bias, 0.0)   # folded-BN shift + ReLU

    # conv1 + BN1 + ReLU: K accumulation split across the two concat inputs
    y1 = conv3x3([(ext2_ref, w1a_ref), (ext1_ref, w1b_ref)],
                 c_mid, b1_ref[...])
    stage(extm_ref, y1)

    # conv2 + BN2 + ReLU -> lane-dense store
    out_ref[0] = conv3x3([(extm_ref, w2_ref)], out_ref.shape[1], b2_ref[...])


# ----------------------------------------------------------------------------
# Host-side constant builders (numpy -> baked as constants at trace time)
# ----------------------------------------------------------------------------
def _build_upsample_pad_matrix(h, w, H, W):
    """(h*w, H*W) matrix M such that x1_flat @ M == flatten(pad(upsample2x(x1)))
    with bilinear align_corners=True upsampling and UNet centering pad."""
    Ho, Wo = 2 * h, 2 * w
    dY, dX = H - Ho, W - Wo
    py, px = dY // 2, dX // 2

    def coeffs(n_in, n_out):
        a = np.zeros((n_out, n_in), np.float32)
        for o in range(n_out):
            if n_in == 1:
                a[o, 0] = 1.0
                continue
            src = o * (n_in - 1) / (n_out - 1)
            i0 = min(int(np.floor(src)), n_in - 1)
            i1 = min(i0 + 1, n_in - 1)
            f = src - i0
            a[o, i0] += 1.0 - f
            a[o, i1] += f
        return a

    ay = coeffs(h, Ho)   # (Ho, h)
    ax = coeffs(w, Wo)   # (Wo, w)
    m = np.zeros((h * w, H * W), np.float32)
    for yo in range(Ho):
        for xo in range(Wo):
            dst = (yo + py) * W + (xo + px)
            m[:, dst] = np.outer(ay[yo], ax[xo]).reshape(-1)
    return m


def _build_col_masks(H, W):
    col = np.arange(H * W) % W
    return np.stack([(col != 0), (col != W - 1)]).astype(np.float32)  # (2, HW)


# ----------------------------------------------------------------------------
# pallas_call wrapper
# ----------------------------------------------------------------------------
def _up_double_conv_pallas(x2_flat, x1_flat, kp, H, W, h, w):
    B, c2, hw_out = x2_flat.shape
    _, c1, hw_in = x1_flat.shape
    c_mid = kp["w1a"].shape[1]
    c_out = kp["w2"].shape[1]
    ext = 128                       # zero extension, lane-aligned; needs >= W+1
    assert ext >= W + 1

    up_mat = jnp.asarray(_build_upsample_pad_matrix(h, w, H, W))
    masks = jnp.asarray(_build_col_masks(H, W))

    kernel = functools.partial(_up_double_conv_kernel, width=W, ext=ext)
    return pl.pallas_call(
        kernel,
        out_shape=jax.ShapeDtypeStruct((B, c_out, hw_out), jnp.float32),
        grid=(B,),
        in_specs=[
            pl.BlockSpec((1, c2, hw_out), lambda b: (b, 0, 0)),
            pl.BlockSpec((1, c1, hw_in), lambda b: (b, 0, 0)),
            pl.BlockSpec((hw_in, hw_out), lambda b: (0, 0)),
            pl.BlockSpec((9, c_mid, c2), lambda b: (0, 0, 0)),
            pl.BlockSpec((9, c_mid, c1), lambda b: (0, 0, 0)),
            pl.BlockSpec((c_mid, 1), lambda b: (0, 0)),
            pl.BlockSpec((9, c_out, c_mid), lambda b: (0, 0, 0)),
            pl.BlockSpec((c_out, 1), lambda b: (0, 0)),
            pl.BlockSpec((2, hw_out), lambda b: (0, 0)),
        ],
        out_specs=pl.BlockSpec((1, c_out, hw_out), lambda b: (b, 0, 0)),
        scratch_shapes=[
            pltpu.VMEM((c2, hw_out + 2 * ext), jnp.float32),
            pltpu.VMEM((c1, hw_out + 2 * ext), jnp.float32),
            pltpu.VMEM((c_mid, hw_out + 2 * ext), jnp.float32),
        ],
        # Batch images are independent -> shard across the two v7x
        # TensorCores; no effect on single-TC v5e/v6e.
        compiler_params=pltpu.CompilerParams(
            dimension_semantics=("parallel",)),
    )(x2_flat, x1_flat, up_mat, kp["w1a"], kp["w1b"], kp["b1"],
      kp["w2"], kp["b2"], masks)


@jax.jit
def up_forward(x1_nchw, x2_nchw, kparams):
    """Pallas forward of Up: NCHW in -> NCHW out (no transposes needed)."""
    B, c1, h, w = x1_nchw.shape
    _, c2, H, W = x2_nchw.shape
    x1_flat = x1_nchw.reshape(B, c1, h * w).astype(jnp.float32)
    x2_flat = x2_nchw.reshape(B, c2, H * W).astype(jnp.float32)
    out_flat = _up_double_conv_pallas(x2_flat, x1_flat, kparams, H, W, h, w)
    return out_flat.reshape(B, -1, H, W)


# ----------------------------------------------------------------------------
# Parameters (BatchNorm folded, eval mode) + kernel-layout preparation
# ----------------------------------------------------------------------------
def make_params(key, in_channels, out_channels):
    # bilinear=True branch: DoubleConv(in_channels, out_channels, in_channels//2)
    c_cat, c_mid, c_out = in_channels, in_channels // 2, out_channels
    eps = 1e-5
    ks = jax.random.split(key, 10)

    def bn_fold(kg, kb, km, kv, c):
        gamma = jax.random.uniform(kg, (c,), jnp.float32, 0.5, 1.5)
        beta = jax.random.normal(kb, (c,), jnp.float32) * 0.1
        mean = jax.random.normal(km, (c,), jnp.float32) * 0.1
        var = jax.random.uniform(kv, (c,), jnp.float32, 0.5, 1.5)
        scale = gamma / jnp.sqrt(var + eps)
        shift = beta - mean * scale
        return scale.reshape(1, c), shift.reshape(1, c)

    w1 = jax.random.normal(ks[0], (3, 3, c_cat, c_mid), jnp.float32) * 0.1
    s1, b1 = bn_fold(ks[1], ks[2], ks[3], ks[4], c_mid)
    w2 = jax.random.normal(ks[5], (3, 3, c_mid, c_out), jnp.float32) * 0.1
    s2, b2 = bn_fold(ks[6], ks[7], ks[8], ks[9], c_out)
    return dict(w1=w1, s1=s1, b1=b1, w2=w2, s2=s2, b2=b2)


def prepare_kernel_params(p, c_skip):
    """HWIO weights + BN scale/shift -> kernel layout with scale folded in.

    Kernel weight layout is (9, Cout, Cin), tap index t = dy*3 + dx; conv1's
    input channels are split between the skip (x2, first c_skip) and the
    upsampled x1 (rest), matching torch.cat([x2, x1], dim=1).
    """
    w1 = jnp.transpose(p["w1"], (0, 1, 3, 2)) * p["s1"].reshape(1, 1, -1, 1)
    w1 = w1.reshape(9, w1.shape[2], w1.shape[3])          # (9, Cmid, Ccat)
    w2 = jnp.transpose(p["w2"], (0, 1, 3, 2)) * p["s2"].reshape(1, 1, -1, 1)
    w2 = w2.reshape(9, w2.shape[2], w2.shape[3])          # (9, Cout, Cmid)
    return dict(
        w1a=w1[:, :, :c_skip],
        w1b=w1[:, :, c_skip:],
        b1=p["b1"].reshape(-1, 1),
        w2=w2,
        b2=p["b2"].reshape(-1, 1),
    )


# ----------------------------------------------------------------------------
# Pure-JAX reference (independent implementation) for a sanity check
# ----------------------------------------------------------------------------
def _upsample_bilinear_x2_ac(x):  # x: (B, H, W, C) -> (B, 2H, 2W, C)
    B, H, W, C = x.shape
    Ho, Wo = 2 * H, 2 * W

    def coords(n_in, n_out):
        if n_in == 1:
            return jnp.zeros((n_out,), jnp.float32)
        return jnp.arange(n_out, dtype=jnp.float32) * (n_in - 1) / (n_out - 1)

    yy, xx = coords(H, Ho), coords(W, Wo)
    y0 = jnp.clip(jnp.floor(yy).astype(jnp.int32), 0, H - 1)
    y1 = jnp.clip(y0 + 1, 0, H - 1)
    x0 = jnp.clip(jnp.floor(xx).astype(jnp.int32), 0, W - 1)
    x1 = jnp.clip(x0 + 1, 0, W - 1)
    wy = (yy - y0.astype(jnp.float32))[None, :, None, None]
    wx = (xx - x0.astype(jnp.float32))[None, None, :, None]

    top, bot = x[:, y0, :, :], x[:, y1, :, :]
    tl, tr = top[:, :, x0, :], top[:, :, x1, :]
    bl, br = bot[:, :, x0, :], bot[:, :, x1, :]
    return ((1.0 - wy) * ((1.0 - wx) * tl + wx * tr)
            + wy * ((1.0 - wx) * bl + wx * br))


def _merge_inputs(x1_nchw, x2_nchw):
    x1 = jnp.transpose(x1_nchw, (0, 2, 3, 1)).astype(jnp.float32)
    x2 = jnp.transpose(x2_nchw, (0, 2, 3, 1)).astype(jnp.float32)
    x1 = _upsample_bilinear_x2_ac(x1)
    dY = x2.shape[1] - x1.shape[1]
    dX = x2.shape[2] - x1.shape[2]
    x1 = jnp.pad(x1, ((0, 0), (dY // 2, dY - dY // 2),
                      (dX // 2, dX - dX // 2), (0, 0)))
    return jnp.concatenate([x2, x1], axis=-1)  # == torch.cat([x2, x1], dim=1)


def up_forward_ref(x1_nchw, x2_nchw, p):
    x = _merge_inputs(x1_nchw, x2_nchw)

    def conv_bn_relu(z, w, s, b):
        y = jax.lax.conv_general_dilated(
            z, w, (1, 1), "SAME",
            dimension_numbers=("NHWC", "HWIO", "NHWC"))
        return jnp.maximum(y * s.reshape(1, 1, 1, -1) + b.reshape(1, 1, 1, -1),
                           0.0)

    y = conv_bn_relu(x, p["w1"], p["s1"], p["b1"])
    y = conv_bn_relu(y, p["w2"], p["s2"], p["b2"])
    return jnp.transpose(y, (0, 3, 1, 2))


if __name__ == "__main__":
    # Up(in_channels=8, out_channels=4, bilinear=True)
    #   x1: deeper feature map (in_channels//2 = 4 ch, 8x8)
    #   x2: skip connection   (in_channels//2 = 4 ch, 16x16)
    B, in_channels, out_channels = 2, 8, 4
    key = jax.random.PRNGKey(0)
    k1, k2, kp = jax.random.split(key, 3)
    x1 = jax.random.normal(k1, (B, in_channels // 2, 8, 8), jnp.float32)
    x2 = jax.random.normal(k2, (B, in_channels // 2, 16, 16), jnp.float32)

    params = make_params(kp, in_channels, out_channels)
    kparams = prepare_kernel_params(params, c_skip=in_channels // 2)

    out = jax.block_until_ready(up_forward(x1, x2, kparams))
    assert out.shape == (B, out_channels, 16, 16), out.shape

    ref = jax.block_until_ready(up_forward_ref(x1, x2, params))
    # loose tolerance: TPU default matmul precision is bf16-class
    assert jnp.allclose(out, ref, rtol=5e-2, atol=5e-2), (
        float(jnp.max(jnp.abs(out - ref))))

    print("KERNEL_OK")
</pallas_src>

<mosaic_0001>
module attributes {stable_mosaic.version = 11 : i64} {
  func.func @_up_double_conv_kernel(%arg0: i32, %arg1: memref<1x4x256xf32, #tpu.memory_space<vmem>>, %arg2: memref<1x4x64xf32, #tpu.memory_space<vmem>>, %arg3: memref<64x256xf32, #tpu.memory_space<vmem>>, %arg4: memref<9x4x4xf32, #tpu.memory_space<vmem>>, %arg5: memref<9x4x4xf32, #tpu.memory_space<vmem>>, %arg6: memref<4x1xf32, #tpu.memory_space<vmem>>, %arg7: memref<9x4x4xf32, #tpu.memory_space<vmem>>, %arg8: memref<4x1xf32, #tpu.memory_space<vmem>>, %arg9: memref<2x256xf32, #tpu.memory_space<vmem>>, %arg10: memref<1x4x256xf32, #tpu.memory_space<vmem>>, %arg11: memref<4x512xf32, #tpu.memory_space<vmem>>, %arg12: memref<4x512xf32, #tpu.memory_space<vmem>>, %arg13: memref<4x512xf32, #tpu.memory_space<vmem>>) attributes {dimension_semantics = [#tpu.dimension_semantics<parallel>], iteration_bounds = array<i64: 2>, scalar_prefetch = 0 : i64, scratch_operands = 3 : i64, tpu.core_type = #tpu.core_type<tc>, window_params = [{transform_indices = @transform_0, window_bounds = array<i64: 1, 4, 256>}, {transform_indices = @transform_1, window_bounds = array<i64: 1, 4, 64>}, {pipeline_mode = #tpu.pipeline_mode<synchronous>, transform_indices = @transform_2, window_bounds = array<i64: 64, 256>}, {pipeline_mode = #tpu.pipeline_mode<synchronous>, transform_indices = @transform_3, window_bounds = array<i64: 9, 4, 4>}, {pipeline_mode = #tpu.pipeline_mode<synchronous>, transform_indices = @transform_4, window_bounds = array<i64: 9, 4, 4>}, {pipeline_mode = #tpu.pipeline_mode<synchronous>, transform_indices = @transform_5, window_bounds = array<i64: 4, 1>}, {pipeline_mode = #tpu.pipeline_mode<synchronous>, transform_indices = @transform_6, window_bounds = array<i64: 9, 4, 4>}, {pipeline_mode = #tpu.pipeline_mode<synchronous>, transform_indices = @transform_7, window_bounds = array<i64: 4, 1>}, {pipeline_mode = #tpu.pipeline_mode<synchronous>, transform_indices = @transform_8, window_bounds = array<i64: 2, 256>}, {transform_indices = @transform_9, window_bounds = array<i64: 1, 4, 256>}]} {
    %c0 = arith.constant 0 : index
    %c0_0 = arith.constant 0 : index
    %c0_1 = arith.constant 0 : index
    %0 = vector.load %arg1[%c0, %c0_0, %c0_1] : memref<1x4x256xf32, #tpu.memory_space<vmem>>, vector<1x4x256xf32>
    %1 = vector.shape_cast %0 : vector<1x4x256xf32> to vector<4x256xf32>
    %cst = arith.constant 0.000000e+00 : f32
    %2 = vector.broadcast %cst : f32 to vector<4x128xf32>
    %c0_2 = arith.constant 0 : index
    %c0_3 = arith.constant 0 : index
    %3 = vector.load %arg11[%c0_2, %c0_3] : memref<4x512xf32, #tpu.memory_space<vmem>>, vector<4x128xf32>
    tpu.vector_store %arg11[%c0_2, %c0_3], %2 {strides = array<i32>} : memref<4x512xf32, #tpu.memory_space<vmem>>, vector<4x128xf32>,
    %cst_4 = arith.constant 0.000000e+00 : f32
    %4 = vector.broadcast %cst_4 : f32 to vector<4x128xf32>
    %c0_5 = arith.constant 0 : index
    %c384 = arith.constant 384 : index
    %5 = vector.load %arg11[%c0_5, %c384] : memref<4x512xf32, #tpu.memory_space<vmem>>, vector<4x128xf32>
    tpu.vector_store %arg11[%c0_5, %c384], %4 {strides = array<i32>} : memref<4x512xf32, #tpu.memory_space<vmem>>, vector<4x128xf32>,
    %c0_6 = arith.constant 0 : index
    %c128 = arith.constant 128 : index
    %6 = vector.load %arg11[%c0_6, %c128] : memref<4x512xf32, #tpu.memory_space<vmem>>, vector<4x256xf32>
    tpu.vector_store %arg11[%c0_6, %c128], %1 {strides = array<i32>} : memref<4x512xf32, #tpu.memory_space<vmem>>, vector<4x256xf32>,
    %c0_7 = arith.constant 0 : index
    %c0_8 = arith.constant 0 : index
    %c0_9 = arith.constant 0 : index
    %7 = vector.load %arg2[%c0_7, %c0_8, %c0_9] : memref<1x4x64xf32, #tpu.memory_space<vmem>>, vector<1x4x64xf32>
    %8 = vector.shape_cast %7 : vector<1x4x64xf32> to vector<4x64xf32>
    %c0_10 = arith.constant 0 : index
    %c0_11 = arith.constant 0 : index
    %9 = vector.load %arg3[%c0_10, %c0_11] : memref<64x256xf32, #tpu.memory_space<vmem>>, vector<64x256xf32>
    %cst_12 = arith.constant dense<0.000000e+00> : vector<4x256xf32>
    %10 = tpu.matmul %8, %9, %cst_12 {dimension_numbers = #tpu.dot_dimension_numbers<[1], [0], [0], [1], [0, 0, 1, 1], [], []>} : vector<4x64xf32>, vector<64x256xf32>, vector<4x256xf32> -> vector<4x256xf32>
    %cst_13 = arith.constant 0.000000e+00 : f32
    %11 = vector.broadcast %cst_13 : f32 to vector<4x128xf32>
    %c0_14 = arith.constant 0 : index
    %c0_15 = arith.constant 0 : index
    %12 = vector.load %arg12[%c0_14, %c0_15] : memref<4x512xf32, #tpu.memory_space<vmem>>, vector<4x128xf32>
    tpu.vector_store %arg12[%c0_14, %c0_15], %11 {strides = array<i32>} : memref<4x512xf32, #tpu.memory_space<vmem>>, vector<4x128xf32>,
    %cst_16 = arith.constant 0.000000e+00 : f32
    %13 = vector.broadcast %cst_16 : f32 to vector<4x128xf32>
    %c0_17 = arith.constant 0 : index
    %c384_18 = arith.constant 384 : index
    %14 = vector.load %arg12[%c0_17, %c384_18] : memref<4x512xf32, #tpu.memory_space<vmem>>, vector<4x128xf32>
    tpu.vector_store %arg12[%c0_17, %c384_18], %13 {strides = array<i32>} : memref<4x512xf32, #tpu.memory_space<vmem>>, vector<4x128xf32>,
    %c0_19 = arith.constant 0 : index
    %c128_20 = arith.constant 128 : index
    %15 = vector.load %arg12[%c0_19, %c128_20] : memref<4x512xf32, #tpu.memory_space<vmem>>, vector<4x256xf32>
    tpu.vector_store %arg12[%c0_19, %c128_20], %10 {strides = array<i32>} : memref<4x512xf32, #tpu.memory_space<vmem>>, vector<4x256xf32>,
    %c0_21 = arith.constant 0 : index
    %c0_22 = arith.constant 0 : index
    %16 = vector.load %arg9[%c0_21, %c0_22] : memref<2x256xf32, #tpu.memory_space<vmem>>, vector<1x256xf32>
    %c1 = arith.constant 1 : index
    %c0_23 = arith.constant 0 : index
    %17 = vector.load %arg9[%c1, %c0_23] : memref<2x256xf32, #tpu.memory_space<vmem>>, vector<1x256xf32>
    %c0_24 = arith.constant 0 : index
    %c0_25 = arith.constant 0 : index
    %18 = vector.load %arg6[%c0_24, %c0_25] : memref<4x1xf32, #tpu.memory_space<vmem>>, vector<4x1xf32>
    %cst_26 = arith.constant 0.000000e+00 : f32
    %19 = vector.broadcast %cst_26 : f32 to vector<4x256xf32>
    %cst_27 = arith.constant 0.000000e+00 : f32
    %20 = vector.broadcast %cst_27 : f32 to vector<4x256xf32>
    %c0_28 = arith.constant 0 : index
    %c111 = arith.constant 111 : index
    %21 = vector.load %arg11[%c0_28, %c111] : memref<4x512xf32, #tpu.memory_space<vmem>>, vector<4x256xf32>
    %c0_29 = arith.constant 0 : index
    %c0_30 = arith.constant 0 : index
    %c0_31 = arith.constant 0 : index
    %22 = vector.load %arg4[%c0_29, %c0_30, %c0_31] : memref<9x4x4xf32, #tpu.memory_space<vmem>>, vector<1x4x4xf32>
    %23 = vector.shape_cast %22 : vector<1x4x4xf32> to vector<4x4xf32>
    %cst_32 = arith.constant dense<0.000000e+00> : vector<4x256xf32>
    %24 = tpu.matmul %23, %21, %cst_32 {dimension_numbers = #tpu.dot_dimension_numbers<[1], [0], [0], [1], [0, 0, 1, 1], [], []>} : vector<4x4xf32>, vector<4x256xf32>, vector<4x256xf32> -> vector<4x256xf32>
    %25 = arith.addf %20, %24 : vector<4x256xf32>
    %c0_33 = arith.constant 0 : index
    %c111_34 = arith.constant 111 : index
    %26 = vector.load %arg12[%c0_33, %c111_34] : memref<4x512xf32, #tpu.memory_space<vmem>>, vector<4x256xf32>
    %c0_35 = arith.constant 0 : index
    %c0_36 = arith.constant 0 : index
    %c0_37 = arith.constant 0 : index
    %27 = vector.load %arg5[%c0_35, %c0_36, %c0_37] : memref<9x4x4xf32, #tpu.memory_space<vmem>>, vector<1x4x4xf32>
    %28 = vector.shape_cast %27 : vector<1x4x4xf32> to vector<4x4xf32>
    %cst_38 = arith.constant dense<0.000000e+00> : vector<4x256xf32>
    %29 = tpu.matmul %28, %26, %cst_38 {dimension_numbers = #tpu.dot_dimension_numbers<[1], [0], [0], [1], [0, 0, 1, 1], [], []>} : vector<4x4xf32>, vector<4x256xf32>, vector<4x256xf32> -> vector<4x256xf32>
    %30 = arith.addf %25, %29 : vector<4x256xf32>
    %c0_39 = arith.constant 0 : index
    %c127 = arith.constant 127 : index
    %31 = vector.load %arg11[%c0_39, %c127] : memref<4x512xf32, #tpu.memory_space<vmem>>, vector<4x256xf32>
    %c3 = arith.constant 3 : index
    %c0_40 = arith.constant 0 : index
    %c0_41 = arith.constant 0 : index
    %32 = vector.load %arg4[%c3, %c0_40, %c0_41] : memref<9x4x4xf32, #tpu.memory_space<vmem>>, vector<1x4x4xf32>
    %33 = vector.shape_cast %32 : vector<1x4x4xf32> to vector<4x4xf32>
    %cst_42 = arith.constant dense<0.000000e+00> : vector<4x256xf32>
    %34 = tpu.matmul %33, %31, %cst_42 {dimension_numbers = #tpu.dot_dimension_numbers<[1], [0], [0], [1], [0, 0, 1, 1], [], []>} : vector<4x4xf32>, vector<4x256xf32>, vector<4x256xf32> -> vector<4x256xf32>
    %35 = arith.addf %30, %34 : vector<4x256xf32>
    %c0_43 = arith.constant 0 : index
    %c127_44 = arith.constant 127 : index
    %36 = vector.load %arg12[%c0_43, %c127_44] : memref<4x512xf32, #tpu.memory_space<vmem>>, vector<4x256xf32>
    %c3_45 = arith.constant 3 : index
    %c0_46 = arith.constant 0 : index
    %c0_47 = arith.constant 0 : index
    %37 = vector.load %arg5[%c3_45, %c0_46, %c0_47] : memref<9x4x4xf32, #tpu.memory_space<vmem>>, vector<1x4x4xf32>
    %38 = vector.shape_cast %37 : vector<1x4x4xf32> to vector<4x4xf32>
    %cst_48 = arith.constant dense<0.000000e+00> : vector<4x256xf32>
    %39 = tpu.matmul %38, %36, %cst_48 {dimension_numbers = #tpu.dot_dimension_numbers<[1], [0], [0], [1], [0, 0, 1, 1], [], []>} : vector<4x4xf32>, vector<4x256xf32>, vector<4x256xf32> -> vector<4x256xf32>
    %40 = arith.addf %35, %39 : vector<4x256xf32>
    %c0_49 = arith.constant 0 : index
    %c143 = arith.constant 143 : index
    %41 = vector.load %arg11[%c0_49, %c143] : memref<4x512xf32, #tpu.memory_space<vmem>>, vector<4x256xf32>
    %c6 = arith.constant 6 : index
    %c0_50 = arith.constant 0 : index
    %c0_51 = arith.constant 0 : index
    %42 = vector.load %arg4[%c6, %c0_50, %c0_51] : memref<9x4x4xf32, #tpu.memory_space<vmem>>, vector<1x4x4xf32>
    %43 = vector.shape_cast %42 : vector<1x4x4xf32> to vector<4x4xf32>
    %cst_52 = arith.constant dense<0.000000e+00> : vector<4x256xf32>
    %44 = tpu.matmul %43, %41, %cst_52 {dimension_numbers = #tpu.dot_dimension_numbers<[1], [0], [0], [1], [0, 0, 1, 1], [], []>} : vector<4x4xf32>, vector<4x256xf32>, vector<4x256xf32> -> vector<4x256xf32>
    %45 = arith.addf %40, %44 : vector<4x256xf32>
    %c0_53 = arith.constant 0 : index
    %c143_54 = arith.constant 143 : index
    %46 = vector.load %arg12[%c0_53, %c143_54] : memref<4x512xf32, #tpu.memory_space<vmem>>, vector<4x256xf32>
    %c6_55 = arith.constant 6 : index
    %c0_56 = arith.constant 0 : index
    %c0_57 = arith.constant 0 : index
    %47 = vector.load %arg5[%c6_55, %c0_56, %c0_57] : memref<9x4x4xf32, #tpu.memory_space<vmem>>, vector<1x4x4xf32>
    %48 = vector.shape_cast %47 : vector<1x4x4xf32> to vector<4x4xf32>
    %cst_58 = arith.constant dense<0.000000e+00> : vector<4x256xf32>
    %49 = tpu.matmul %48, %46, %cst_58 {dimension_numbers = #tpu.dot_dimension_numbers<[1], [0], [0], [1], [0, 0, 1, 1], [], []>} : vector<4x4xf32>, vector<4x256xf32>, vector<4x256xf32> -> vector<4x256xf32>
    %50 = arith.addf %45, %49 : vector<4x256xf32>
    %51 = vector.broadcast %16 : vector<1x256xf32> to vector<4x256xf32>
    %52 = arith.mulf %50, %51 : vector<4x256xf32>
    %53 = arith.addf %19, %52 : vector<4x256xf32>
    %cst_59 = arith.constant 0.000000e+00 : f32
    %54 = vector.broadcast %cst_59 : f32 to vector<4x256xf32>
    %c0_60 = arith.constant 0 : index
    %c112 = arith.constant 112 : index
    %55 = vector.load %arg11[%c0_60, %c112] : memref<4x512xf32, #tpu.memory_space<vmem>>, vector<4x256xf32>
    %c1_61 = arith.constant 1 : index
    %c0_62 = arith.constant 0 : index
    %c0_63 = arith.constant 0 : index
    %56 = vector.load %arg4[%c1_61, %c0_62, %c0_63] : memref<9x4x4xf32, #tpu.memory_space<vmem>>, vector<1x4x4xf32>
    %57 = vector.shape_cast %56 : vector<1x4x4xf32> to vector<4x4xf32>
    %cst_64 = arith.constant dense<0.000000e+00> : vector<4x256xf32>
    %58 = tpu.matmul %57, %55, %cst_64 {dimension_numbers = #tpu.dot_dimension_numbers<[1], [0], [0], [1], [0, 0, 1, 1], [], []>} : vector<4x4xf32>, vector<4x256xf32>, vector<4x256xf32> -> vector<4x256xf32>
    %59 = arith.addf %54, %58 : vector<4x256xf32>
    %c0_65 = arith.constant 0 : index
    %c112_66 = arith.constant 112 : index
    %60 = vector.load %arg12[%c0_65, %c112_66] : memref<4x512xf32, #tpu.memory_space<vmem>>, vector<4x256xf32>
    %c1_67 = arith.constant 1 : index
    %c0_68 = arith.constant 0 : index
    %c0_69 = arith.constant 0 : index
    %61 = vector.load %arg5[%c1_67, %c0_68, %c0_69] : memref<9x4x4xf32, #tpu.memory_space<vmem>>, vector<1x4x4xf32>
    %62 = vector.shape_cast %61 : vector<1x4x4xf32> to vector<4x4xf32>
    %cst_70 = arith.constant dense<0.000000e+00> : vector<4x256xf32>
    %63 = tpu.matmul %62, %60, %cst_70 {dimension_numbers = #tpu.dot_dimension_numbers<[1], [0], [0], [1], [0, 0, 1, 1], [], []>} : vector<4x4xf32>, vector<4x256xf32>, vector<4x256xf32> -> vector<4x256xf32>
    %64 = arith.addf %59, %63 : vector<4x256xf32>
    %c0_71 = arith.constant 0 : index
    %c128_72 = arith.constant 128 : index
    %65 = vector.load %arg11[%c0_71, %c128_72] : memref<4x512xf32, #tpu.memory_space<vmem>>, vector<4x256xf32>
    %c4 = arith.constant 4 : index
    %c0_73 = arith.constant 0 : index
    %c0_74 = arith.constant 0 : index
    %66 = vector.load %arg4[%c4, %c0_73, %c0_74] : memref<9x4x4xf32, #tpu.memory_space<vmem>>, vector<1x4x4xf32>
    %67 = vector.shape_cast %66 : vector<1x4x4xf32> to vector<4x4xf32>
    %cst_75 = arith.constant dense<0.000000e+00> : vector<4x256xf32>
    %68 = tpu.matmul %67, %65, %cst_75 {dimension_numbers = #tpu.dot_dimension_numbers<[1], [0], [0], [1], [0, 0, 1, 1], [], []>} : vector<4x4xf32>, vector<4x256xf32>, vector<4x256xf32> -> vector<4x256xf32>
    %69 = arith.addf %64, %68 : vector<4x256xf32>
    %c0_76 = arith.constant 0 : index
    %c128_77 = arith.constant 128 : index
    %70 = vector.load %arg12[%c0_76, %c128_77] : memref<4x512xf32, #tpu.memory_space<vmem>>, vector<4x256xf32>
    %c4_78 = arith.constant 4 : index
    %c0_79 = arith.constant 0 : index
    %c0_80 = arith.constant 0 : index
    %71 = vector.load %arg5[%c4_78, %c0_79, %c0_80] : memref<9x4x4xf32, #tpu.memory_space<vmem>>, vector<1x4x4xf32>
    %72 = vector.shape_cast %71 : vector<1x4x4xf32> to vector<4x4xf32>
    %cst_81 = arith.constant dense<0.000000e+00> : vector<4x256xf32>
    %73 = tpu.matmul %72, %70, %cst_81 {dimension_numbers = #tpu.dot_dimension_numbers<[1], [0], [0], [1], [0, 0, 1, 1], [], []>} : vector<4x4xf32>, vector<4x256xf32>, vector<4x256xf32> -> vector<4x256xf32>
    %74 = arith.addf %69, %73 : vector<4x256xf32>
    %c0_82 = arith.constant 0 : index
    %c144 = arith.constant 144 : index
    %75 = vector.load %arg11[%c0_82, %c144] : memref<4x512xf32, #tpu.memory_space<vmem>>, vector<4x256xf32>
    %c7 = arith.constant 7 : index
    %c0_83 = arith.constant 0 : index
    %c0_84 = arith.constant 0 : index
    %76 = vector.load %arg4[%c7, %c0_83, %c0_84] : memref<9x4x4xf32, #tpu.memory_space<vmem>>, vector<1x4x4xf32>
    %77 = vector.shape_cast %76 : vector<1x4x4xf32> to vector<4x4xf32>
    %cst_85 = arith.constant dense<0.000000e+00> : vector<4x256xf32>
    %78 = tpu.matmul %77, %75, %cst_85 {dimension_numbers = #tpu.dot_dimension_numbers<[1], [0], [0], [1], [0, 0, 1, 1], [], []>} : vector<4x4xf32>, vector<4x256xf32>, vector<4x256xf32> -> vector<4x256xf32>
    %79 = arith.addf %74, %78 : vector<4x256xf32>
    %c0_86 = arith.constant 0 : index
    %c144_87 = arith.constant 144 : index
    %80 = vector.load %arg12[%c0_86, %c144_87] : memref<4x512xf32, #tpu.memory_space<vmem>>, vector<4x256xf32>
    %c7_88 = arith.constant 7 : index
    %c0_89 = arith.constant 0 : index
    %c0_90 = arith.constant 0 : index
    %81 = vector.load %arg5[%c7_88, %c0_89, %c0_90] : memref<9x4x4xf32, #tpu.memory_space<vmem>>, vector<1x4x4xf32>
    %82 = vector.shape_cast %81 : vector<1x4x4xf32> to vector<4x4xf32>
    %cst_91 = arith.constant dense<0.000000e+00> : vector<4x256xf32>
    %83 = tpu.matmul %82, %80, %cst_91 {dimension_numbers = #tpu.dot_dimension_numbers<[1], [0], [0], [1], [0, 0, 1, 1], [], []>} : vector<4x4xf32>, vector<4x256xf32>, vector<4x256xf32> -> vector<4x256xf32>
    %84 = arith.addf %79, %83 : vector<4x256xf32>
    %85 = arith.addf %53, %84 : vector<4x256xf32>
    %cst_92 = arith.constant 0.000000e+00 : f32
    %86 = vector.broadcast %cst_92 : f32 to vector<4x256xf32>
    %c0_93 = arith.constant 0 : index
    %c113 = arith.constant 113 : index
    %87 = vector.load %arg11[%c0_93, %c113] : memref<4x512xf32, #tpu.memory_space<vmem>>, vector<4x256xf32>
    %c2 = arith.constant 2 : index
    %c0_94 = arith.constant 0 : index
    %c0_95 = arith.constant 0 : index
    %88 = vector.load %arg4[%c2, %c0_94, %c0_95] : memref<9x4x4xf32, #tpu.memory_space<vmem>>, vector<1x4x4xf32>
    %89 = vector.shape_cast %88 : vector<1x4x4xf32> to vector<4x4xf32>
    %cst_96 = arith.constant dense<0.000000e+00> : vector<4x256xf32>
    %90 = tpu.matmul %89, %87, %cst_96 {dimension_numbers = #tpu.dot_dimension_numbers<[1], [0], [0], [1], [0, 0, 1, 1], [], []>} : vector<4x4xf32>, vector<4x256xf32>, vector<4x256xf32> -> vector<4x256xf32>
    %91 = arith.addf %86, %90 : vector<4x256xf32>
    %c0_97 = arith.constant 0 : index
    %c113_98 = arith.constant 113 : index
    %92 = vector.load %arg12[%c0_97, %c113_98] : memref<4x512xf32, #tpu.memory_space<vmem>>, vector<4x256xf32>
    %c2_99 = arith.constant 2 : index
    %c0_100 = arith.constant 0 : index
    %c0_101 = arith.constant 0 : index
    %93 = vector.load %arg5[%c2_99, %c0_100, %c0_101] : memref<9x4x4xf32, #tpu.memory_space<vmem>>, vector<1x4x4xf32>
    %94 = vector.shape_cast %93 : vector<1x4x4xf32> to vector<4x4xf32>
    %cst_102 = arith.constant dense<0.000000e+00> : vector<4x256xf32>
    %95 = tpu.matmul %94, %92, %cst_102 {dimension_numbers = #tpu.dot_dimension_numbers<[1], [0], [0], [1], [0, 0, 1, 1], [], []>} : vector<4x4xf32>, vector<4x256xf32>, vector<4x256xf32> -> vector<4x256xf32>
    %96 = arith.addf %91, %95 : vector<4x256xf32>
    %c0_103 = arith.constant 0 : index
    %c129 = arith.constant 129 : index
    %97 = vector.load %arg11[%c0_103, %c129] : memref<4x512xf32, #tpu.memory_space<vmem>>, vector<4x256xf32>
    %c5 = arith.constant 5 : index
    %c0_104 = arith.constant 0 : index
    %c0_105 = arith.constant 0 : index
    %98 = vector.load %arg4[%c5, %c0_104, %c0_105] : memref<9x4x4xf32, #tpu.memory_space<vmem>>, vector<1x4x4xf32>
    %99 = vector.shape_cast %98 : vector<1x4x4xf32> to vector<4x4xf32>
    %cst_106 = arith.constant dense<0.000000e+00> : vector<4x256xf32>
    %100 = tpu.matmul %99, %97, %cst_106 {dimension_numbers = #tpu.dot_dimension_numbers<[1], [0], [0], [1], [0, 0, 1, 1], [], []>} : vector<4x4xf32>, vector<4x256xf32>, vector<4x256xf32> -> vector<4x256xf32>
    %101 = arith.addf %96, %100 : vector<4x256xf32>
    %c0_107 = arith.constant 0 : index
    %c129_108 = arith.constant 129 : index
    %102 = vector.load %arg12[%c0_107, %c129_108] : memref<4x512xf32, #tpu.memory_space<vmem>>, vector<4x256xf32>
    %c5_109 = arith.constant 5 : index
    %c0_110 = arith.constant 0 : index
    %c0_111 = arith.constant 0 : index
    %103 = vector.load %arg5[%c5_109, %c0_110, %c0_111] : memref<9x4x4xf32, #tpu.memory_space<vmem>>, vector<1x4x4xf32>
    %104 = vector.shape_cast %103 : vector<1x4x4xf32> to vector<4x4xf32>
    %cst_112 = arith.constant dense<0.000000e+00> : vector<4x256xf32>
    %105 = tpu.matmul %104, %102, %cst_112 {dimension_numbers = #tpu.dot_dimension_numbers<[1], [0], [0], [1], [0, 0, 1, 1], [], []>} : vector<4x4xf32>, vector<4x256xf32>, vector<4x256xf32> -> vector<4x256xf32>
    %106 = arith.addf %101, %105 : vector<4x256xf32>
    %c0_113 = arith.constant 0 : index
    %c145 = arith.constant 145 : index
    %107 = vector.load %arg11[%c0_113, %c145] : memref<4x512xf32, #tpu.memory_space<vmem>>, vector<4x256xf32>
    %c8 = arith.constant 8 : index
    %c0_114 = arith.constant 0 : index
    %c0_115 = arith.constant 0 : index
    %108 = vector.load %arg4[%c8, %c0_114, %c0_115] : memref<9x4x4xf32, #tpu.memory_space<vmem>>, vector<1x4x4xf32>
    %109 = vector.shape_cast %108 : vector<1x4x4xf32> to vector<4x4xf32>
    %cst_116 = arith.constant dense<0.000000e+00> : vector<4x256xf32>
    %110 = tpu.matmul %109, %107, %cst_116 {dimension_numbers = #tpu.dot_dimension_numbers<[1], [0], [0], [1], [0, 0, 1, 1], [], []>} : vector<4x4xf32>, vector<4x256xf32>, vector<4x256xf32> -> vector<4x256xf32>
    %111 = arith.addf %106, %110 : vector<4x256xf32>
    %c0_117 = arith.constant 0 : index
    %c145_118 = arith.constant 145 : index
    %112 = vector.load %arg12[%c0_117, %c145_118] : memref<4x512xf32, #tpu.memory_space<vmem>>, vector<4x256xf32>
    %c8_119 = arith.constant 8 : index
    %c0_120 = arith.constant 0 : index
    %c0_121 = arith.constant 0 : index
    %113 = vector.load %arg5[%c8_119, %c0_120, %c0_121] : memref<9x4x4xf32, #tpu.memory_space<vmem>>, vector<1x4x4xf32>
    %114 = vector.shape_cast %113 : vector<1x4x4xf32> to vector<4x4xf32>
    %cst_122 = arith.constant dense<0.000000e+00> : vector<4x256xf32>
    %115 = tpu.matmul %114, %112, %cst_122 {dimension_numbers = #tpu.dot_dimension_numbers<[1], [0], [0], [1], [0, 0, 1, 1], [], []>} : vector<4x4xf32>, vector<4x256xf32>, vector<4x256xf32> -> vector<4x256xf32>
    %116 = arith.addf %111, %115 : vector<4x256xf32>
    %117 = vector.broadcast %17 : vector<1x256xf32> to vector<4x256xf32>
    %118 = arith.mulf %116, %117 : vector<4x256xf32>
    %119 = arith.addf %85, %118 : vector<4x256xf32>
    %120 = vector.broadcast %18 : vector<4x1xf32> to vector<4x256xf32>
    %121 = arith.addf %119, %120 : vector<4x256xf32>
    %cst_123 = arith.constant 0.000000e+00 : f32
    %122 = vector.broadcast %cst_123 : f32 to vector<4x256xf32>
    %123 = arith.maximumf %121, %122 : vector<4x256xf32>
    %cst_124 = arith.constant 0.000000e+00 : f32
    %124 = vector.broadcast %cst_124 : f32 to vector<4x128xf32>
    %c0_125 = arith.constant 0 : index
    %c0_126 = arith.constant 0 : index
    %125 = vector.load %arg13[%c0_125, %c0_126] : memref<4x512xf32, #tpu.memory_space<vmem>>, vector<4x128xf32>
    tpu.vector_store %arg13[%c0_125, %c0_126], %124 {strides = array<i32>} : memref<4x512xf32, #tpu.memory_space<vmem>>, vector<4x128xf32>,
    %cst_127 = arith.constant 0.000000e+00 : f32
    %126 = vector.broadcast %cst_127 : f32 to vector<4x128xf32>
    %c0_128 = arith.constant 0 : index
    %c384_129 = arith.constant 384 : index
    %127 = vector.load %arg13[%c0_128, %c384_129] : memref<4x512xf32, #tpu.memory_space<vmem>>, vector<4x128xf32>
    tpu.vector_store %arg13[%c0_128, %c384_129], %126 {strides = array<i32>} : memref<4x512xf32, #tpu.memory_space<vmem>>, vector<4x128xf32>,
    %c0_130 = arith.constant 0 : index
    %c128_131 = arith.constant 128 : index
    %128 = vector.load %arg13[%c0_130, %c128_131] : memref<4x512xf32, #tpu.memory_space<vmem>>, vector<4x256xf32>
    tpu.vector_store %arg13[%c0_130, %c128_131], %123 {strides = array<i32>} : memref<4x512xf32, #tpu.memory_space<vmem>>, vector<4x256xf32>,
    %c0_132 = arith.constant 0 : index
    %c0_133 = arith.constant 0 : index
    %129 = vector.load %arg8[%c0_132, %c0_133] : memref<4x1xf32, #tpu.memory_space<vmem>>, vector<4x1xf32>
    %cst_134 = arith.constant 0.000000e+00 : f32
    %130 = vector.broadcast %cst_134 : f32 to vector<4x256xf32>
    %cst_135 = arith.constant 0.000000e+00 : f32
    %131 = vector.broadcast %cst_135 : f32 to vector<4x256xf32>
    %c0_136 = arith.constant 0 : index
    %c111_137 = arith.constant 111 : index
    %132 = vector.load %arg13[%c0_136, %c111_137] : memref<4x512xf32, #tpu.memory_space<vmem>>, vector<4x256xf32>
    %c0_138 = arith.constant 0 : index
    %c0_139 = arith.constant 0 : index
    %c0_140 = arith.constant 0 : index
    %133 = vector.load %arg7[%c0_138, %c0_139, %c0_140] : memref<9x4x4xf32, #tpu.memory_space<vmem>>, vector<1x4x4xf32>
    %134 = vector.shape_cast %133 : vector<1x4x4xf32> to vector<4x4xf32>
    %cst_141 = arith.constant dense<0.000000e+00> : vector<4x256xf32>
    %135 = tpu.matmul %134, %132, %cst_141 {dimension_numbers = #tpu.dot_dimension_numbers<[1], [0], [0], [1], [0, 0, 1, 1], [], []>} : vector<4x4xf32>, vector<4x256xf32>, vector<4x256xf32> -> vector<4x256xf32>
    %136 = arith.addf %131, %135 : vector<4x256xf32>
    %c0_142 = arith.constant 0 : index
    %c127_143 = arith.constant 127 : index
    %137 = vector.load %arg13[%c0_142, %c127_143] : memref<4x512xf32, #tpu.memory_space<vmem>>, vector<4x256xf32>
    %c3_144 = arith.constant 3 : index
    %c0_145 = arith.constant 0 : index
    %c0_146 = arith.constant 0 : index
    %138 = vector.load %arg7[%c3_144, %c0_145, %c0_146] : memref<9x4x4xf32, #tpu.memory_space<vmem>>, vector<1x4x4xf32>
    %139 = vector.shape_cast %138 : vector<1x4x4xf32> to vector<4x4xf32>
    %cst_147 = arith.constant dense<0.000000e+00> : vector<4x256xf32>
    %140 = tpu.matmul %139, %137, %cst_147 {dimension_numbers = #tpu.dot_dimension_numbers<[1], [0], [0], [1], [0, 0, 1, 1], [], []>} : vector<4x4xf32>, vector<4x256xf32>, vector<4x256xf32> -> vector<4x256xf32>
    %141 = arith.addf %136, %140 : vector<4x256xf32>
    %c0_148 = arith.constant 0 : index
    %c143_149 = arith.constant 143 : index
    %142 = vector.load %arg13[%c0_148, %c143_149] : memref<4x512xf32, #tpu.memory_space<vmem>>, vector<4x256xf32>
    %c6_150 = arith.constant 6 : index
    %c0_151 = arith.constant 0 : index
    %c0_152 = arith.constant 0 : index
    %143 = vector.load %arg7[%c6_150, %c0_151, %c0_152] : memref<9x4x4xf32, #tpu.memory_space<vmem>>, vector<1x4x4xf32>
    %144 = vector.shape_cast %143 : vector<1x4x4xf32> to vector<4x4xf32>
    %cst_153 = arith.constant dense<0.000000e+00> : vector<4x256xf32>
    %145 = tpu.matmul %144, %142, %cst_153 {dimension_numbers = #tpu.dot_dimension_numbers<[1], [0], [0], [1], [0, 0, 1, 1], [], []>} : vector<4x4xf32>, vector<4x256xf32>, vector<4x256xf32> -> vector<4x256xf32>
    %146 = arith.addf %141, %145 : vector<4x256xf32>
    %147 = vector.broadcast %16 : vector<1x256xf32> to vector<4x256xf32>
    %148 = arith.mulf %146, %147 : vector<4x256xf32>
    %149 = arith.addf %130, %148 : vector<4x256xf32>
    %cst_154 = arith.constant 0.000000e+00 : f32
    %150 = vector.broadcast %cst_154 : f32 to vector<4x256xf32>
    %c0_155 = arith.constant 0 : index
    %c112_156 = arith.constant 112 : index
    %151 = vector.load %arg13[%c0_155, %c112_156] : memref<4x512xf32, #tpu.memory_space<vmem>>, vector<4x256xf32>
    %c1_157 = arith.constant 1 : index
    %c0_158 = arith.constant 0 : index
    %c0_159 = arith.constant 0 : index
    %152 = vector.load %arg7[%c1_157, %c0_158, %c0_159] : memref<9x4x4xf32, #tpu.memory_space<vmem>>, vector<1x4x4xf32>
    %153 = vector.shape_cast %152 : vector<1x4x4xf32> to vector<4x4xf32>
    %cst_160 = arith.constant dense<0.000000e+00> : vector<4x256xf32>
    %154 = tpu.matmul %153, %151, %cst_160 {dimension_numbers = #tpu.dot_dimension_numbers<[1], [0], [0], [1], [0, 0, 1, 1], [], []>} : vector<4x4xf32>, vector<4x256xf32>, vector<4x256xf32> -> vector<4x256xf32>
    %155 = arith.addf %150, %154 : vector<4x256xf32>
    %c0_161 = arith.constant 0 : index
    %c128_162 = arith.constant 128 : index
    %156 = vector.load %arg13[%c0_161, %c128_162] : memref<4x512xf32, #tpu.memory_space<vmem>>, vector<4x256xf32>
    %c4_163 = arith.constant 4 : index
    %c0_164 = arith.constant 0 : index
    %c0_165 = arith.constant 0 : index
    %157 = vector.load %arg7[%c4_163, %c0_164, %c0_165] : memref<9x4x4xf32, #tpu.memory_space<vmem>>, vector<1x4x4xf32>
    %158 = vector.shape_cast %157 : vector<1x4x4xf32> to vector<4x4xf32>
    %cst_166 = arith.constant dense<0.000000e+00> : vector<4x256xf32>
    %159 = tpu.matmul %158, %156, %cst_166 {dimension_numbers = #tpu.dot_dimension_numbers<[1], [0], [0], [1], [0, 0, 1, 1], [], []>} : vector<4x4xf32>, vector<4x256xf32>, vector<4x256xf32> -> vector<4x256xf32>
    %160 = arith.addf %155, %159 : vector<4x256xf32>
    %c0_167 = arith.constant 0 : index
    %c144_168 = arith.constant 144 : index
    %161 = vector.load %arg13[%c0_167, %c144_168] : memref<4x512xf32, #tpu.memory_space<vmem>>, vector<4x256xf32>
    %c7_169 = arith.constant 7 : index
    %c0_170 = arith.constant 0 : index
    %c0_171 = arith.constant 0 : index
    %162 = vector.load %arg7[%c7_169, %c0_170, %c0_171] : memref<9x4x4xf32, #tpu.memory_space<vmem>>, vector<1x4x4xf32>
    %163 = vector.shape_cast %162 : vector<1x4x4xf32> to vector<4x4xf32>
    %cst_172 = arith.constant dense<0.000000e+00> : vector<4x256xf32>
    %164 = tpu.matmul %163, %161, %cst_172 {dimension_numbers = #tpu.dot_dimension_numbers<[1], [0], [0], [1], [0, 0, 1, 1], [], []>} : vector<4x4xf32>, vector<4x256xf32>, vector<4x256xf32> -> vector<4x256xf32>
    %165 = arith.addf %160, %164 : vector<4x256xf32>
    %166 = arith.addf %149, %165 : vector<4x256xf32>
    %cst_173 = arith.constant 0.000000e+00 : f32
    %167 = vector.broadcast %cst_173 : f32 to vector<4x256xf32>
    %c0_174 = arith.constant 0 : index
    %c113_175 = arith.constant 113 : index
    %168 = vector.load %arg13[%c0_174, %c113_175] : memref<4x512xf32, #tpu.memory_space<vmem>>, vector<4x256xf32>
    %c2_176 = arith.constant 2 : index
    %c0_177 = arith.constant 0 : index
    %c0_178 = arith.constant 0 : index
    %169 = vector.load %arg7[%c2_176, %c0_177, %c0_178] : memref<9x4x4xf32, #tpu.memory_space<vmem>>, vector<1x4x4xf32>
    %170 = vector.shape_cast %169 : vector<1x4x4xf32> to vector<4x4xf32>
    %cst_179 = arith.constant dense<0.000000e+00> : vector<4x256xf32>
    %171 = tpu.matmul %170, %168, %cst_179 {dimension_numbers = #tpu.dot_dimension_numbers<[1], [0], [0], [1], [0, 0, 1, 1], [], []>} : vector<4x4xf32>, vector<4x256xf32>, vector<4x256xf32> -> vector<4x256xf32>
    %172 = arith.addf %167, %171 : vector<4x256xf32>
    %c0_180 = arith.constant 0 : index
    %c129_181 = arith.constant 129 : index
    %173 = vector.load %arg13[%c0_180, %c129_181] : memref<4x512xf32, #tpu.memory_space<vmem>>, vector<4x256xf32>
    %c5_182 = arith.constant 5 : index
    %c0_183 = arith.constant 0 : index
    %c0_184 = arith.constant 0 : index
    %174 = vector.load %arg7[%c5_182, %c0_183, %c0_184] : memref<9x4x4xf32, #tpu.memory_space<vmem>>, vector<1x4x4xf32>
    %175 = vector.shape_cast %174 : vector<1x4x4xf32> to vector<4x4xf32>
    %cst_185 = arith.constant dense<0.000000e+00> : vector<4x256xf32>
    %176 = tpu.matmul %175, %173, %cst_185 {dimension_numbers = #tpu.dot_dimension_numbers<[1], [0], [0], [1], [0, 0, 1, 1], [], []>} : vector<4x4xf32>, vector<4x256xf32>, vector<4x256xf32> -> vector<4x256xf32>
    %177 = arith.addf %172, %176 : vector<4x256xf32>
    %c0_186 = arith.constant 0 : index
    %c145_187 = arith.constant 145 : index
    %178 = vector.load %arg13[%c0_186, %c145_187] : memref<4x512xf32, #tpu.memory_space<vmem>>, vector<4x256xf32>
    %c8_188 = arith.constant 8 : index
    %c0_189 = arith.constant 0 : index
    %c0_190 = arith.constant 0 : index
    %179 = vector.load %arg7[%c8_188, %c0_189, %c0_190] : memref<9x4x4xf32, #tpu.memory_space<vmem>>, vector<1x4x4xf32>
    %180 = vector.shape_cast %179 : vector<1x4x4xf32> to vector<4x4xf32>
    %cst_191 = arith.constant dense<0.000000e+00> : vector<4x256xf32>
    %181 = tpu.matmul %180, %178, %cst_191 {dimension_numbers = #tpu.dot_dimension_numbers<[1], [0], [0], [1], [0, 0, 1, 1], [], []>} : vector<4x4xf32>, vector<4x256xf32>, vector<4x256xf32> -> vector<4x256xf32>
    %182 = arith.addf %177, %181 : vector<4x256xf32>
    %183 = vector.broadcast %17 : vector<1x256xf32> to vector<4x256xf32>
    %184 = arith.mulf %182, %183 : vector<4x256xf32>
    %185 = arith.addf %166, %184 : vector<4x256xf32>
    %186 = vector.broadcast %129 : vector<4x1xf32> to vector<4x256xf32>
    %187 = arith.addf %185, %186 : vector<4x256xf32>
    %cst_192 = arith.constant 0.000000e+00 : f32
    %188 = vector.broadcast %cst_192 : f32 to vector<4x256xf32>
    %189 = arith.maximumf %187, %188 : vector<4x256xf32>
    %c0_193 = arith.constant 0 : index
    %c0_194 = arith.constant 0 : index
    %c0_195 = arith.constant 0 : index
    %190 = vector.load %arg10[%c0_193, %c0_194, %c0_195] : memref<1x4x256xf32, #tpu.memory_space<vmem>>, vector<1x4x256xf32>
    %191 = vector.shape_cast %190 : vector<1x4x256xf32> to vector<4x256xf32>
    %192 = vector.shape_cast %189 : vector<4x256xf32> to vector<1x4x256xf32>
    tpu.vector_store %arg10[%c0_193, %c0_194, %c0_195], %192 {strides = array<i32>} : memref<1x4x256xf32, #tpu.memory_space<vmem>>, vector<1x4x256xf32>,
    return
  }
  func.func @transform_0(%arg0: i32) -> (i32, i32, i32) {
    %c0_i32 = arith.constant 0 : i32
    %c0_i32_0 = arith.constant 0 : i32
    %c0_i32_1 = arith.constant 0 : i32
    return %arg0, %c0_i32, %c0_i32_0 : i32, i32, i32
  }
  func.func @transform_1(%arg0: i32) -> (i32, i32, i32) {
    %c0_i32 = arith.constant 0 : i32
    %c0_i32_0 = arith.constant 0 : i32
    %c0_i32_1 = arith.constant 0 : i32
    return %arg0, %c0_i32, %c0_i32_0 : i32, i32, i32
  }
  func.func @transform_2(%arg0: i32) -> (i32, i32) {
    %c0_i32 = arith.constant 0 : i32
    %c0_i32_0 = arith.constant 0 : i32
    %c0_i32_1 = arith.constant 0 : i32
    return %c0_i32, %c0_i32_0 : i32, i32
  }
  func.func @transform_3(%arg0: i32) -> (i32, i32, i32) {
    %c0_i32 = arith.constant 0 : i32
    %c0_i32_0 = arith.constant 0 : i32
    %c0_i32_1 = arith.constant 0 : i32
    %c0_i32_2 = arith.constant 0 : i32
    return %c0_i32, %c0_i32_0, %c0_i32_1 : i32, i32, i32
  }
  func.func @transform_4(%arg0: i32) -> (i32, i32, i32) {
    %c0_i32 = arith.constant 0 : i32
    %c0_i32_0 = arith.constant 0 : i32
    %c0_i32_1 = arith.constant 0 : i32
    %c0_i32_2 = arith.constant 0 : i32
    return %c0_i32, %c0_i32_0, %c0_i32_1 : i32, i32, i32
  }
  func.func @transform_5(%arg0: i32) -> (i32, i32) {
    %c0_i32 = arith.constant 0 : i32
    %c0_i32_0 = arith.constant 0 : i32
    %c0_i32_1 = arith.constant 0 : i32
    return %c0_i32, %c0_i32_0 : i32, i32
  }
  func.func @transform_6(%arg0: i32) -> (i32, i32, i32) {
    %c0_i32 = arith.constant 0 : i32
    %c0_i32_0 = arith.constant 0 : i32
    %c0_i32_1 = arith.constant 0 : i32
    %c0_i32_2 = arith.constant 0 : i32
    return %c0_i32, %c0_i32_0, %c0_i32_1 : i32, i32, i32
  }
  func.func @transform_7(%arg0: i32) -> (i32, i32) {
    %c0_i32 = arith.constant 0 : i32
    %c0_i32_0 = arith.constant 0 : i32
    %c0_i32_1 = arith.constant 0 : i32
    return %c0_i32, %c0_i32_0 : i32, i32
  }
  func.func @transform_8(%arg0: i32) -> (i32, i32) {
    %c0_i32 = arith.constant 0 : i32
    %c0_i32_0 = arith.constant 0 : i32
    %c0_i32_1 = arith.constant 0 : i32
    return %c0_i32, %c0_i32_0 : i32, i32
  }
  func.func @transform_9(%arg0: i32) -> (i32, i32, i32) {
    %c0_i32 = arith.constant 0 : i32
    %c0_i32_0 = arith.constant 0 : i32
    %c0_i32_1 = arith.constant 0 : i32
    return %arg0, %c0_i32, %c0_i32_0 : i32, i32, i32
  }
}

</mosaic_0001>

<llo_original>
// kernel: up_forward.1
$region0: #{up_forward.1}
  #allocation0 [shape = 'u32[]', space=smem, size = 0x4, offset = 0x4, fixed_abs, tag = 'smem constant byte address 0x4 - core index']
  #allocation1 [shape = 'u32[144,128]{1,0:T(1,128)}', space=vmem, size = 0x12000, scoped, tag = 'internal scratch']
  #allocation2 [shape = 'f32[4,512]{1,0:T(4,128)}', space=vmem, size = 0x2000, scoped, tag = 'scratch operand']
  #allocation3 [shape = 'f32[4,512]{1,0:T(4,128)}', space=vmem, size = 0x2000, scoped, tag = 'scratch operand']
  #allocation4 [shape = 'f32[4,512]{1,0:T(4,128)}', space=vmem, size = 0x2000, scoped, tag = 'scratch operand']
  %s0 = inlined_call_operand.vmem [shape: f32[2,4,256], index: 0, kind: input, shape index: {}]
  %s1 = inlined_call_operand.vmem [shape: f32[2,4,64], index: 1, kind: input, shape index: {}]
  %s2 = inlined_call_operand.vmem [shape: f32[64,256], index: 2, kind: input, shape index: {}]
  %s3 = inlined_call_operand.vmem [shape: f32[9,4,4], index: 3, kind: input, shape index: {}]
  %s4 = inlined_call_operand.vmem [shape: f32[9,4,4], index: 4, kind: input, shape index: {}]
  %s5 = inlined_call_operand.vmem [shape: f32[4,1], index: 5, kind: input, shape index: {}]
  %s6 = inlined_call_operand.vmem [shape: f32[9,4,4], index: 6, kind: input, shape index: {}]
  %s7 = inlined_call_operand.vmem [shape: f32[4,1], index: 7, kind: input, shape index: {}]
  %s8 = inlined_call_operand.vmem [shape: f32[2,256], index: 8, kind: input, shape index: {}]
  %s9 = inlined_call_operand.vmem [shape: f32[2,4,256], index: 9, kind: output, shape index: {}]
  %s10 = sld [smem:[#allocation0]]
  $region69: #{up_forward.1} parent=0
    _
  %s12 = ssub.s32 1, %s10
  %s13 = scalar_select 0, %s12, %s10
  loop: start=0, step=1, limit=4
  $region2: #{up_forward.1} parent=0 // loop_pre_header
    _
  $region3: #{up_forward.1} parent=0 // loop_header
    %s15 = sphi 0, %s19
    %p16 = scmp.ge.s32.totalorder %s15, 4
    %s25 = sphi 0, %s27
    %s28 = sphi 0, %s25
    %s29 = sphi 0, %s28
    %s45 = sphi 0, %s29
    %s51 = sphi 0, %s53
    %s54 = sphi 0, %s51
    %s55 = sphi 0, %s54
    %s71 = sphi 0, %s55
    %s75 = sphi 0, %s75
    %s77 = sphi 0, %s75
    %s78 = sphi 0, %s77
    %s92 = sphi 0, %s78
    %s96 = sphi 0, %s96
    %s98 = sphi 0, %s96
    %s99 = sphi 0, %s98
    %s113 = sphi 0, %s99
    %s117 = sphi 0, %s117
    %s119 = sphi 0, %s117
    %s120 = sphi 0, %s119
    %s134 = sphi 0, %s120
    %s138 = sphi 0, %s138
    %s140 = sphi 0, %s138
    %s141 = sphi 0, %s140
    %s155 = sphi 0, %s141
    %s159 = sphi 0, %s159
    %s161 = sphi 0, %s159
    %s162 = sphi 0, %s161
    %s176 = sphi 0, %s162
    %s180 = sphi 0, %s180
    %s182 = sphi 0, %s180
    %s183 = sphi 0, %s182
    %s197 = sphi 0, %s183
    %s201 = sphi 0, %s201
    %s203 = sphi 0, %s201
    %s204 = sphi 0, %s203
    %s218 = sphi 0, %s204
    %s224 = sphi 0, %s226
    %s227 = sphi 0, %s224
    %s228 = sphi 0, %s227
    %s244 = sphi 0, %s228
  $region4: #{up_forward.1} parent=0 // loop_header_branch
    %18 = sbr.rel (%p16) target = $region8
  $region5: #{up_forward.1} parent=0 // loop_body
    %s20 = ssub.s32 %s15, 1
    %s21 = ssub.s32 %s15, 2
    %s22 = sadd.s32 %s15, 1
    %s23 = ssub.s32 %s15, %s22
    %p24 = scmp.eq.s32.totalorder %s23, 0
    %s26 = sadd.s32 %s25, 1
    %s27 = scalar_select %p24, %s25, %s26
    %p30 = pneg %p24
    %p31 = scmp.eq.s32.totalorder %s15, 1
    %p32 = por %p30, %p31
    %p33 = scmp.ne.s32.totalorder %s25, %s28
    %p34 = scmp.eq.s32.totalorder %s15, 0
    %p35 = por %p33, %p34
    %p36 = scmp.ne.s32.totalorder %s25, %s28
    %p37 = scmp.eq.s32.totalorder %s20, 1
    %p38 = por %p36, %p37
    %p39 = scmp.ne.s32.totalorder %s28, %s29
    %p40 = scmp.eq.s32.totalorder %s20, 0
    %p41 = por %p39, %p40
    %p42 = scmp.ne.s32.totalorder %s28, %s29
    %p43 = scmp.eq.s32.totalorder %s21, 1
    %p44 = por %p42, %p43
    %p46 = scmp.ne.s32.totalorder %s29, %s45
    %p47 = scmp.eq.s32.totalorder %s21, 0
    %p48 = por %p46, %p47
    %s49 = ssub.s32 %s15, %s22
    %p50 = scmp.eq.s32.totalorder %s49, 0
    %s52 = sadd.s32 %s51, 1
    %s53 = scalar_select %p50, %s51, %s52
    %p56 = pneg %p50
    %p57 = scmp.eq.s32.totalorder %s15, 1
    %p58 = por %p56, %p57
    %p59 = scmp.ne.s32.totalorder %s51, %s54
    %p60 = scmp.eq.s32.totalorder %s15, 0
    %p61 = por %p59, %p60
    %p62 = scmp.ne.s32.totalorder %s51, %s54
    %p63 = scmp.eq.s32.totalorder %s20, 1
    %p64 = por %p62, %p63
    %p65 = scmp.ne.s32.totalorder %s54, %s55
    %p66 = scmp.eq.s32.totalorder %s20, 0
    %p67 = por %p65, %p66
    %p68 = scmp.ne.s32.totalorder %s54, %s55
    %p69 = scmp.eq.s32.totalorder %s21, 1
    %p70 = por %p68, %p69
    %p72 = scmp.ne.s32.totalorder %s55, %s71
    %p73 = scmp.eq.s32.totalorder %s21, 0
    %p74 = por %p72, %p73
    %s76 = sadd.s32 %s75, 1
    %p79 = scmp.eq.s32.totalorder %s15, 1
    %p80 = scmp.ne.s32.totalorder %s75, %s77
    %p81 = scmp.eq.s32.totalorder %s15, 0
    %p82 = por %p80, %p81
    %p83 = scmp.ne.s32.totalorder %s75, %s77
    %p84 = scmp.eq.s32.totalorder %s20, 1
    %p85 = por %p83, %p84
    %p86 = scmp.ne.s32.totalorder %s77, %s78
    %p87 = scmp.eq.s32.totalorder %s20, 0
    %p88 = por %p86, %p87
    %p89 = scmp.ne.s32.totalorder %s77, %s78
    %p90 = scmp.eq.s32.totalorder %s21, 1
    %p91 = por %p89, %p90
    %p93 = scmp.ne.s32.totalorder %s78, %s92
    %p94 = scmp.eq.s32.totalorder %s21, 0
    %p95 = por %p93, %p94
    %s97 = sadd.s32 %s96, 1
    %p100 = scmp.eq.s32.totalorder %s15, 1
    %p101 = scmp.ne.s32.totalorder %s96, %s98
    %p102 = scmp.eq.s32.totalorder %s15, 0
    %p103 = por %p101, %p102
    %p104 = scmp.ne.s32.totalorder %s96, %s98
    %p105 = scmp.eq.s32.totalorder %s20, 1
    %p106 = por %p104, %p105
    %p107 = scmp.ne.s32.totalorder %s98, %s99
    %p108 = scmp.eq.s32.totalorder %s20, 0
    %p109 = por %p107, %p108
    %p110 = scmp.ne.s32.totalorder %s98, %s99
    %p111 = scmp.eq.s32.totalorder %s21, 1
    %p112 = por %p110, %p111
    %p114 = scmp.ne.s32.totalorder %s99, %s113
    %p115 = scmp.eq.s32.totalorder %s21, 0
    %p116 = por %p114, %p115
    %s118 = sadd.s32 %s117, 1
    %p121 = scmp.eq.s32.totalorder %s15, 1
    %p122 = scmp.ne.s32.totalorder %s117, %s119
    %p123 = scmp.eq.s32.totalorder %s15, 0
    %p124 = por %p122, %p123
    %p125 = scmp.ne.s32.totalorder %s117, %s119
    %p126 = scmp.eq.s32.totalorder %s20, 1
    %p127 = por %p125, %p126
    %p128 = scmp.ne.s32.totalorder %s119, %s120
    %p129 = scmp.eq.s32.totalorder %s20, 0
    %p130 = por %p128, %p129
    %p131 = scmp.ne.s32.totalorder %s119, %s120
    %p132 = scmp.eq.s32.totalorder %s21, 1
    %p133 = por %p131, %p132
    %p135 = scmp.ne.s32.totalorder %s120, %s134
    %p136 = scmp.eq.s32.totalorder %s21, 0
    %p137 = por %p135, %p136
    %s139 = sadd.s32 %s138, 1
    %p142 = scmp.eq.s32.totalorder %s15, 1
    %p143 = scmp.ne.s32.totalorder %s138, %s140
    %p144 = scmp.eq.s32.totalorder %s15, 0
    %p145 = por %p143, %p144
    %p146 = scmp.ne.s32.totalorder %s138, %s140
    %p147 = scmp.eq.s32.totalorder %s20, 1
    %p148 = por %p146, %p147
    %p149 = scmp.ne.s32.totalorder %s140, %s141
    %p150 = scmp.eq.s32.totalorder %s20, 0
    %p151 = por %p149, %p150
    %p152 = scmp.ne.s32.totalorder %s140, %s141
    %p153 = scmp.eq.s32.totalorder %s21, 1
    %p154 = por %p152, %p153
    %p156 = scmp.ne.s32.totalorder %s141, %s155
    %p157 = scmp.eq.s32.totalorder %s21, 0
    %p158 = por %p156, %p157
    %s160 = sadd.s32 %s159, 1
    %p163 = scmp.eq.s32.totalorder %s15, 1
    %p164 = scmp.ne.s32.totalorder %s159, %s161
    %p165 = scmp.eq.s32.totalorder %s15, 0
    %p166 = por %p164, %p165
    %p167 = scmp.ne.s32.totalorder %s159, %s161
    %p168 = scmp.eq.s32.totalorder %s20, 1
    %p169 = por %p167, %p168
    %p170 = scmp.ne.s32.totalorder %s161, %s162
    %p171 = scmp.eq.s32.totalorder %s20, 0
    %p172 = por %p170, %p171
    %p173 = scmp.ne.s32.totalorder %s161, %s162
    %p174 = scmp.eq.s32.totalorder %s21, 1
    %p175 = por %p173, %p174
    %p177 = scmp.ne.s32.totalorder %s162, %s176
    %p178 = scmp.eq.s32.totalorder %s21, 0
    %p179 = por %p177, %p178
    %s181 = sadd.s32 %s180, 1
    %p184 = scmp.eq.s32.totalorder %s15, 1
    %p185 = scmp.ne.s32.totalorder %s180, %s182
    %p186 = scmp.eq.s32.totalorder %s15, 0
    %p187 = por %p185, %p186
    %p188 = scmp.ne.s32.totalorder %s180, %s182
    %p189 = scmp.eq.s32.totalorder %s20, 1
    %p190 = por %p188, %p189
    %p191 = scmp.ne.s32.totalorder %s182, %s183
    %p192 = scmp.eq.s32.totalorder %s20, 0
    %p193 = por %p191, %p192
    %p194 = scmp.ne.s32.totalorder %s182, %s183
    %p195 = scmp.eq.s32.totalorder %s21, 1
    %p196 = por %p194, %p195
    %p198 = scmp.ne.s32.totalorder %s183, %s197
    %p199 = scmp.eq.s32.totalorder %s21, 0
    %p200 = por %p198, %p199
    %s202 = sadd.s32 %s201, 1
    %p205 = scmp.eq.s32.totalorder %s15, 1
    %p206 = scmp.ne.s32.totalorder %s201, %s203
    %p207 = scmp.eq.s32.totalorder %s15, 0
    %p208 = por %p206, %p207
    %p209 = scmp.ne.s32.totalorder %s201, %s203
    %p210 = scmp.eq.s32.totalorder %s20, 1
    %p211 = por %p209, %p210
    %p212 = scmp.ne.s32.totalorder %s203, %s204
    %p213 = scmp.eq.s32.totalorder %s20, 0
    %p214 = por %p212, %p213
    %p215 = scmp.ne.s32.totalorder %s203, %s204
    %p216 = scmp.eq.s32.totalorder %s21, 1
    %p217 = por %p215, %p216
    %p219 = scmp.ne.s32.totalorder %s204, %s218
    %p220 = scmp.eq.s32.totalorder %s21, 0
    %p221 = por %p219, %p220
    %s222 = ssub.s32 %s15, %s22
    %p223 = scmp.eq.s32.totalorder %s222, 0
    %s225 = sadd.s32 %s224, 1
    %s226 = scalar_select %p223, %s224, %s225
    %p229 = pneg %p223
    %p230 = scmp.eq.s32.totalorder %s15, 1
    %p231 = por %p229, %p230
    %p232 = scmp.ne.s32.totalorder %s224, %s227
    %p233 = scmp.eq.s32.totalorder %s15, 0
    %p234 = por %p232, %p233
    %p235 = scmp.ne.s32.totalorder %s224, %s227
    %p236 = scmp.eq.s32.totalorder %s20, 1
    %p237 = por %p235, %p236
    %p238 = scmp.ne.s32.totalorder %s227, %s228
    %p239 = scmp.eq.s32.totalorder %s20, 0
    %p240 = por %p238, %p239
    %p241 = scmp.ne.s32.totalorder %s227, %s228
    %p242 = scmp.eq.s32.totalorder %s21, 1
    %p243 = por %p241, %p242
    %p245 = scmp.ne.s32.totalorder %s228, %s244
    %p246 = scmp.eq.s32.totalorder %s21, 0
    %p247 = por %p245, %p246
    %p248 = scmp.le.s32.totalorder 1, %s15
    %p249 = scmp.lt.s32.totalorder %s15, 3
    %p250 = pnand %p248, %p249
    %p251 = pneg %p250
    // Predicated region
    $region9: #{up_forward.1} parent=5 // pred_check
      _
    $region10: #{up_forward.1} parent=5 // pred_check_branch
      %253 = sbr.rel (%p250) target = $region12
    $region11: #{up_forward.1} parent=5 // pred_region
      %s254 = ssub.s32 %s15, 1
      // Predicated region
      $region13: #{up_forward.1} parent=11 // pred_check
        %p255 = pneg %p88
      $region14: #{up_forward.1} parent=11 // pred_check_branch
        %257 = sbr.rel (%p255) target = $region16
      $region15: #{up_forward.1} parent=11 // pred_region
        _
      $region16: #{up_forward.1} parent=11 // pred_fallthru
        _
      // Predicated region
      $region17: #{up_forward.1} parent=11 // pred_check
        %p258 = pneg %p109
      $region18: #{up_forward.1} parent=11 // pred_check_branch
        %260 = sbr.rel (%p258) target = $region20
      $region19: #{up_forward.1} parent=11 // pred_region
        _
      $region20: #{up_forward.1} parent=11 // pred_fallthru
        _
      // Predicated region
      $region21: #{up_forward.1} parent=11 // pred_check
        %p261 = pneg %p130
      $region22: #{up_forward.1} parent=11 // pred_check_branch
        %263 = sbr.rel (%p261) target = $region24
      $region23: #{up_forward.1} parent=11 // pred_region
        _
      $region24: #{up_forward.1} parent=11 // pred_fallthru
        _
      // Predicated region
      $region25: #{up_forward.1} parent=11 // pred_check
        %p264 = pneg %p151
      $region26: #{up_forward.1} parent=11 // pred_check_branch
        %266 = sbr.rel (%p264) target = $region28
      $region27: #{up_forward.1} parent=11 // pred_region
        _
      $region28: #{up_forward.1} parent=11 // pred_fallthru
        _
      // Predicated region
      $region29: #{up_forward.1} parent=11 // pred_check
        %p267 = pneg %p172
      $region30: #{up_forward.1} parent=11 // pred_check_branch
        %269 = sbr.rel (%p267) target = $region32
      $region31: #{up_forward.1} parent=11 // pred_region
        _
      $region32: #{up_forward.1} parent=11 // pred_fallthru
        _
      // Predicated region
      $region33: #{up_forward.1} parent=11 // pred_check
        %p270 = pneg %p193
      $region34: #{up_forward.1} parent=11 // pred_check_branch
        %272 = sbr.rel (%p270) target = $region36
      $region35: #{up_forward.1} parent=11 // pred_region
        _
      $region36: #{up_forward.1} parent=11 // pred_fallthru
        _
      // Predicated region
      $region37: #{up_forward.1} parent=11 // pred_check
        %p273 = pneg %p214
      $region38: #{up_forward.1} parent=11 // pred_check_branch
        %275 = sbr.rel (%p273) target = $region40
      $region39: #{up_forward.1} parent=11 // pred_region
        _
      $region40: #{up_forward.1} parent=11 // pred_fallthru
        _
    $region12: #{up_forward.1} parent=5 // pred_fallthru
      _
    %p276 = scmp.lt.s32.totalorder %s15, 2
    // Predicated region
    $region41: #{up_forward.1} parent=5 // pred_check
      %p277 = pneg %p276
    $region42: #{up_forward.1} parent=5 // pred_check_branch
      %279 = sbr.rel (%p277) target = $region44
    $region43: #{up_forward.1} parent=5 // pred_region
      // Predicated region
      $region45: #{up_forward.1} parent=43 // pred_check
        %p280 = pneg %p35
      $region46: #{up_forward.1} parent=43 // pred_check_branch
        %282 = sbr.rel (%p280) target = $region48
      $region47: #{up_forward.1} parent=43 // pred_region
        %p283 = scmp.lt.s32.totalorder %s15, 1
        %s284 = scalar_select %p283, %s15, 1
        %s285 = smul.addr %s284, 2
        %s286 = smul.addr %s285, 4
        %s287 = scalar_lea.vmem %s0, %s286
      $region48: #{up_forward.1} parent=43 // pred_fallthru
        _
      // Predicated region
      $region49: #{up_forward.1} parent=43 // pred_check
        %p288 = pneg %p61
      $region50: #{up_forward.1} parent=43 // pred_check_branch
        %290 = sbr.rel (%p288) target = $region52
      $region51: #{up_forward.1} parent=43 // pred_region
        %p291 = scmp.lt.s32.totalorder %s15, 1
        %s292 = scalar_select %p291, %s15, 1
        %s293 = smul.addr %s292, 4
        %s294 = scalar_lea.vmem %s1, %s293
      $region52: #{up_forward.1} parent=43 // pred_fallthru
        _
    $region44: #{up_forward.1} parent=5 // pred_fallthru
      _
    %p295 = scmp.le.s32.totalorder 1, %s15
    %p296 = scmp.lt.s32.totalorder %s15, 3
    %p297 = pnand %p295, %p296
    %p298 = pneg %p297
    // Predicated region
    $region53: #{up_forward.1} parent=5 // pred_check
      _
    $region54: #{up_forward.1} parent=5 // pred_check_branch
      %300 = sbr.rel (%p297) target = $region56
    $region55: #{up_forward.1} parent=5 // pred_region
      %s301 = ssub.s32 %s15, 1
      %p302 = scmp.lt.s32.totalorder %s20, 1
      %s303 = scalar_select %p302, %s20, 1
      %s304 = smul.addr %s303, 2
      %s305 = smul.addr %s304, 4
      %s306 = scalar_lea.vmem %s0, %s305
      %p307 = pneg %p41
      %p308 = pneg %p38
      %p309 = scmp.lt.s32.totalorder %s20, 1
      %s310 = scalar_select %p309, %s20, 1
      %s311 = smul.addr %s310, 4
      %s312 = scalar_lea.vmem %s1, %s311
      %p313 = pneg %p67
      %p314 = pneg %p64
      %p315 = pneg %p88
      %p316 = pneg %p85
      %p317 = pneg %p109
      %p318 = pneg %p106
      %p319 = pneg %p130
      %p320 = pneg %p127
      %p321 = pneg %p151
      %p322 = pneg %p148
      %p323 = pneg %p172
      %p324 = pneg %p169
      %p325 = pneg %p193
      %p326 = pneg %p190
      %p327 = pneg %p214
      %p328 = pneg %p211
      %p329 = pneg %p240
      %p330 = pneg %p237
      %p331 = scmp.lt.s32.totalorder %s20, 1
      %s332 = scalar_select %p331, %s20, 1
      %s333 = smul.addr %s332, 2
      %s334 = smul.addr %s333, 4
      %s335 = scalar_lea.vmem %s9, %s334
      %p336 = scmp.lt.s32.totalorder %s20, 1
      %s337 = scalar_select %p336, %s20, 1
      %s338 = smul.addr %s337, 2
      %s339 = smul.addr %s338, 4
      %s340 = scalar_lea.vmem %s0, %s339
      %p341 = scmp.lt.s32.totalorder %s20, 1
      %s342 = scalar_select %p341, %s20, 1
      %s343 = smul.addr %s342, 4
      %s344 = scalar_lea.vmem %s1, %s343
      %p345 = scmp.lt.s32.totalorder %s20, 1
      %s346 = scalar_select %p345, %s20, 1
      %s347 = smul.addr %s346, 2
      %s348 = smul.addr %s347, 4
      %s349 = scalar_lea.vmem %s9, %s348
      %v350 = vld [vmem:[%s340] sm:$0xff]
      %351 = vst [vmem:[#allocation2] sm:$0xf] 0.0
      %352 = vst [vmem:[#allocation2 + $0xc] sm:$0xf] 0.0
      %353 = vst [vmem:[#allocation2 + $0x4] sm:$0xff] %v350
      %v354 = vld [vmem:[%s344] sm:$0xf]
      %v355 = vld [vmem:[%s2] sm:$0xff]
      %v356 = vld [vmem:[%s2 + $0x8] sm:$0xff]
      %v357 = vld [vmem:[%s2 + $0x10] sm:$0xff]
      %v358 = vld [vmem:[%s2 + $0x18] sm:$0xff]
      %v359 = vld [vmem:[%s2 + $0x20] sm:$0xff]
      %v360 = vld [vmem:[%s2 + $0x28] sm:$0xff]
      %v361 = vld [vmem:[%s2 + $0x30] sm:$0xff]
      %v362 = vld [vmem:[%s2 + $0x38] sm:$0xff]
      %v363 = vld [vmem:[%s2 + $0x40] sm:$0xff]
      %v364 = vld [vmem:[%s2 + $0x48] sm:$0xff]
      %v365 = vld [vmem:[%s2 + $0x50] sm:$0xff]
      %v366 = vld [vmem:[%s2 + $0x58] sm:$0xff]
      %v367 = vld [vmem:[%s2 + $0x60] sm:$0xff]
      %v368 = vld [vmem:[%s2 + $0x68] sm:$0xff]
      %v369 = vld [vmem:[%s2 + $0x70] sm:$0xff]
      %v370 = vld [vmem:[%s2 + $0x78] sm:$0xff]
      %vm371 = vcmask 523264
      %v373 = vsel %vm371, %v354, 0
      %375 = vmatprep.subr.mxu0 %v356
      %376 = vmatpush1.msra.mxu0 %v355
      %377 = vmatprep.subr.mxu0 %v358
      %378 = vmatpush1.msra.mxu0 %v357
      %379 = vmatprep.subr.mxu0 %v360
      %380 = vmatpush1.msra.mxu0 %v359
      %381 = vmatprep.subr.mxu0 %v362
      %382 = vmatpush1.msra.mxu0 %v361
      %383 = vmatprep.subr.mxu0 %v364
      %384 = vmatpush1.msra.mxu0 %v363
      %385 = vmatprep.subr.mxu0 %v366
      %386 = vmatpush1.msra.mxu0 %v365
      %387 = vmatprep.subr.mxu0 %v368
      %388 = vmatpush1.msra.mxu0 %v367
      %389 = vmatprep.subr.mxu0 %v370
      %390 = vmatpush1.msra.mxu0 %v369
      %391 = vmatprep.subr.mxu0 0.0
      %392 = vmatpush1.msra.mxu0 0.0
      %393 = vmatprep.subr.mxu0 0.0
      %394 = vmatpush1.msra.mxu0 0.0
      %395 = vmatprep.subr.mxu0 0.0
      %396 = vmatpush1.msra.mxu0 0.0
      %397 = vmatprep.subr.mxu0 0.0
      %398 = vmatpush1.msra.mxu0 0.0
      %399 = vmatprep.subr.mxu0 0.0
      %400 = vmatpush1.msra.mxu0 0.0
      %401 = vmatprep.subr.mxu0 0.0
      %402 = vmatpush1.msra.mxu0 0.0
      %403 = vmatprep.subr.mxu0 0.0
      %404 = vmatpush1.msra.mxu0 0.0
      %405 = vmatprep.subr.mxu0 0.0
      %406 = vmatpush1.msra.mxu0 0.0
      %407 = vmatprep.subr.mxu0 0.0
      %408 = vmatpush1.msra.mxu0 0.0
      %409 = vmatprep.subr.mxu0 0.0
      %410 = vmatpush1.msra.mxu0 0.0
      %411 = vmatprep.subr.mxu0 0.0
      %412 = vmatpush1.msra.mxu0 0.0
      %413 = vmatprep.subr.mxu0 0.0
      %414 = vmatpush1.msra.mxu0 0.0
      %415 = vmatprep.subr.mxu0 0.0
      %416 = vmatpush1.msra.mxu0 0.0
      %417 = vmatprep.subr.mxu0 0.0
      %418 = vmatpush1.msra.mxu0 0.0
      %419 = vmatprep.subr.mxu0 0.0
      %420 = vmatpush1.msra.mxu0 0.0
      %421 = vmatprep.subr.mxu0 0.0
      %422 = vmatpush1.msra.mxu0 0.0
      %423 = vmatprep.subr.mxu0 0.0
      %424 = vmatpush1.msra.mxu0 0.0
      %425 = vmatprep.subr.mxu0 0.0
      %426 = vmatpush1.msra.mxu0 0.0
      %427 = vmatprep.subr.mxu0 0.0
      %428 = vmatpush1.msra.mxu0 0.0
      %429 = vmatprep.subr.mxu0 0.0
      %430 = vmatpush1.msra.mxu0 0.0
      %431 = vmatprep.subr.mxu0 0.0
      %432 = vmatpush1.msra.mxu0 0.0
      %433 = vmatprep.subr.mxu0 0.0
      %434 = vmatpush1.msra.mxu0 0.0
      %435 = vmatprep.subr.mxu0 0.0
      %436 = vmatpush1.msra.mxu0 0.0
      %437 = vmatprep.subr.mxu0 0.0
      %438 = vmatpush1.msra.mxu0 0.0
      %439 = vmatprep.mubr.f32.mxu0 0.0
      %440 = vmatmul.mubr.f32.gmra.mrb[0].mxu0 %v373
      %v441 = vpop.f32.mrb[0].mxu0
      %v442 = vadd.f32 0.0, %v441
      %v443 = vpop.f32.mrb[0].mxu0
      %v444 = vadd.f32 0.0, %v443
      %445 = vdwg.mxu0
      %446 = vst [vmem:[#allocation3] sm:$0xf] 0.0
      %447 = vst [vmem:[#allocation3 + $0xc] sm:$0xf] 0.0
      %v450 = vcombine.low %v442, %v444
      %452 = vst [vmem:[#allocation3 + $0x4] sm:$0xff] %v450
      %v453 = vld [vmem:[%s8] ss:$2 sm:$0x3]
      %s454 = scalar_lea.vmem %s8, 1
      %v455 = vld [vmem:[%s454] ss:$2 sm:$0x3]
      %v456 = vld [vmem:[%s5] sm:$0xf]
      %v457 = vld [vmem:[#allocation2] sm:$0xff]
      %v458 = vld [vmem:[#allocation2 + $0x8] sm:$0xf]
      %v459 = vld [vmem:[%s3] sm:$0xf]
      %v460 = vld [vmem:[#allocation3] sm:$0xff]
      %v461 = vld [vmem:[#allocation3 + $0x8] sm:$0xf]
      %v462 = vld [vmem:[%s4] sm:$0xf]
      %v465 = vcombine.high %v460, %v460
      %466 = vrot.lane.b32.xlu0 %v460, 17
      %v467 = vpop.permute.xlu0 %466
      %468 = vrot.lane.b32.xlu0 %v465, 17
      %v469 = vpop.permute.xlu0 %468
      %470 = vrot.lane.b32.xlu0 %v461, 17
      %v471 = vpop.permute.xlu0 %470
      %vm472 = vcmask 138240
      %v473 = vsel %vm472, %v467, %v469
      %v474 = vsel %vm472, %v469, %v471
      %vm475 = vcmask 31744
      %v477 = vsel %vm475, %v462, 0
      %vm479 = vcmask 1043456
      %v480 = vsel %vm479, %v473, 0
      %v482 = vsel %vm479, %v474, 0
      %484 = vmatprep.subr.mxu0 %v482
      %485 = vmatpush1.msra.mxu0 %v480
      %486 = vmatprep.subr.mxu0 0.0
      %487 = vmatpush1.msra.mxu0 0.0
      %488 = vmatprep.subr.mxu0 0.0
      %489 = vmatpush1.msra.mxu0 0.0
      %490 = vmatprep.subr.mxu0 0.0
      %491 = vmatpush1.msra.mxu0 0.0
      %492 = vmatprep.subr.mxu0 0.0
      %493 = vmatpush1.msra.mxu0 0.0
      %494 = vmatprep.subr.mxu0 0.0
      %495 = vmatpush1.msra.mxu0 0.0
      %496 = vmatprep.subr.mxu0 0.0
      %497 = vmatpush1.msra.mxu0 0.0
      %498 = vmatprep.subr.mxu0 0.0
      %499 = vmatpush1.msra.mxu0 0.0
      %500 = vmatprep.subr.mxu0 0.0
      %501 = vmatpush1.msra.mxu0 0.0
      %502 = vmatprep.subr.mxu0 0.0
      %503 = vmatpush1.msra.mxu0 0.0
      %504 = vmatprep.subr.mxu0 0.0
      %505 = vmatpush1.msra.mxu0 0.0
      %506 = vmatprep.subr.mxu0 0.0
      %507 = vmatpush1.msra.mxu0 0.0
      %508 = vmatprep.subr.mxu0 0.0
      %509 = vmatpush1.msra.mxu0 0.0
      %510 = vmatprep.subr.mxu0 0.0
      %511 = vmatpush1.msra.mxu0 0.0
      %512 = vmatprep.subr.mxu0 0.0
      %513 = vmatpush1.msra.mxu0 0.0
      %514 = vmatprep.subr.mxu0 0.0
      %515 = vmatpush1.msra.mxu0 0.0
      %516 = vmatprep.subr.mxu0 0.0
      %517 = vmatpush1.msra.mxu0 0.0
      %518 = vmatprep.subr.mxu0 0.0
      %519 = vmatpush1.msra.mxu0 0.0
      %520 = vmatprep.subr.mxu0 0.0
      %521 = vmatpush1.msra.mxu0 0.0
      %522 = vmatprep.subr.mxu0 0.0
      %523 = vmatpush1.msra.mxu0 0.0
      %524 = vmatprep.subr.mxu0 0.0
      %525 = vmatpush1.msra.mxu0 0.0
      %526 = vmatprep.subr.mxu0 0.0
      %527 = vmatpush1.msra.mxu0 0.0
      %528 = vmatprep.subr.mxu0 0.0
      %529 = vmatpush1.msra.mxu0 0.0
      %530 = vmatprep.subr.mxu0 0.0
      %531 = vmatpush1.msra.mxu0 0.0
      %532 = vmatprep.subr.mxu0 0.0
      %533 = vmatpush1.msra.mxu0 0.0
      %534 = vmatprep.subr.mxu0 0.0
      %535 = vmatpush1.msra.mxu0 0.0
      %536 = vmatprep.subr.mxu0 0.0
      %537 = vmatpush1.msra.mxu0 0.0
      %538 = vmatprep.subr.mxu0 0.0
      %539 = vmatpush1.msra.mxu0 0.0
      %540 = vmatprep.subr.mxu0 0.0
      %541 = vmatpush1.msra.mxu0 0.0
      %542 = vmatprep.subr.mxu0 0.0
      %543 = vmatpush1.msra.mxu0 0.0
      %544 = vmatprep.subr.mxu0 0.0
      %545 = vmatpush1.msra.mxu0 0.0
      %546 = vmatprep.subr.mxu0 0.0
      %547 = vmatpush1.msra.mxu0 0.0
      %548 = vmatprep.mubr.f32.mxu0 0.0
      %549 = vmatmul.mubr.f32.gmra.mrb[0].mxu0 %v477
      %v550 = vpop.f32.mrb[0].mxu0
      %v551 = vadd.f32 0.0, %v550
      %v552 = vpop.f32.mrb[0].mxu0
      %v553 = vadd.f32 0.0, %v552
      %554 = vdwg.mxu0
      %v557 = vcombine.high %v457, %v457
      %558 = vrot.lane.b32.xlu0 %v457, 17
      %v559 = vpop.permute.xlu0 %558
      %560 = vrot.lane.b32.xlu0 %v557, 17
      %v561 = vpop.permute.xlu0 %560
      %562 = vrot.lane.b32.xlu0 %v458, 17
      %v563 = vpop.permute.xlu0 %562
      %v564 = vsel %vm472, %v559, %v561
      %v565 = vsel %vm472, %v561, %v563
      %v567 = vsel %vm475, %v459, 0
      %v569 = vsel %vm479, %v564, 0
      %v571 = vsel %vm479, %v565, 0
      %573 = vmatprep.subr.mxu0 %v571
      %574 = vmatpush1.msra.mxu0 %v569
      %575 = vmatprep.subr.mxu0 0.0
      %576 = vmatpush1.msra.mxu0 0.0
      %577 = vmatprep.subr.mxu0 0.0
      %578 = vmatpush1.msra.mxu0 0.0
      %579 = vmatprep.subr.mxu0 0.0
      %580 = vmatpush1.msra.mxu0 0.0
      %581 = vmatprep.subr.mxu0 0.0
      %582 = vmatpush1.msra.mxu0 0.0
      %583 = vmatprep.subr.mxu0 0.0
      %584 = vmatpush1.msra.mxu0 0.0
      %585 = vmatprep.subr.mxu0 0.0
      %586 = vmatpush1.msra.mxu0 0.0
      %587 = vmatprep.subr.mxu0 0.0
      %588 = vmatpush1.msra.mxu0 0.0
      %589 = vmatprep.subr.mxu0 0.0
      %590 = vmatpush1.msra.mxu0 0.0
      %591 = vmatprep.subr.mxu0 0.0
      %592 = vmatpush1.msra.mxu0 0.0
      %593 = vmatprep.subr.mxu0 0.0
      %594 = vmatpush1.msra.mxu0 0.0
      %595 = vmatprep.subr.mxu0 0.0
      %596 = vmatpush1.msra.mxu0 0.0
      %597 = vmatprep.subr.mxu0 0.0
      %598 = vmatpush1.msra.mxu0 0.0
      %599 = vmatprep.subr.mxu0 0.0
      %600 = vmatpush1.msra.mxu0 0.0
      %601 = vmatprep.subr.mxu0 0.0
      %602 = vmatpush1.msra.mxu0 0.0
      %603 = vmatprep.subr.mxu0 0.0
      %604 = vmatpush1.msra.mxu0 0.0
      %605 = vmatprep.subr.mxu0 0.0
      %606 = vmatpush1.msra.mxu0 0.0
      %607 = vmatprep.subr.mxu0 0.0
      %608 = vmatpush1.msra.mxu0 0.0
      %609 = vmatprep.subr.mxu0 0.0
      %610 = vmatpush1.msra.mxu0 0.0
      %611 = vmatprep.subr.mxu0 0.0
      %612 = vmatpush1.msra.mxu0 0.0
      %613 = vmatprep.subr.mxu0 0.0
      %614 = vmatpush1.msra.mxu0 0.0
      %615 = vmatprep.subr.mxu0 0.0
      %616 = vmatpush1.msra.mxu0 0.0
      %617 = vmatprep.subr.mxu0 0.0
      %618 = vmatpush1.msra.mxu0 0.0
      %619 = vmatprep.subr.mxu0 0.0
      %620 = vmatpush1.msra.mxu0 0.0
      %621 = vmatprep.subr.mxu0 0.0
      %622 = vmatpush1.msra.mxu0 0.0
      %623 = vmatprep.subr.mxu0 0.0
      %624 = vmatpush1.msra.mxu0 0.0
      %625 = vmatprep.subr.mxu0 0.0
      %626 = vmatpush1.msra.mxu0 0.0
      %627 = vmatprep.subr.mxu0 0.0
      %628 = vmatpush1.msra.mxu0 0.0
      %629 = vmatprep.subr.mxu0 0.0
      %630 = vmatpush1.msra.mxu0 0.0
      %631 = vmatprep.subr.mxu0 0.0
      %632 = vmatpush1.msra.mxu0 0.0
      %633 = vmatprep.subr.mxu0 0.0
      %634 = vmatpush1.msra.mxu0 0.0
      %635 = vmatprep.subr.mxu0 0.0
      %636 = vmatpush1.msra.mxu0 0.0
      %637 = vmatprep.mubr.f32.mxu0 0.0
      %638 = vmatmul.mubr.f32.gmra.mrb[0].mxu0 %v567
      %v639 = vpop.f32.mrb[0].mxu0
      %v640 = vadd.f32 %v551, %v639
      %v641 = vpop.f32.mrb[0].mxu0
      %v642 = vadd.f32 %v553, %v641
      %643 = vdwg.mxu0
      %v644 = vld [vmem:[#allocation2] sm:$0xff]
      %v645 = vld [vmem:[#allocation2 + $0x8] sm:$0xf]
      %s646 = scalar_lea.vmem %s3, 12
      %v647 = vld [vmem:[%s646] sm:$0xf]
      %v650 = vcombine.high %v644, %v644
      %651 = vrot.lane.b32.xlu0 %v644, 1
      %v652 = vpop.permute.xlu0 %651
      %653 = vrot.lane.b32.xlu0 %v650, 1
      %v654 = vpop.permute.xlu0 %653
      %655 = vrot.lane.b32.xlu0 %v645, 1
      %v656 = vpop.permute.xlu0 %655
      %vm657 = vcmask 7168
      %v658 = vsel %vm657, %v652, %v654
      %v659 = vsel %vm657, %v654, %v656
      %v661 = vsel %vm475, %v647, 0
      %v663 = vsel %vm479, %v658, 0
      %v665 = vsel %vm479, %v659, 0
      %667 = vmatprep.subr.mxu0 %v665
      %668 = vmatpush1.msra.mxu0 %v663
      %669 = vmatprep.subr.mxu0 0.0
      %670 = vmatpush1.msra.mxu0 0.0
      %671 = vmatprep.subr.mxu0 0.0
      %672 = vmatpush1.msra.mxu0 0.0
      %673 = vmatprep.subr.mxu0 0.0
      %674 = vmatpush1.msra.mxu0 0.0
      %675 = vmatprep.subr.mxu0 0.0
      %676 = vmatpush1.msra.mxu0 0.0
      %677 = vmatprep.subr.mxu0 0.0
      %678 = vmatpush1.msra.mxu0 0.0
      %679 = vmatprep.subr.mxu0 0.0
      %680 = vmatpush1.msra.mxu0 0.0
      %681 = vmatprep.subr.mxu0 0.0
      %682 = vmatpush1.msra.mxu0 0.0
      %683 = vmatprep.subr.mxu0 0.0
      %684 = vmatpush1.msra.mxu0 0.0
      %685 = vmatprep.subr.mxu0 0.0
      %686 = vmatpush1.msra.mxu0 0.0
      %687 = vmatprep.subr.mxu0 0.0
      %688 = vmatpush1.msra.mxu0 0.0
      %689 = vmatprep.subr.mxu0 0.0
      %690 = vmatpush1.msra.mxu0 0.0
      %691 = vmatprep.subr.mxu0 0.0
      %692 = vmatpush1.msra.mxu0 0.0
      %693 = vmatprep.subr.mxu0 0.0
      %694 = vmatpush1.msra.mxu0 0.0
      %695 = vmatprep.subr.mxu0 0.0
      %696 = vmatpush1.msra.mxu0 0.0
      %697 = vmatprep.subr.mxu0 0.0
      %698 = vmatpush1.msra.mxu0 0.0
      %699 = vmatprep.subr.mxu0 0.0
      %700 = vmatpush1.msra.mxu0 0.0
      %701 = vmatprep.subr.mxu0 0.0
      %702 = vmatpush1.msra.mxu0 0.0
      %703 = vmatprep.subr.mxu0 0.0
      %704 = vmatpush1.msra.mxu0 0.0
      %705 = vmatprep.subr.mxu0 0.0
      %706 = vmatpush1.msra.mxu0 0.0
      %707 = vmatprep.subr.mxu0 0.0
      %708 = vmatpush1.msra.mxu0 0.0
      %709 = vmatprep.subr.mxu0 0.0
      %710 = vmatpush1.msra.mxu0 0.0
      %711 = vmatprep.subr.mxu0 0.0
      %712 = vmatpush1.msra.mxu0 0.0
      %713 = vmatprep.subr.mxu0 0.0
      %714 = vmatpush1.msra.mxu0 0.0
      %715 = vmatprep.subr.mxu0 0.0
      %716 = vmatpush1.msra.mxu0 0.0
      %717 = vmatprep.subr.mxu0 0.0
      %718 = vmatpush1.msra.mxu0 0.0
      %719 = vmatprep.subr.mxu0 0.0
      %720 = vmatpush1.msra.mxu0 0.0
      %721 = vmatprep.subr.mxu0 0.0
      %722 = vmatpush1.msra.mxu0 0.0
      %723 = vmatprep.subr.mxu0 0.0
      %724 = vmatpush1.msra.mxu0 0.0
      %725 = vmatprep.subr.mxu0 0.0
      %726 = vmatpush1.msra.mxu0 0.0
      %727 = vmatprep.subr.mxu0 0.0
      %728 = vmatpush1.msra.mxu0 0.0
      %729 = vmatprep.subr.mxu0 0.0
      %730 = vmatpush1.msra.mxu0 0.0
      %731 = vmatprep.mubr.f32.mxu0 0.0
      %732 = vmatmul.mubr.f32.gmra.mrb[0].mxu0 %v661
      %v733 = vpop.f32.mrb[0].mxu0
      %v734 = vadd.f32 0.0, %v733
      %v735 = vpop.f32.mrb[0].mxu0
      %v736 = vadd.f32 0.0, %v735
      %737 = vdwg.mxu0
      %v738 = vadd.f32 %v640, %v734
      %v739 = vadd.f32 %v642, %v736
      %v740 = vld [vmem:[#allocation3] sm:$0xff]
      %v741 = vld [vmem:[#allocation3 + $0x8] sm:$0xf]
      %s742 = scalar_lea.vmem %s4, 12
      %v743 = vld [vmem:[%s742] sm:$0xf]
      %v746 = vcombine.high %v740, %v740
      %747 = vrot.lane.b32.xlu0 %v740, 1
      %v748 = vpop.permute.xlu0 %747
      %749 = vrot.lane.b32.xlu0 %v746, 1
      %v750 = vpop.permute.xlu0 %749
      %751 = vrot.lane.b32.xlu0 %v741, 1
      %v752 = vpop.permute.xlu0 %751
      %v753 = vsel %vm657, %v748, %v750
      %v754 = vsel %vm657, %v750, %v752
      %v756 = vsel %vm475, %v743, 0
      %v758 = vsel %vm479, %v753, 0
      %v760 = vsel %vm479, %v754, 0
      %762 = vmatprep.subr.mxu0 %v760
      %763 = vmatpush1.msra.mxu0 %v758
      %764 = vmatprep.subr.mxu0 0.0
      %765 = vmatpush1.msra.mxu0 0.0
      %766 = vmatprep.subr.mxu0 0.0
      %767 = vmatpush1.msra.mxu0 0.0
      %768 = vmatprep.subr.mxu0 0.0
      %769 = vmatpush1.msra.mxu0 0.0
      %770 = vmatprep.subr.mxu0 0.0
      %771 = vmatpush1.msra.mxu0 0.0
      %772 = vmatprep.subr.mxu0 0.0
      %773 = vmatpush1.msra.mxu0 0.0
      %774 = vmatprep.subr.mxu0 0.0
      %775 = vmatpush1.msra.mxu0 0.0
      %776 = vmatprep.subr.mxu0 0.0
      %777 = vmatpush1.msra.mxu0 0.0
      %778 = vmatprep.subr.mxu0 0.0
      %779 = vmatpush1.msra.mxu0 0.0
      %780 = vmatprep.subr.mxu0 0.0
      %781 = vmatpush1.msra.mxu0 0.0
      %782 = vmatprep.subr.mxu0 0.0
      %783 = vmatpush1.msra.mxu0 0.0
      %784 = vmatprep.subr.mxu0 0.0
      %785 = vmatpush1.msra.mxu0 0.0
      %786 = vmatprep.subr.mxu0 0.0
      %787 = vmatpush1.msra.mxu0 0.0
      %788 = vmatprep.subr.mxu0 0.0
      %789 = vmatpush1.msra.mxu0 0.0
      %790 = vmatprep.subr.mxu0 0.0
      %791 = vmatpush1.msra.mxu0 0.0
      %792 = vmatprep.subr.mxu0 0.0
      %793 = vmatpush1.msra.mxu0 0.0
      %794 = vmatprep.subr.mxu0 0.0
      %795 = vmatpush1.msra.mxu0 0.0
      %796 = vmatprep.subr.mxu0 0.0
      %797 = vmatpush1.msra.mxu0 0.0
      %798 = vmatprep.subr.mxu0 0.0
      %799 = vmatpush1.msra.mxu0 0.0
      %800 = vmatprep.subr.mxu0 0.0
      %801 = vmatpush1.msra.mxu0 0.0
      %802 = vmatprep.subr.mxu0 0.0
      %803 = vmatpush1.msra.mxu0 0.0
      %804 = vmatprep.subr.mxu0 0.0
      %805 = vmatpush1.msra.mxu0 0.0
      %806 = vmatprep.subr.mxu0 0.0
      %807 = vmatpush1.msra.mxu0 0.0
      %808 = vmatprep.subr.mxu0 0.0
      %809 = vmatpush1.msra.mxu0 0.0
      %810 = vmatprep.subr.mxu0 0.0
      %811 = vmatpush1.msra.mxu0 0.0
      %812 = vmatprep.subr.mxu0 0.0
      %813 = vmatpush1.msra.mxu0 0.0
      %814 = vmatprep.subr.mxu0 0.0
      %815 = vmatpush1.msra.mxu0 0.0
      %816 = vmatprep.subr.mxu0 0.0
      %817 = vmatpush1.msra.mxu0 0.0
      %818 = vmatprep.subr.mxu0 0.0
      %819 = vmatpush1.msra.mxu0 0.0
      %820 = vmatprep.subr.mxu0 0.0
      %821 = vmatpush1.msra.mxu0 0.0
      %822 = vmatprep.subr.mxu0 0.0
      %823 = vmatpush1.msra.mxu0 0.0
      %824 = vmatprep.subr.mxu0 0.0
      %825 = vmatpush1.msra.mxu0 0.0
      %826 = vmatprep.mubr.f32.mxu0 0.0
      %827 = vmatmul.mubr.f32.gmra.mrb[0].mxu0 %v756
      %v828 = vpop.f32.mrb[0].mxu0
      %v829 = vadd.f32 0.0, %v828
      %v830 = vpop.f32.mrb[0].mxu0
      %v831 = vadd.f32 0.0, %v830
      %832 = vdwg.mxu0
      %v833 = vadd.f32 %v738, %v829
      %v834 = vadd.f32 %v739, %v831
      %v835 = vld [vmem:[#allocation2 + $0x4] sm:$0xff]
      %v836 = vld [vmem:[#allocation2 + $0xc] sm:$0xf]
      %s837 = scalar_lea.vmem %s3, 24
      %v838 = vld [vmem:[%s837] sm:$0xf]
      %v841 = vcombine.high %v835, %v835
      %842 = vrot.lane.b32.xlu0 %v835, 113
      %v843 = vpop.permute.xlu0 %842
      %844 = vrot.lane.b32.xlu0 %v841, 113
      %v845 = vpop.permute.xlu0 %844
      %846 = vrot.lane.b32.xlu0 %v836, 113
      %v847 = vpop.permute.xlu0 %846
      %vm848 = vcmask 924672
      %v849 = vsel %vm848, %v843, %v845
      %v850 = vsel %vm848, %v845, %v847
      %v852 = vsel %vm475, %v838, 0
      %v854 = vsel %vm479, %v849, 0
      %v856 = vsel %vm479, %v850, 0
      %858 = vmatprep.subr.mxu0 %v856
      %859 = vmatpush1.msra.mxu0 %v854
      %860 = vmatprep.subr.mxu0 0.0
      %861 = vmatpush1.msra.mxu0 0.0
      %862 = vmatprep.subr.mxu0 0.0
      %863 = vmatpush1.msra.mxu0 0.0
      %864 = vmatprep.subr.mxu0 0.0
      %865 = vmatpush1.msra.mxu0 0.0
      %866 = vmatprep.subr.mxu0 0.0
      %867 = vmatpush1.msra.mxu0 0.0
      %868 = vmatprep.subr.mxu0 0.0
      %869 = vmatpush1.msra.mxu0 0.0
      %870 = vmatprep.subr.mxu0 0.0
      %871 = vmatpush1.msra.mxu0 0.0
      %872 = vmatprep.subr.mxu0 0.0
      %873 = vmatpush1.msra.mxu0 0.0
      %874 = vmatprep.subr.mxu0 0.0
      %875 = vmatpush1.msra.mxu0 0.0
      %876 = vmatprep.subr.mxu0 0.0
      %877 = vmatpush1.msra.mxu0 0.0
      %878 = vmatprep.subr.mxu0 0.0
      %879 = vmatpush1.msra.mxu0 0.0
      %880 = vmatprep.subr.mxu0 0.0
      %881 = vmatpush1.msra.mxu0 0.0
      %882 = vmatprep.subr.mxu0 0.0
      %883 = vmatpush1.msra.mxu0 0.0
      %884 = vmatprep.subr.mxu0 0.0
      %885 = vmatpush1.msra.mxu0 0.0
      %886 = vmatprep.subr.mxu0 0.0
      %887 = vmatpush1.msra.mxu0 0.0
      %888 = vmatprep.subr.mxu0 0.0
      %889 = vmatpush1.msra.mxu0 0.0
      %890 = vmatprep.subr.mxu0 0.0
      %891 = vmatpush1.msra.mxu0 0.0
      %892 = vmatprep.subr.mxu0 0.0
      %893 = vmatpush1.msra.mxu0 0.0
      %894 = vmatprep.subr.mxu0 0.0
      %895 = vmatpush1.msra.mxu0 0.0
      %896 = vmatprep.subr.mxu0 0.0
      %897 = vmatpush1.msra.mxu0 0.0
      %898 = vmatprep.subr.mxu0 0.0
      %899 = vmatpush1.msra.mxu0 0.0
      %900 = vmatprep.subr.mxu0 0.0
      %901 = vmatpush1.msra.mxu0 0.0
      %902 = vmatprep.subr.mxu0 0.0
      %903 = vmatpush1.msra.mxu0 0.0
      %904 = vmatprep.subr.mxu0 0.0
      %905 = vmatpush1.msra.mxu0 0.0
      %906 = vmatprep.subr.mxu0 0.0
      %907 = vmatpush1.msra.mxu0 0.0
      %908 = vmatprep.subr.mxu0 0.0
      %909 = vmatpush1.msra.mxu0 0.0
      %910 = vmatprep.subr.mxu0 0.0
      %911 = vmatpush1.msra.mxu0 0.0
      %912 = vmatprep.subr.mxu0 0.0
      %913 = vmatpush1.msra.mxu0 0.0
      %914 = vmatprep.subr.mxu0 0.0
      %915 = vmatpush1.msra.mxu0 0.0
      %916 = vmatprep.subr.mxu0 0.0
      %917 = vmatpush1.msra.mxu0 0.0
      %918 = vmatprep.subr.mxu0 0.0
      %919 = vmatpush1.msra.mxu0 0.0
      %920 = vmatprep.subr.mxu0 0.0
      %921 = vmatpush1.msra.mxu0 0.0
      %922 = vmatprep.mubr.f32.mxu0 0.0
      %923 = vmatmul.mubr.f32.gmra.mrb[0].mxu0 %v852
      %v924 = vpop.f32.mrb[0].mxu0
      %v925 = vadd.f32 0.0, %v924
      %v926 = vpop.f32.mrb[0].mxu0
      %v927 = vadd.f32 0.0, %v926
      %928 = vdwg.mxu0
      %v929 = vadd.f32 %v833, %v925
      %v930 = vadd.f32 %v834, %v927
      %v931 = vld [vmem:[#allocation3 + $0x4] sm:$0xff]
      %v932 = vld [vmem:[#allocation3 + $0xc] sm:$0xf]
      %s933 = scalar_lea.vmem %s4, 24
      %v934 = vld [vmem:[%s933] sm:$0xf]
      %v937 = vcombine.high %v931, %v931
      %938 = vrot.lane.b32.xlu0 %v931, 113
      %v939 = vpop.permute.xlu0 %938
      %940 = vrot.lane.b32.xlu0 %v937, 113
      %v941 = vpop.permute.xlu0 %940
      %942 = vrot.lane.b32.xlu0 %v932, 113
      %v943 = vpop.permute.xlu0 %942
      %v944 = vsel %vm848, %v939, %v941
      %v945 = vsel %vm848, %v941, %v943
      %v947 = vsel %vm475, %v934, 0
      %v949 = vsel %vm479, %v944, 0
      %v951 = vsel %vm479, %v945, 0
      %953 = vmatprep.subr.mxu0 %v951
      %954 = vmatpush1.msra.mxu0 %v949
      %955 = vmatprep.subr.mxu0 0.0
      %956 = vmatpush1.msra.mxu0 0.0
      %957 = vmatprep.subr.mxu0 0.0
      %958 = vmatpush1.msra.mxu0 0.0
      %959 = vmatprep.subr.mxu0 0.0
      %960 = vmatpush1.msra.mxu0 0.0
      %961 = vmatprep.subr.mxu0 0.0
      %962 = vmatpush1.msra.mxu0 0.0
      %963 = vmatprep.subr.mxu0 0.0
      %964 = vmatpush1.msra.mxu0 0.0
      %965 = vmatprep.subr.mxu0 0.0
      %966 = vmatpush1.msra.mxu0 0.0
      %967 = vmatprep.subr.mxu0 0.0
      %968 = vmatpush1.msra.mxu0 0.0
      %969 = vmatprep.subr.mxu0 0.0
      %970 = vmatpush1.msra.mxu0 0.0
      %971 = vmatprep.subr.mxu0 0.0
      %972 = vmatpush1.msra.mxu0 0.0
      %973 = vmatprep.subr.mxu0 0.0
      %974 = vmatpush1.msra.mxu0 0.0
      %975 = vmatprep.subr.mxu0 0.0
      %976 = vmatpush1.msra.mxu0 0.0
      %977 = vmatprep.subr.mxu0 0.0
      %978 = vmatpush1.msra.mxu0 0.0
      %979 = vmatprep.subr.mxu0 0.0
      %980 = vmatpush1.msra.mxu0 0.0
      %981 = vmatprep.subr.mxu0 0.0
      %982 = vmatpush1.msra.mxu0 0.0
      %983 = vmatprep.subr.mxu0 0.0
      %984 = vmatpush1.msra.mxu0 0.0
      %985 = vmatprep.subr.mxu0 0.0
      %986 = vmatpush1.msra.mxu0 0.0
      %987 = vmatprep.subr.mxu0 0.0
      %988 = vmatpush1.msra.mxu0 0.0
      %989 = vmatprep.subr.mxu0 0.0
      %990 = vmatpush1.msra.mxu0 0.0
      %991 = vmatprep.subr.mxu0 0.0
      %992 = vmatpush1.msra.mxu0 0.0
      %993 = vmatprep.subr.mxu0 0.0
      %994 = vmatpush1.msra.mxu0 0.0
      %995 = vmatprep.subr.mxu0 0.0
      %996 = vmatpush1.msra.mxu0 0.0
      %997 = vmatprep.subr.mxu0 0.0
      %998 = vmatpush1.msra.mxu0 0.0
      %999 = vmatprep.subr.mxu0 0.0
      %1000 = vmatpush1.msra.mxu0 0.0
      %1001 = vmatprep.subr.mxu0 0.0
      %1002 = vmatpush1.msra.mxu0 0.0
      %1003 = vmatprep.subr.mxu0 0.0
      %1004 = vmatpush1.msra.mxu0 0.0
      %1005 = vmatprep.subr.mxu0 0.0
      %1006 = vmatpush1.msra.mxu0 0.0
      %1007 = vmatprep.subr.mxu0 0.0
      %1008 = vmatpush1.msra.mxu0 0.0
      %1009 = vmatprep.subr.mxu0 0.0
      %1010 = vmatpush1.msra.mxu0 0.0
      %1011 = vmatprep.subr.mxu0 0.0
      %1012 = vmatpush1.msra.mxu0 0.0
      %1013 = vmatprep.subr.mxu0 0.0
      %1014 = vmatpush1.msra.mxu0 0.0
      %1015 = vmatprep.subr.mxu0 0.0
      %1016 = vmatpush1.msra.mxu0 0.0
      %1017 = vmatprep.mubr.f32.mxu0 0.0
      %1018 = vmatmul.mubr.f32.gmra.mrb[0].mxu0 %v947
      %v1019 = vpop.f32.mrb[0].mxu0
      %v1020 = vadd.f32 0.0, %v1019
      %v1021 = vpop.f32.mrb[0].mxu0
      %v1022 = vadd.f32 0.0, %v1021
      %1023 = vdwg.mxu0
      %v1024 = vadd.f32 %v929, %v1020
      %v1025 = vadd.f32 %v930, %v1022
      %v1027 = vlaneseq
      %v1028 = vshrl.u32 %v1027, 7
      %v1029 = vsub.s32 0, %v1028
      %v1030 = vrot.slane %v453, %v1029
      %v1031 = vlaneseq
      %v1032 = vshrl.u32 %v1031, 7
      %v1033 = vsub.s32 1, %v1032
      %v1034 = vrot.slane %v453, %v1033
      %v1037 = vmul.f32 %v1024, %v1030
      %v1038 = vmul.f32 %v1025, %v1034
      %v1039 = vadd.f32 %v1037, 0.0
      %v1040 = vadd.f32 %v1038, 0.0
      %v1041 = vld [vmem:[#allocation2] sm:$0xff]
      %v1042 = vld [vmem:[#allocation2 + $0x8] sm:$0xf]
      %s1043 = scalar_lea.vmem %s3, 4
      %v1044 = vld [vmem:[%s1043] sm:$0xf]
      %v1045 = vld [vmem:[#allocation3] sm:$0xff]
      %v1046 = vld [vmem:[#allocation3 + $0x8] sm:$0xf]
      %s1047 = scalar_lea.vmem %s4, 4
      %v1048 = vld [vmem:[%s1047] sm:$0xf]
      %v1051 = vcombine.high %v1045, %v1045
      %1052 = vrot.lane.b32.xlu0 %v1045, 16
      %v1053 = vpop.permute.xlu0 %1052
      %1054 = vrot.lane.b32.xlu0 %v1051, 16
      %v1055 = vpop.permute.xlu0 %1054
      %1056 = vrot.lane.b32.xlu0 %v1046, 16
      %v1057 = vpop.permute.xlu0 %1056
      %vm1058 = vcmask 130048
      %v1059 = vsel %vm1058, %v1053, %v1055
      %v1060 = vsel %vm1058, %v1055, %v1057
      %v1062 = vsel %vm475, %v1048, 0
      %v1064 = vsel %vm479, %v1059, 0
      %v1066 = vsel %vm479, %v1060, 0
      %1068 = vmatprep.subr.mxu0 %v1066
      %1069 = vmatpush1.msra.mxu0 %v1064
      %1070 = vmatprep.subr.mxu0 0.0
      %1071 = vmatpush1.msra.mxu0 0.0
      %1072 = vmatprep.subr.mxu0 0.0
      %1073 = vmatpush1.msra.mxu0 0.0
      %1074 = vmatprep.subr.mxu0 0.0
      %1075 = vmatpush1.msra.mxu0 0.0
      %1076 = vmatprep.subr.mxu0 0.0
      %1077 = vmatpush1.msra.mxu0 0.0
      %1078 = vmatprep.subr.mxu0 0.0
      %1079 = vmatpush1.msra.mxu0 0.0
      %1080 = vmatprep.subr.mxu0 0.0
      %1081 = vmatpush1.msra.mxu0 0.0
      %1082 = vmatprep.subr.mxu0 0.0
      %1083 = vmatpush1.msra.mxu0 0.0
      %1084 = vmatprep.subr.mxu0 0.0
      %1085 = vmatpush1.msra.mxu0 0.0
      %1086 = vmatprep.subr.mxu0 0.0
      %1087 = vmatpush1.msra.mxu0 0.0
      %1088 = vmatprep.subr.mxu0 0.0
      %1089 = vmatpush1.msra.mxu0 0.0
      %1090 = vmatprep.subr.mxu0 0.0
      %1091 = vmatpush1.msra.mxu0 0.0
      %1092 = vmatprep.subr.mxu0 0.0
      %1093 = vmatpush1.msra.mxu0 0.0
      %1094 = vmatprep.subr.mxu0 0.0
      %1095 = vmatpush1.msra.mxu0 0.0
      %1096 = vmatprep.subr.mxu0 0.0
      %1097 = vmatpush1.msra.mxu0 0.0
      %1098 = vmatprep.subr.mxu0 0.0
      %1099 = vmatpush1.msra.mxu0 0.0
      %1100 = vmatprep.subr.mxu0 0.0
      %1101 = vmatpush1.msra.mxu0 0.0
      %1102 = vmatprep.subr.mxu0 0.0
      %1103 = vmatpush1.msra.mxu0 0.0
      %1104 = vmatprep.subr.mxu0 0.0
      %1105 = vmatpush1.msra.mxu0 0.0
      %1106 = vmatprep.subr.mxu0 0.0
      %1107 = vmatpush1.msra.mxu0 0.0
      %1108 = vmatprep.subr.mxu0 0.0
      %1109 = vmatpush1.msra.mxu0 0.0
      %1110 = vmatprep.subr.mxu0 0.0
      %1111 = vmatpush1.msra.mxu0 0.0
      %1112 = vmatprep.subr.mxu0 0.0
      %1113 = vmatpush1.msra.mxu0 0.0
      %1114 = vmatprep.subr.mxu0 0.0
      %1115 = vmatpush1.msra.mxu0 0.0
      %1116 = vmatprep.subr.mxu0 0.0
      %1117 = vmatpush1.msra.mxu0 0.0
      %1118 = vmatprep.subr.mxu0 0.0
      %1119 = vmatpush1.msra.mxu0 0.0
      %1120 = vmatprep.subr.mxu0 0.0
      %1121 = vmatpush1.msra.mxu0 0.0
      %1122 = vmatprep.subr.mxu0 0.0
      %1123 = vmatpush1.msra.mxu0 0.0
      %1124 = vmatprep.subr.mxu0 0.0
      %1125 = vmatpush1.msra.mxu0 0.0
      %1126 = vmatprep.subr.mxu0 0.0
      %1127 = vmatpush1.msra.mxu0 0.0
      %1128 = vmatprep.subr.mxu0 0.0
      %1129 = vmatpush1.msra.mxu0 0.0
      %1130 = vmatprep.subr.mxu0 0.0
      %1131 = vmatpush1.msra.mxu0 0.0
      %1132 = vmatprep.mubr.f32.mxu0 0.0
      %1133 = vmatmul.mubr.f32.gmra.mrb[0].mxu0 %v1062
      %v1134 = vpop.f32.mrb[0].mxu0
      %v1135 = vadd.f32 0.0, %v1134
      %v1136 = vpop.f32.mrb[0].mxu0
      %v1137 = vadd.f32 0.0, %v1136
      %1138 = vdwg.mxu0
      %v1141 = vcombine.high %v1041, %v1041
      %1142 = vrot.lane.b32.xlu0 %v1041, 16
      %v1143 = vpop.permute.xlu0 %1142
      %1144 = vrot.lane.b32.xlu0 %v1141, 16
      %v1145 = vpop.permute.xlu0 %1144
      %1146 = vrot.lane.b32.xlu0 %v1042, 16
      %v1147 = vpop.permute.xlu0 %1146
      %v1148 = vsel %vm1058, %v1143, %v1145
      %v1149 = vsel %vm1058, %v1145, %v1147
      %v1151 = vsel %vm475, %v1044, 0
      %v1153 = vsel %vm479, %v1148, 0
      %v1155 = vsel %vm479, %v1149, 0
      %1157 = vmatprep.subr.mxu0 %v1155
      %1158 = vmatpush1.msra.mxu0 %v1153
      %1159 = vmatprep.subr.mxu0 0.0
      %1160 = vmatpush1.msra.mxu0 0.0
      %1161 = vmatprep.subr.mxu0 0.0
      %1162 = vmatpush1.msra.mxu0 0.0
      %1163 = vmatprep.subr.mxu0 0.0
      %1164 = vmatpush1.msra.mxu0 0.0
      %1165 = vmatprep.subr.mxu0 0.0
      %1166 = vmatpush1.msra.mxu0 0.0
      %1167 = vmatprep.subr.mxu0 0.0
      %1168 = vmatpush1.msra.mxu0 0.0
      %1169 = vmatprep.subr.mxu0 0.0
      %1170 = vmatpush1.msra.mxu0 0.0
      %1171 = vmatprep.subr.mxu0 0.0
      %1172 = vmatpush1.msra.mxu0 0.0
      %1173 = vmatprep.subr.mxu0 0.0
      %1174 = vmatpush1.msra.mxu0 0.0
      %1175 = vmatprep.subr.mxu0 0.0
      %1176 = vmatpush1.msra.mxu0 0.0
      %1177 = vmatprep.subr.mxu0 0.0
      %1178 = vmatpush1.msra.mxu0 0.0
      %1179 = vmatprep.subr.mxu0 0.0
      %1180 = vmatpush1.msra.mxu0 0.0
      %1181 = vmatprep.subr.mxu0 0.0
      %1182 = vmatpush1.msra.mxu0 0.0
      %1183 = vmatprep.subr.mxu0 0.0
      %1184 = vmatpush1.msra.mxu0 0.0
      %1185 = vmatprep.subr.mxu0 0.0
      %1186 = vmatpush1.msra.mxu0 0.0
      %1187 = vmatprep.subr.mxu0 0.0
      %1188 = vmatpush1.msra.mxu0 0.0
      %1189 = vmatprep.subr.mxu0 0.0
      %1190 = vmatpush1.msra.mxu0 0.0
      %1191 = vmatprep.subr.mxu0 0.0
      %1192 = vmatpush1.msra.mxu0 0.0
      %1193 = vmatprep.subr.mxu0 0.0
      %1194 = vmatpush1.msra.mxu0 0.0
      %1195 = vmatprep.subr.mxu0 0.0
      %1196 = vmatpush1.msra.mxu0 0.0
      %1197 = vmatprep.subr.mxu0 0.0
      %1198 = vmatpush1.msra.mxu0 0.0
      %1199 = vmatprep.subr.mxu0 0.0
      %1200 = vmatpush1.msra.mxu0 0.0
      %1201 = vmatprep.subr.mxu0 0.0
      %1202 = vmatpush1.msra.mxu0 0.0
      %1203 = vmatprep.subr.mxu0 0.0
      %1204 = vmatpush1.msra.mxu0 0.0
      %1205 = vmatprep.subr.mxu0 0.0
      %1206 = vmatpush1.msra.mxu0 0.0
      %1207 = vmatprep.subr.mxu0 0.0
      %1208 = vmatpush1.msra.mxu0 0.0
      %1209 = vmatprep.subr.mxu0 0.0
      %1210 = vmatpush1.msra.mxu0 0.0
      %1211 = vmatprep.subr.mxu0 0.0
      %1212 = vmatpush1.msra.mxu0 0.0
      %1213 = vmatprep.subr.mxu0 0.0
      %1214 = vmatpush1.msra.mxu0 0.0
      %1215 = vmatprep.subr.mxu0 0.0
      %1216 = vmatpush1.msra.mxu0 0.0
      %1217 = vmatprep.subr.mxu0 0.0
      %1218 = vmatpush1.msra.mxu0 0.0
      %1219 = vmatprep.subr.mxu0 0.0
      %1220 = vmatpush1.msra.mxu0 0.0
      %1221 = vmatprep.mubr.f32.mxu0 0.0
      %1222 = vmatmul.mubr.f32.gmra.mrb[0].mxu0 %v1151
      %v1223 = vpop.f32.mrb[0].mxu0
      %v1224 = vadd.f32 %v1135, %v1223
      %v1225 = vpop.f32.mrb[0].mxu0
      %v1226 = vadd.f32 %v1137, %v1225
      %1227 = vdwg.mxu0
      %v1228 = vld [vmem:[#allocation2 + $0x4] sm:$0xff]
      %s1229 = scalar_lea.vmem %s3, 16
      %v1230 = vld [vmem:[%s1229] sm:$0xf]
      %v1232 = vcombine.high %v1228, %v1228
      %v1234 = vsel %vm475, %v1230, 0
      %v1236 = vsel %vm479, %v1228, 0
      %v1238 = vsel %vm479, %v1232, 0
      %1240 = vmatprep.subr.mxu0 %v1238
      %1241 = vmatpush1.msra.mxu0 %v1236
      %1242 = vmatprep.subr.mxu0 0.0
      %1243 = vmatpush1.msra.mxu0 0.0
      %1244 = vmatprep.subr.mxu0 0.0
      %1245 = vmatpush1.msra.mxu0 0.0
      %1246 = vmatprep.subr.mxu0 0.0
      %1247 = vmatpush1.msra.mxu0 0.0
      %1248 = vmatprep.subr.mxu0 0.0
      %1249 = vmatpush1.msra.mxu0 0.0
      %1250 = vmatprep.subr.mxu0 0.0
      %1251 = vmatpush1.msra.mxu0 0.0
      %1252 = vmatprep.subr.mxu0 0.0
      %1253 = vmatpush1.msra.mxu0 0.0
      %1254 = vmatprep.subr.mxu0 0.0
      %1255 = vmatpush1.msra.mxu0 0.0
      %1256 = vmatprep.subr.mxu0 0.0
      %1257 = vmatpush1.msra.mxu0 0.0
      %1258 = vmatprep.subr.mxu0 0.0
      %1259 = vmatpush1.msra.mxu0 0.0
      %1260 = vmatprep.subr.mxu0 0.0
      %1261 = vmatpush1.msra.mxu0 0.0
      %1262 = vmatprep.subr.mxu0 0.0
      %1263 = vmatpush1.msra.mxu0 0.0
      %1264 = vmatprep.subr.mxu0 0.0
      %1265 = vmatpush1.msra.mxu0 0.0
      %1266 = vmatprep.subr.mxu0 0.0
      %1267 = vmatpush1.msra.mxu0 0.0
      %1268 = vmatprep.subr.mxu0 0.0
      %1269 = vmatpush1.msra.mxu0 0.0
      %1270 = vmatprep.subr.mxu0 0.0
      %1271 = vmatpush1.msra.mxu0 0.0
      %1272 = vmatprep.subr.mxu0 0.0
      %1273 = vmatpush1.msra.mxu0 0.0
      %1274 = vmatprep.subr.mxu0 0.0
      %1275 = vmatpush1.msra.mxu0 0.0
      %1276 = vmatprep.subr.mxu0 0.0
      %1277 = vmatpush1.msra.mxu0 0.0
      %1278 = vmatprep.subr.mxu0 0.0
      %1279 = vmatpush1.msra.mxu0 0.0
      %1280 = vmatprep.subr.mxu0 0.0
      %1281 = vmatpush1.msra.mxu0 0.0
      %1282 = vmatprep.subr.mxu0 0.0
      %1283 = vmatpush1.msra.mxu0 0.0
      %1284 = vmatprep.subr.mxu0 0.0
      %1285 = vmatpush1.msra.mxu0 0.0
      %1286 = vmatprep.subr.mxu0 0.0
      %1287 = vmatpush1.msra.mxu0 0.0
      %1288 = vmatprep.subr.mxu0 0.0
      %1289 = vmatpush1.msra.mxu0 0.0
      %1290 = vmatprep.subr.mxu0 0.0
      %1291 = vmatpush1.msra.mxu0 0.0
      %1292 = vmatprep.subr.mxu0 0.0
      %1293 = vmatpush1.msra.mxu0 0.0
      %1294 = vmatprep.subr.mxu0 0.0
      %1295 = vmatpush1.msra.mxu0 0.0
      %1296 = vmatprep.subr.mxu0 0.0
      %1297 = vmatpush1.msra.mxu0 0.0
      %1298 = vmatprep.subr.mxu0 0.0
      %1299 = vmatpush1.msra.mxu0 0.0
      %1300 = vmatprep.subr.mxu0 0.0
      %1301 = vmatpush1.msra.mxu0 0.0
      %1302 = vmatprep.subr.mxu0 0.0
      %1303 = vmatpush1.msra.mxu0 0.0
      %1304 = vmatprep.mubr.f32.mxu0 0.0
      %1305 = vmatmul.mubr.f32.gmra.mrb[0].mxu0 %v1234
      %v1306 = vpop.f32.mrb[0].mxu0
      %v1307 = vadd.f32 0.0, %v1306
      %v1308 = vpop.f32.mrb[0].mxu0
      %v1309 = vadd.f32 0.0, %v1308
      %1310 = vdwg.mxu0
      %v1311 = vadd.f32 %v1224, %v1307
      %v1312 = vadd.f32 %v1226, %v1309
      %v1313 = vld [vmem:[#allocation3 + $0x4] sm:$0xff]
      %s1314 = scalar_lea.vmem %s4, 16
      %v1315 = vld [vmem:[%s1314] sm:$0xf]
      %v1317 = vcombine.high %v1313, %v1313
      %v1319 = vsel %vm475, %v1315, 0
      %v1321 = vsel %vm479, %v1313, 0
      %v1323 = vsel %vm479, %v1317, 0
      %1325 = vmatprep.subr.mxu0 %v1323
      %1326 = vmatpush1.msra.mxu0 %v1321
      %1327 = vmatprep.subr.mxu0 0.0
      %1328 = vmatpush1.msra.mxu0 0.0
      %1329 = vmatprep.subr.mxu0 0.0
      %1330 = vmatpush1.msra.mxu0 0.0
      %1331 = vmatprep.subr.mxu0 0.0
      %1332 = vmatpush1.msra.mxu0 0.0
      %1333 = vmatprep.subr.mxu0 0.0
      %1334 = vmatpush1.msra.mxu0 0.0
      %1335 = vmatprep.subr.mxu0 0.0
      %1336 = vmatpush1.msra.mxu0 0.0
      %1337 = vmatprep.subr.mxu0 0.0
      %1338 = vmatpush1.msra.mxu0 0.0
      %1339 = vmatprep.subr.mxu0 0.0
      %1340 = vmatpush1.msra.mxu0 0.0
      %1341 = vmatprep.subr.mxu0 0.0
      %1342 = vmatpush1.msra.mxu0 0.0
      %1343 = vmatprep.subr.mxu0 0.0
      %1344 = vmatpush1.msra.mxu0 0.0
      %1345 = vmatprep.subr.mxu0 0.0
      %1346 = vmatpush1.msra.mxu0 0.0
      %1347 = vmatprep.subr.mxu0 0.0
      %1348 = vmatpush1.msra.mxu0 0.0
      %1349 = vmatprep.subr.mxu0 0.0
      %1350 = vmatpush1.msra.mxu0 0.0
      %1351 = vmatprep.subr.mxu0 0.0
      %1352 = vmatpush1.msra.mxu0 0.0
      %1353 = vmatprep.subr.mxu0 0.0
      %1354 = vmatpush1.msra.mxu0 0.0
      %1355 = vmatprep.subr.mxu0 0.0
      %1356 = vmatpush1.msra.mxu0 0.0
      %1357 = vmatprep.subr.mxu0 0.0
      %1358 = vmatpush1.msra.mxu0 0.0
      %1359 = vmatprep.subr.mxu0 0.0
      %1360 = vmatpush1.msra.mxu0 0.0
      %1361 = vmatprep.subr.mxu0 0.0
      %1362 = vmatpush1.msra.mxu0 0.0
      %1363 = vmatprep.subr.mxu0 0.0
      %1364 = vmatpush1.msra.mxu0 0.0
      %1365 = vmatprep.subr.mxu0 0.0
      %1366 = vmatpush1.msra.mxu0 0.0
      %1367 = vmatprep.subr.mxu0 0.0
      %1368 = vmatpush1.msra.mxu0 0.0
      %1369 = vmatprep.subr.mxu0 0.0
      %1370 = vmatpush1.msra.mxu0 0.0
      %1371 = vmatprep.subr.mxu0 0.0
      %1372 = vmatpush1.msra.mxu0 0.0
      %1373 = vmatprep.subr.mxu0 0.0
      %1374 = vmatpush1.msra.mxu0 0.0
      %1375 = vmatprep.subr.mxu0 0.0
      %1376 = vmatpush1.msra.mxu0 0.0
      %1377 = vmatprep.subr.mxu0 0.0
      %1378 = vmatpush1.msra.mxu0 0.0
      %1379 = vmatprep.subr.mxu0 0.0
      %1380 = vmatpush1.msra.mxu0 0.0
      %1381 = vmatprep.subr.mxu0 0.0
      %1382 = vmatpush1.msra.mxu0 0.0
      %1383 = vmatprep.subr.mxu0 0.0
      %1384 = vmatpush1.msra.mxu0 0.0
      %1385 = vmatprep.subr.mxu0 0.0
      %1386 = vmatpush1.msra.mxu0 0.0
      %1387 = vmatprep.subr.mxu0 0.0
      %1388 = vmatpush1.msra.mxu0 0.0
      %1389 = vmatprep.mubr.f32.mxu0 0.0
      %1390 = vmatmul.mubr.f32.gmra.mrb[0].mxu0 %v1319
      %v1391 = vpop.f32.mrb[0].mxu0
      %v1392 = vadd.f32 0.0, %v1391
      %v1393 = vpop.f32.mrb[0].mxu0
      %v1394 = vadd.f32 0.0, %v1393
      %1395 = vdwg.mxu0
      %v1396 = vadd.f32 %v1311, %v1392
      %v1397 = vadd.f32 %v1312, %v1394
      %v1398 = vld [vmem:[#allocation2 + $0x4] sm:$0xff]
      %v1399 = vld [vmem:[#allocation2 + $0xc] sm:$0xf]
      %s1400 = scalar_lea.vmem %s3, 28
      %v1401 = vld [vmem:[%s1400] sm:$0xf]
      %v1404 = vcombine.high %v1398, %v1398
      %1405 = vrot.lane.b32.xlu0 %v1398, 112
      %v1406 = vpop.permute.xlu0 %1405
      %1407 = vrot.lane.b32.xlu0 %v1404, 112
      %v1408 = vpop.permute.xlu0 %1407
      %1409 = vrot.lane.b32.xlu0 %v1399, 112
      %v1410 = vpop.permute.xlu0 %1409
      %vm1411 = vcmask 916480
      %v1412 = vsel %vm1411, %v1406, %v1408
      %v1413 = vsel %vm1411, %v1408, %v1410
      %v1415 = vsel %vm475, %v1401, 0
      %v1417 = vsel %vm479, %v1412, 0
      %v1419 = vsel %vm479, %v1413, 0
      %1421 = vmatprep.subr.mxu0 %v1419
      %1422 = vmatpush1.msra.mxu0 %v1417
      %1423 = vmatprep.subr.mxu0 0.0
      %1424 = vmatpush1.msra.mxu0 0.0
      %1425 = vmatprep.subr.mxu0 0.0
      %1426 = vmatpush1.msra.mxu0 0.0
      %1427 = vmatprep.subr.mxu0 0.0
      %1428 = vmatpush1.msra.mxu0 0.0
      %1429 = vmatprep.subr.mxu0 0.0
      %1430 = vmatpush1.msra.mxu0 0.0
      %1431 = vmatprep.subr.mxu0 0.0
      %1432 = vmatpush1.msra.mxu0 0.0
      %1433 = vmatprep.subr.mxu0 0.0
      %1434 = vmatpush1.msra.mxu0 0.0
      %1435 = vmatprep.subr.mxu0 0.0
      %1436 = vmatpush1.msra.mxu0 0.0
      %1437 = vmatprep.subr.mxu0 0.0
      %1438 = vmatpush1.msra.mxu0 0.0
      %1439 = vmatprep.subr.mxu0 0.0
      %1440 = vmatpush1.msra.mxu0 0.0
      %1441 = vmatprep.subr.mxu0 0.0
      %1442 = vmatpush1.msra.mxu0 0.0
      %1443 = vmatprep.subr.mxu0 0.0
      %1444 = vmatpush1.msra.mxu0 0.0
      %1445 = vmatprep.subr.mxu0 0.0
      %1446 = vmatpush1.msra.mxu0 0.0
      %1447 = vmatprep.subr.mxu0 0.0
      %1448 = vmatpush1.msra.mxu0 0.0
      %1449 = vmatprep.subr.mxu0 0.0
      %1450 = vmatpush1.msra.mxu0 0.0
      %1451 = vmatprep.subr.mxu0 0.0
      %1452 = vmatpush1.msra.mxu0 0.0
      %1453 = vmatprep.subr.mxu0 0.0
      %1454 = vmatpush1.msra.mxu0 0.0
      %1455 = vmatprep.subr.mxu0 0.0
      %1456 = vmatpush1.msra.mxu0 0.0
      %1457 = vmatprep.subr.mxu0 0.0
      %1458 = vmatpush1.msra.mxu0 0.0
      %1459 = vmatprep.subr.mxu0 0.0
      %1460 = vmatpush1.msra.mxu0 0.0
      %1461 = vmatprep.subr.mxu0 0.0
      %1462 = vmatpush1.msra.mxu0 0.0
      %1463 = vmatprep.subr.mxu0 0.0
      %1464 = vmatpush1.msra.mxu0 0.0
      %1465 = vmatprep.subr.mxu0 0.0
      %1466 = vmatpush1.msra.mxu0 0.0
      %1467 = vmatprep.subr.mxu0 0.0
      %1468 = vmatpush1.msra.mxu0 0.0
      %1469 = vmatprep.subr.mxu0 0.0
      %1470 = vmatpush1.msra.mxu0 0.0
      %1471 = vmatprep.subr.mxu0 0.0
      %1472 = vmatpush1.msra.mxu0 0.0
      %1473 = vmatprep.subr.mxu0 0.0
      %1474 = vmatpush1.msra.mxu0 0.0
      %1475 = vmatprep.subr.mxu0 0.0
      %1476 = vmatpush1.msra.mxu0 0.0
      %1477 = vmatprep.subr.mxu0 0.0
      %1478 = vmatpush1.msra.mxu0 0.0
      %1479 = vmatprep.subr.mxu0 0.0
      %1480 = vmatpush1.msra.mxu0 0.0
      %1481 = vmatprep.subr.mxu0 0.0
      %1482 = vmatpush1.msra.mxu0 0.0
      %1483 = vmatprep.subr.mxu0 0.0
      %1484 = vmatpush1.msra.mxu0 0.0
      %1485 = vmatprep.mubr.f32.mxu0 0.0
      %1486 = vmatmul.mubr.f32.gmra.mrb[0].mxu0 %v1415
      %v1487 = vpop.f32.mrb[0].mxu0
      %v1488 = vadd.f32 0.0, %v1487
      %v1489 = vpop.f32.mrb[0].mxu0
      %v1490 = vadd.f32 0.0, %v1489
      %1491 = vdwg.mxu0
      %v1492 = vadd.f32 %v1396, %v1488
      %v1493 = vadd.f32 %v1397, %v1490
      %v1494 = vld [vmem:[#allocation3 + $0x4] sm:$0xff]
      %v1495 = vld [vmem:[#allocation3 + $0xc] sm:$0xf]
      %s1496 = scalar_lea.vmem %s4, 28
      %v1497 = vld [vmem:[%s1496] sm:$0xf]
      %v1500 = vcombine.high %v1494, %v1494
      %1501 = vrot.lane.b32.xlu0 %v1494, 112
      %v1502 = vpop.permute.xlu0 %1501
      %1503 = vrot.lane.b32.xlu0 %v1500, 112
      %v1504 = vpop.permute.xlu0 %1503
      %1505 = vrot.lane.b32.xlu0 %v1495, 112
      %v1506 = vpop.permute.xlu0 %1505
      %v1507 = vsel %vm1411, %v1502, %v1504
      %v1508 = vsel %vm1411, %v1504, %v1506
      %v1510 = vsel %vm475, %v1497, 0
      %v1512 = vsel %vm479, %v1507, 0
      %v1514 = vsel %vm479, %v1508, 0
      %1516 = vmatprep.subr.mxu0 %v1514
      %1517 = vmatpush1.msra.mxu0 %v1512
      %1518 = vmatprep.subr.mxu0 0.0
      %1519 = vmatpush1.msra.mxu0 0.0
      %1520 = vmatprep.subr.mxu0 0.0
      %1521 = vmatpush1.msra.mxu0 0.0
      %1522 = vmatprep.subr.mxu0 0.0
      %1523 = vmatpush1.msra.mxu0 0.0
      %1524 = vmatprep.subr.mxu0 0.0
      %1525 = vmatpush1.msra.mxu0 0.0
      %1526 = vmatprep.subr.mxu0 0.0
      %1527 = vmatpush1.msra.mxu0 0.0
      %1528 = vmatprep.subr.mxu0 0.0
      %1529 = vmatpush1.msra.mxu0 0.0
      %1530 = vmatprep.subr.mxu0 0.0
      %1531 = vmatpush1.msra.mxu0 0.0
      %1532 = vmatprep.subr.mxu0 0.0
      %1533 = vmatpush1.msra.mxu0 0.0
      %1534 = vmatprep.subr.mxu0 0.0
      %1535 = vmatpush1.msra.mxu0 0.0
      %1536 = vmatprep.subr.mxu0 0.0
      %1537 = vmatpush1.msra.mxu0 0.0
      %1538 = vmatprep.subr.mxu0 0.0
      %1539 = vmatpush1.msra.mxu0 0.0
      %1540 = vmatprep.subr.mxu0 0.0
      %1541 = vmatpush1.msra.mxu0 0.0
      %1542 = vmatprep.subr.mxu0 0.0
      %1543 = vmatpush1.msra.mxu0 0.0
      %1544 = vmatprep.subr.mxu0 0.0
      %1545 = vmatpush1.msra.mxu0 0.0
      %1546 = vmatprep.subr.mxu0 0.0
      %1547 = vmatpush1.msra.mxu0 0.0
      %1548 = vmatprep.subr.mxu0 0.0
      %1549 = vmatpush1.msra.mxu0 0.0
      %1550 = vmatprep.subr.mxu0 0.0
      %1551 = vmatpush1.msra.mxu0 0.0
      %1552 = vmatprep.subr.mxu0 0.0
      %1553 = vmatpush1.msra.mxu0 0.0
      %1554 = vmatprep.subr.mxu0 0.0
      %1555 = vmatpush1.msra.mxu0 0.0
      %1556 = vmatprep.subr.mxu0 0.0
      %1557 = vmatpush1.msra.mxu0 0.0
      %1558 = vmatprep.subr.mxu0 0.0
      %1559 = vmatpush1.msra.mxu0 0.0
      %1560 = vmatprep.subr.mxu0 0.0
      %1561 = vmatpush1.msra.mxu0 0.0
      %1562 = vmatprep.subr.mxu0 0.0
      %1563 = vmatpush1.msra.mxu0 0.0
      %1564 = vmatprep.subr.mxu0 0.0
      %1565 = vmatpush1.msra.mxu0 0.0
      %1566 = vmatprep.subr.mxu0 0.0
      %1567 = vmatpush1.msra.mxu0 0.0
      %1568 = vmatprep.subr.mxu0 0.0
      %1569 = vmatpush1.msra.mxu0 0.0
      %1570 = vmatprep.subr.mxu0 0.0
      %1571 = vmatpush1.msra.mxu0 0.0
      %1572 = vmatprep.subr.mxu0 0.0
      %1573 = vmatpush1.msra.mxu0 0.0
      %1574 = vmatprep.subr.mxu0 0.0
      %1575 = vmatpush1.msra.mxu0 0.0
      %1576 = vmatprep.subr.mxu0 0.0
      %1577 = vmatpush1.msra.mxu0 0.0
      %1578 = vmatprep.subr.mxu0 0.0
      %1579 = vmatpush1.msra.mxu0 0.0
      %1580 = vmatprep.mubr.f32.mxu0 0.0
      %1581 = vmatmul.mubr.f32.gmra.mrb[0].mxu0 %v1510
      %v1582 = vpop.f32.mrb[0].mxu0
      %v1583 = vadd.f32 0.0, %v1582
      %v1584 = vpop.f32.mrb[0].mxu0
      %v1585 = vadd.f32 0.0, %v1584
      %1586 = vdwg.mxu0
      %v1587 = vadd.f32 %v1492, %v1583
      %v1588 = vadd.f32 %v1493, %v1585
      %v1589 = vadd.f32 %v1039, %v1587
      %v1590 = vadd.f32 %v1040, %v1588
      %v1591 = vld [vmem:[#allocation2] sm:$0xff]
      %v1592 = vld [vmem:[#allocation2 + $0x8] sm:$0xf]
      %s1593 = scalar_lea.vmem %s3, 8
      %v1594 = vld [vmem:[%s1593] sm:$0xf]
      %v1595 = vld [vmem:[#allocation3] sm:$0xff]
      %v1596 = vld [vmem:[#allocation3 + $0x8] sm:$0xf]
      %s1597 = scalar_lea.vmem %s4, 8
      %v1598 = vld [vmem:[%s1597] sm:$0xf]
      %v1601 = vcombine.high %v1595, %v1595
      %1602 = vrot.lane.b32.xlu0 %v1595, 15
      %v1603 = vpop.permute.xlu0 %1602
      %1604 = vrot.lane.b32.xlu0 %v1601, 15
      %v1605 = vpop.permute.xlu0 %1604
      %1606 = vrot.lane.b32.xlu0 %v1596, 15
      %v1607 = vpop.permute.xlu0 %1606
      %vm1608 = vcmask 121856
      %v1609 = vsel %vm1608, %v1603, %v1605
      %v1610 = vsel %vm1608, %v1605, %v1607
      %v1612 = vsel %vm475, %v1598, 0
      %v1614 = vsel %vm479, %v1609, 0
      %v1616 = vsel %vm479, %v1610, 0
      %1618 = vmatprep.subr.mxu0 %v1616
      %1619 = vmatpush1.msra.mxu0 %v1614
      %1620 = vmatprep.subr.mxu0 0.0
      %1621 = vmatpush1.msra.mxu0 0.0
      %1622 = vmatprep.subr.mxu0 0.0
      %1623 = vmatpush1.msra.mxu0 0.0
      %1624 = vmatprep.subr.mxu0 0.0
      %1625 = vmatpush1.msra.mxu0 0.0
      %1626 = vmatprep.subr.mxu0 0.0
      %1627 = vmatpush1.msra.mxu0 0.0
      %1628 = vmatprep.subr.mxu0 0.0
      %1629 = vmatpush1.msra.mxu0 0.0
      %1630 = vmatprep.subr.mxu0 0.0
      %1631 = vmatpush1.msra.mxu0 0.0
      %1632 = vmatprep.subr.mxu0 0.0
      %1633 = vmatpush1.msra.mxu0 0.0
      %1634 = vmatprep.subr.mxu0 0.0
      %1635 = vmatpush1.msra.mxu0 0.0
      %1636 = vmatprep.subr.mxu0 0.0
      %1637 = vmatpush1.msra.mxu0 0.0
      %1638 = vmatprep.subr.mxu0 0.0
      %1639 = vmatpush1.msra.mxu0 0.0
      %1640 = vmatprep.subr.mxu0 0.0
      %1641 = vmatpush1.msra.mxu0 0.0
      %1642 = vmatprep.subr.mxu0 0.0
      %1643 = vmatpush1.msra.mxu0 0.0
      %1644 = vmatprep.subr.mxu0 0.0
      %1645 = vmatpush1.msra.mxu0 0.0
      %1646 = vmatprep.subr.mxu0 0.0
      %1647 = vmatpush1.msra.mxu0 0.0
      %1648 = vmatprep.subr.mxu0 0.0
      %1649 = vmatpush1.msra.mxu0 0.0
      %1650 = vmatprep.subr.mxu0 0.0
      %1651 = vmatpush1.msra.mxu0 0.0
      %1652 = vmatprep.subr.mxu0 0.0
      %1653 = vmatpush1.msra.mxu0 0.0
      %1654 = vmatprep.subr.mxu0 0.0
      %1655 = vmatpush1.msra.mxu0 0.0
      %1656 = vmatprep.subr.mxu0 0.0
      %1657 = vmatpush1.msra.mxu0 0.0
      %1658 = vmatprep.subr.mxu0 0.0
      %1659 = vmatpush1.msra.mxu0 0.0
      %1660 = vmatprep.subr.mxu0 0.0
      %1661 = vmatpush1.msra.mxu0 0.0
      %1662 = vmatprep.subr.mxu0 0.0
      %1663 = vmatpush1.msra.mxu0 0.0
      %1664 = vmatprep.subr.mxu0 0.0
      %1665 = vmatpush1.msra.mxu0 0.0
      %1666 = vmatprep.subr.mxu0 0.0
      %1667 = vmatpush1.msra.mxu0 0.0
      %1668 = vmatprep.subr.mxu0 0.0
      %1669 = vmatpush1.msra.mxu0 0.0
      %1670 = vmatprep.subr.mxu0 0.0
      %1671 = vmatpush1.msra.mxu0 0.0
      %1672 = vmatprep.subr.mxu0 0.0
      %1673 = vmatpush1.msra.mxu0 0.0
      %1674 = vmatprep.subr.mxu0 0.0
      %1675 = vmatpush1.msra.mxu0 0.0
      %1676 = vmatprep.subr.mxu0 0.0
      %1677 = vmatpush1.msra.mxu0 0.0
      %1678 = vmatprep.subr.mxu0 0.0
      %1679 = vmatpush1.msra.mxu0 0.0
      %1680 = vmatprep.subr.mxu0 0.0
      %1681 = vmatpush1.msra.mxu0 0.0
      %1682 = vmatprep.mubr.f32.mxu0 0.0
      %1683 = vmatmul.mubr.f32.gmra.mrb[0].mxu0 %v1612
      %v1684 = vpop.f32.mrb[0].mxu0
      %v1685 = vadd.f32 0.0, %v1684
      %v1686 = vpop.f32.mrb[0].mxu0
      %v1687 = vadd.f32 0.0, %v1686
      %1688 = vdwg.mxu0
      %v1691 = vcombine.high %v1591, %v1591
      %1692 = vrot.lane.b32.xlu0 %v1591, 15
      %v1693 = vpop.permute.xlu0 %1692
      %1694 = vrot.lane.b32.xlu0 %v1691, 15
      %v1695 = vpop.permute.xlu0 %1694
      %1696 = vrot.lane.b32.xlu0 %v1592, 15
      %v1697 = vpop.permute.xlu0 %1696
      %v1698 = vsel %vm1608, %v1693, %v1695
      %v1699 = vsel %vm1608, %v1695, %v1697
      %v1701 = vsel %vm475, %v1594, 0
      %v1703 = vsel %vm479, %v1698, 0
      %v1705 = vsel %vm479, %v1699, 0
      %1707 = vmatprep.subr.mxu0 %v1705
      %1708 = vmatpush1.msra.mxu0 %v1703
      %1709 = vmatprep.subr.mxu0 0.0
      %1710 = vmatpush1.msra.mxu0 0.0
      %1711 = vmatprep.subr.mxu0 0.0
      %1712 = vmatpush1.msra.mxu0 0.0
      %1713 = vmatprep.subr.mxu0 0.0
      %1714 = vmatpush1.msra.mxu0 0.0
      %1715 = vmatprep.subr.mxu0 0.0
      %1716 = vmatpush1.msra.mxu0 0.0
      %1717 = vmatprep.subr.mxu0 0.0
      %1718 = vmatpush1.msra.mxu0 0.0
      %1719 = vmatprep.subr.mxu0 0.0
      %1720 = vmatpush1.msra.mxu0 0.0
      %1721 = vmatprep.subr.mxu0 0.0
      %1722 = vmatpush1.msra.mxu0 0.0
      %1723 = vmatprep.subr.mxu0 0.0
      %1724 = vmatpush1.msra.mxu0 0.0
      %1725 = vmatprep.subr.mxu0 0.0
      %1726 = vmatpush1.msra.mxu0 0.0
      %1727 = vmatprep.subr.mxu0 0.0
      %1728 = vmatpush1.msra.mxu0 0.0
      %1729 = vmatprep.subr.mxu0 0.0
      %1730 = vmatpush1.msra.mxu0 0.0
      %1731 = vmatprep.subr.mxu0 0.0
      %1732 = vmatpush1.msra.mxu0 0.0
      %1733 = vmatprep.subr.mxu0 0.0
      %1734 = vmatpush1.msra.mxu0 0.0
      %1735 = vmatprep.subr.mxu0 0.0
      %1736 = vmatpush1.msra.mxu0 0.0
      %1737 = vmatprep.subr.mxu0 0.0
      %1738 = vmatpush1.msra.mxu0 0.0
      %1739 = vmatprep.subr.mxu0 0.0
      %1740 = vmatpush1.msra.mxu0 0.0
      %1741 = vmatprep.subr.mxu0 0.0
      %1742 = vmatpush1.msra.mxu0 0.0
      %1743 = vmatprep.subr.mxu0 0.0
      %1744 = vmatpush1.msra.mxu0 0.0
      %1745 = vmatprep.subr.mxu0 0.0
      %1746 = vmatpush1.msra.mxu0 0.0
      %1747 = vmatprep.subr.mxu0 0.0
      %1748 = vmatpush1.msra.mxu0 0.0
      %1749 = vmatprep.subr.mxu0 0.0
      %1750 = vmatpush1.msra.mxu0 0.0
      %1751 = vmatprep.subr.mxu0 0.0
      %1752 = vmatpush1.msra.mxu0 0.0
      %1753 = vmatprep.subr.mxu0 0.0
      %1754 = vmatpush1.msra.mxu0 0.0
      %1755 = vmatprep.subr.mxu0 0.0
      %1756 = vmatpush1.msra.mxu0 0.0
      %1757 = vmatprep.subr.mxu0 0.0
      %1758 = vmatpush1.msra.mxu0 0.0
      %1759 = vmatprep.subr.mxu0 0.0
      %1760 = vmatpush1.msra.mxu0 0.0
      %1761 = vmatprep.subr.mxu0 0.0
      %1762 = vmatpush1.msra.mxu0 0.0
      %1763 = vmatprep.subr.mxu0 0.0
      %1764 = vmatpush1.msra.mxu0 0.0
      %1765 = vmatprep.subr.mxu0 0.0
      %1766 = vmatpush1.msra.mxu0 0.0
      %1767 = vmatprep.subr.mxu0 0.0
      %1768 = vmatpush1.msra.mxu0 0.0
      %1769 = vmatprep.subr.mxu0 0.0
      %1770 = vmatpush1.msra.mxu0 0.0
      %1771 = vmatprep.mubr.f32.mxu0 0.0
      %1772 = vmatmul.mubr.f32.gmra.mrb[0].mxu0 %v1701
      %v1773 = vpop.f32.mrb[0].mxu0
      %v1774 = vadd.f32 %v1685, %v1773
      %v1775 = vpop.f32.mrb[0].mxu0
      %v1776 = vadd.f32 %v1687, %v1775
      %1777 = vdwg.mxu0
      %v1778 = vld [vmem:[#allocation2 + $0x4] sm:$0xff]
      %v1779 = vld [vmem:[#allocation2 + $0xc] sm:$0xf]
      %s1780 = scalar_lea.vmem %s3, 20
      %v1781 = vld [vmem:[%s1780] sm:$0xf]
      %v1784 = vcombine.high %v1778, %v1778
      %1785 = vrot.lane.b32.xlu0 %v1778, 127
      %v1786 = vpop.permute.xlu0 %1785
      %1787 = vrot.lane.b32.xlu0 %v1784, 127
      %v1788 = vpop.permute.xlu0 %1787
      %1789 = vrot.lane.b32.xlu0 %v1779, 127
      %v1790 = vpop.permute.xlu0 %1789
      %vm1791 = vcmask 1039360
      %v1792 = vsel %vm1791, %v1786, %v1788
      %v1793 = vsel %vm1791, %v1788, %v1790
      %v1795 = vsel %vm475, %v1781, 0
      %v1797 = vsel %vm479, %v1792, 0
      %v1799 = vsel %vm479, %v1793, 0
      %1801 = vmatprep.subr.mxu0 %v1799
      %1802 = vmatpush1.msra.mxu0 %v1797
      %1803 = vmatprep.subr.mxu0 0.0
      %1804 = vmatpush1.msra.mxu0 0.0
      %1805 = vmatprep.subr.mxu0 0.0
      %1806 = vmatpush1.msra.mxu0 0.0
      %1807 = vmatprep.subr.mxu0 0.0
      %1808 = vmatpush1.msra.mxu0 0.0
      %1809 = vmatprep.subr.mxu0 0.0
      %1810 = vmatpush1.msra.mxu0 0.0
      %1811 = vmatprep.subr.mxu0 0.0
      %1812 = vmatpush1.msra.mxu0 0.0
      %1813 = vmatprep.subr.mxu0 0.0
      %1814 = vmatpush1.msra.mxu0 0.0
      %1815 = vmatprep.subr.mxu0 0.0
      %1816 = vmatpush1.msra.mxu0 0.0
      %1817 = vmatprep.subr.mxu0 0.0
      %1818 = vmatpush1.msra.mxu0 0.0
      %1819 = vmatprep.subr.mxu0 0.0
      %1820 = vmatpush1.msra.mxu0 0.0
      %1821 = vmatprep.subr.mxu0 0.0
      %1822 = vmatpush1.msra.mxu0 0.0
      %1823 = vmatprep.subr.mxu0 0.0
      %1824 = vmatpush1.msra.mxu0 0.0
      %1825 = vmatprep.subr.mxu0 0.0
      %1826 = vmatpush1.msra.mxu0 0.0
      %1827 = vmatprep.subr.mxu0 0.0
      %1828 = vmatpush1.msra.mxu0 0.0
      %1829 = vmatprep.subr.mxu0 0.0
      %1830 = vmatpush1.msra.mxu0 0.0
      %1831 = vmatprep.subr.mxu0 0.0
      %1832 = vmatpush1.msra.mxu0 0.0
      %1833 = vmatprep.subr.mxu0 0.0
      %1834 = vmatpush1.msra.mxu0 0.0
      %1835 = vmatprep.subr.mxu0 0.0
      %1836 = vmatpush1.msra.mxu0 0.0
      %1837 = vmatprep.subr.mxu0 0.0
      %1838 = vmatpush1.msra.mxu0 0.0
      %1839 = vmatprep.subr.mxu0 0.0
      %1840 = vmatpush1.msra.mxu0 0.0
      %1841 = vmatprep.subr.mxu0 0.0
      %1842 = vmatpush1.msra.mxu0 0.0
      %1843 = vmatprep.subr.mxu0 0.0
      %1844 = vmatpush1.msra.mxu0 0.0
      %1845 = vmatprep.subr.mxu0 0.0
      %1846 = vmatpush1.msra.mxu0 0.0
      %1847 = vmatprep.subr.mxu0 0.0
      %1848 = vmatpush1.msra.mxu0 0.0
      %1849 = vmatprep.subr.mxu0 0.0
      %1850 = vmatpush1.msra.mxu0 0.0
      %1851 = vmatprep.subr.mxu0 0.0
      %1852 = vmatpush1.msra.mxu0 0.0
      %1853 = vmatprep.subr.mxu0 0.0
      %1854 = vmatpush1.msra.mxu0 0.0
      %1855 = vmatprep.subr.mxu0 0.0
      %1856 = vmatpush1.msra.mxu0 0.0
      %1857 = vmatprep.subr.mxu0 0.0
      %1858 = vmatpush1.msra.mxu0 0.0
      %1859 = vmatprep.subr.mxu0 0.0
      %1860 = vmatpush1.msra.mxu0 0.0
      %1861 = vmatprep.subr.mxu0 0.0
      %1862 = vmatpush1.msra.mxu0 0.0
      %1863 = vmatprep.subr.mxu0 0.0
      %1864 = vmatpush1.msra.mxu0 0.0
      %1865 = vmatprep.mubr.f32.mxu0 0.0
      %1866 = vmatmul.mubr.f32.gmra.mrb[0].mxu0 %v1795
      %v1867 = vpop.f32.mrb[0].mxu0
      %v1868 = vadd.f32 0.0, %v1867
      %v1869 = vpop.f32.mrb[0].mxu0
      %v1870 = vadd.f32 0.0, %v1869
      %1871 = vdwg.mxu0
      %v1872 = vadd.f32 %v1774, %v1868
      %v1873 = vadd.f32 %v1776, %v1870
      %v1874 = vld [vmem:[#allocation3 + $0x4] sm:$0xff]
      %v1875 = vld [vmem:[#allocation3 + $0xc] sm:$0xf]
      %s1876 = scalar_lea.vmem %s4, 20
      %v1877 = vld [vmem:[%s1876] sm:$0xf]
      %v1880 = vcombine.high %v1874, %v1874
      %1881 = vrot.lane.b32.xlu0 %v1874, 127
      %v1882 = vpop.permute.xlu0 %1881
      %1883 = vrot.lane.b32.xlu0 %v1880, 127
      %v1884 = vpop.permute.xlu0 %1883
      %1885 = vrot.lane.b32.xlu0 %v1875, 127
      %v1886 = vpop.permute.xlu0 %1885
      %v1887 = vsel %vm1791, %v1882, %v1884
      %v1888 = vsel %vm1791, %v1884, %v1886
      %v1890 = vsel %vm475, %v1877, 0
      %v1892 = vsel %vm479, %v1887, 0
      %v1894 = vsel %vm479, %v1888, 0
      %1896 = vmatprep.subr.mxu0 %v1894
      %1897 = vmatpush1.msra.mxu0 %v1892
      %1898 = vmatprep.subr.mxu0 0.0
      %1899 = vmatpush1.msra.mxu0 0.0
      %1900 = vmatprep.subr.mxu0 0.0
      %1901 = vmatpush1.msra.mxu0 0.0
      %1902 = vmatprep.subr.mxu0 0.0
      %1903 = vmatpush1.msra.mxu0 0.0
      %1904 = vmatprep.subr.mxu0 0.0
      %1905 = vmatpush1.msra.mxu0 0.0
      %1906 = vmatprep.subr.mxu0 0.0
      %1907 = vmatpush1.msra.mxu0 0.0
      %1908 = vmatprep.subr.mxu0 0.0
      %1909 = vmatpush1.msra.mxu0 0.0
      %1910 = vmatprep.subr.mxu0 0.0
      %1911 = vmatpush1.msra.mxu0 0.0
      %1912 = vmatprep.subr.mxu0 0.0
      %1913 = vmatpush1.msra.mxu0 0.0
      %1914 = vmatprep.subr.mxu0 0.0
      %1915 = vmatpush1.msra.mxu0 0.0
      %1916 = vmatprep.subr.mxu0 0.0
      %1917 = vmatpush1.msra.mxu0 0.0
      %1918 = vmatprep.subr.mxu0 0.0
      %1919 = vmatpush1.msra.mxu0 0.0
      %1920 = vmatprep.subr.mxu0 0.0
      %1921 = vmatpush1.msra.mxu0 0.0
      %1922 = vmatprep.subr.mxu0 0.0
      %1923 = vmatpush1.msra.mxu0 0.0
      %1924 = vmatprep.subr.mxu0 0.0
      %1925 = vmatpush1.msra.mxu0 0.0
      %1926 = vmatprep.subr.mxu0 0.0
      %1927 = vmatpush1.msra.mxu0 0.0
      %1928 = vmatprep.subr.mxu0 0.0
      %1929 = vmatpush1.msra.mxu0 0.0
      %1930 = vmatprep.subr.mxu0 0.0
      %1931 = vmatpush1.msra.mxu0 0.0
      %1932 = vmatprep.subr.mxu0 0.0
      %1933 = vmatpush1.msra.mxu0 0.0
      %1934 = vmatprep.subr.mxu0 0.0
      %1935 = vmatpush1.msra.mxu0 0.0
      %1936 = vmatprep.subr.mxu0 0.0
      %1937 = vmatpush1.msra.mxu0 0.0
      %1938 = vmatprep.subr.mxu0 0.0
      %1939 = vmatpush1.msra.mxu0 0.0
      %1940 = vmatprep.subr.mxu0 0.0
      %1941 = vmatpush1.msra.mxu0 0.0
      %1942 = vmatprep.subr.mxu0 0.0
      %1943 = vmatpush1.msra.mxu0 0.0
      %1944 = vmatprep.subr.mxu0 0.0
      %1945 = vmatpush1.msra.mxu0 0.0
      %1946 = vmatprep.subr.mxu0 0.0
      %1947 = vmatpush1.msra.mxu0 0.0
      %1948 = vmatprep.subr.mxu0 0.0
      %1949 = vmatpush1.msra.mxu0 0.0
      %1950 = vmatprep.subr.mxu0 0.0
      %1951 = vmatpush1.msra.mxu0 0.0
      %1952 = vmatprep.subr.mxu0 0.0
      %1953 = vmatpush1.msra.mxu0 0.0
      %1954 = vmatprep.subr.mxu0 0.0
      %1955 = vmatpush1.msra.mxu0 0.0
      %1956 = vmatprep.subr.mxu0 0.0
      %1957 = vmatpush1.msra.mxu0 0.0
      %1958 = vmatprep.subr.mxu0 0.0
      %1959 = vmatpush1.msra.mxu0 0.0
      %1960 = vmatprep.mubr.f32.mxu0 0.0
      %1961 = vmatmul.mubr.f32.gmra.mrb[0].mxu0 %v1890
      %v1962 = vpop.f32.mrb[0].mxu0
      %v1963 = vadd.f32 0.0, %v1962
      %v1964 = vpop.f32.mrb[0].mxu0
      %v1965 = vadd.f32 0.0, %v1964
      %1966 = vdwg.mxu0
      %v1967 = vadd.f32 %v1872, %v1963
      %v1968 = vadd.f32 %v1873, %v1965
      %v1969 = vld [vmem:[#allocation2 + $0x4] sm:$0xff]
      %v1970 = vld [vmem:[#allocation2 + $0xc] sm:$0xf]
      %s1971 = scalar_lea.vmem %s3, 32
      %v1972 = vld [vmem:[%s1971] sm:$0xf]
      %v1975 = vcombine.high %v1969, %v1969
      %1976 = vrot.lane.b32.xlu0 %v1969, 111
      %v1977 = vpop.permute.xlu0 %1976
      %1978 = vrot.lane.b32.xlu0 %v1975, 111
      %v1979 = vpop.permute.xlu0 %1978
      %1980 = vrot.lane.b32.xlu0 %v1970, 111
      %v1981 = vpop.permute.xlu0 %1980
      %vm1982 = vcmask 908288
      %v1983 = vsel %vm1982, %v1977, %v1979
      %v1984 = vsel %vm1982, %v1979, %v1981
      %v1986 = vsel %vm475, %v1972, 0
      %v1988 = vsel %vm479, %v1983, 0
      %v1990 = vsel %vm479, %v1984, 0
      %1992 = vmatprep.subr.mxu0 %v1990
      %1993 = vmatpush1.msra.mxu0 %v1988
      %1994 = vmatprep.subr.mxu0 0.0
      %1995 = vmatpush1.msra.mxu0 0.0
      %1996 = vmatprep.subr.mxu0 0.0
      %1997 = vmatpush1.msra.mxu0 0.0
      %1998 = vmatprep.subr.mxu0 0.0
      %1999 = vmatpush1.msra.mxu0 0.0
      %2000 = vmatprep.subr.mxu0 0.0
      %2001 = vmatpush1.msra.mxu0 0.0
      %2002 = vmatprep.subr.mxu0 0.0
      %2003 = vmatpush1.msra.mxu0 0.0
      %2004 = vmatprep.subr.mxu0 0.0
      %2005 = vmatpush1.msra.mxu0 0.0
      %2006 = vmatprep.subr.mxu0 0.0
      %2007 = vmatpush1.msra.mxu0 0.0
      %2008 = vmatprep.subr.mxu0 0.0
      %2009 = vmatpush1.msra.mxu0 0.0
      %2010 = vmatprep.subr.mxu0 0.0
      %2011 = vmatpush1.msra.mxu0 0.0
      %2012 = vmatprep.subr.mxu0 0.0
      %2013 = vmatpush1.msra.mxu0 0.0
      %2014 = vmatprep.subr.mxu0 0.0
      %2015 = vmatpush1.msra.mxu0 0.0
      %2016 = vmatprep.subr.mxu0 0.0
      %2017 = vmatpush1.msra.mxu0 0.0
      %2018 = vmatprep.subr.mxu0 0.0
      %2019 = vmatpush1.msra.mxu0 0.0
      %2020 = vmatprep.subr.mxu0 0.0
      %2021 = vmatpush1.msra.mxu0 0.0
      %2022 = vmatprep.subr.mxu0 0.0
      %2023 = vmatpush1.msra.mxu0 0.0
      %2024 = vmatprep.subr.mxu0 0.0
      %2025 = vmatpush1.msra.mxu0 0.0
      %2026 = vmatprep.subr.mxu0 0.0
      %2027 = vmatpush1.msra.mxu0 0.0
      %2028 = vmatprep.subr.mxu0 0.0
      %2029 = vmatpush1.msra.mxu0 0.0
      %2030 = vmatprep.subr.mxu0 0.0
      %2031 = vmatpush1.msra.mxu0 0.0
      %2032 = vmatprep.subr.mxu0 0.0
      %2033 = vmatpush1.msra.mxu0 0.0
      %2034 = vmatprep.subr.mxu0 0.0
      %2035 = vmatpush1.msra.mxu0 0.0
      %2036 = vmatprep.subr.mxu0 0.0
      %2037 = vmatpush1.msra.mxu0 0.0
      %2038 = vmatprep.subr.mxu0 0.0
      %2039 = vmatpush1.msra.mxu0 0.0
      %2040 = vmatprep.subr.mxu0 0.0
      %2041 = vmatpush1.msra.mxu0 0.0
      %2042 = vmatprep.subr.mxu0 0.0
      %2043 = vmatpush1.msra.mxu0 0.0
      %2044 = vmatprep.subr.mxu0 0.0
      %2045 = vmatpush1.msra.mxu0 0.0
      %2046 = vmatprep.subr.mxu0 0.0
      %2047 = vmatpush1.msra.mxu0 0.0
      %2048 = vmatprep.subr.mxu0 0.0
      %2049 = vmatpush1.msra.mxu0 0.0
      %2050 = vmatprep.subr.mxu0 0.0
      %2051 = vmatpush1.msra.mxu0 0.0
      %2052 = vmatprep.subr.mxu0 0.0
      %2053 = vmatpush1.msra.mxu0 0.0
      %2054 = vmatprep.subr.mxu0 0.0
      %2055 = vmatpush1.msra.mxu0 0.0
      %2056 = vmatprep.mubr.f32.mxu0 0.0
      %2057 = vmatmul.mubr.f32.gmra.mrb[0].mxu0 %v1986
      %v2058 = vpop.f32.mrb[0].mxu0
      %v2059 = vadd.f32 0.0, %v2058
      %v2060 = vpop.f32.mrb[0].mxu0
      %v2061 = vadd.f32 0.0, %v2060
      %2062 = vdwg.mxu0
      %v2063 = vadd.f32 %v1967, %v2059
      %v2064 = vadd.f32 %v1968, %v2061
      %v2065 = vld [vmem:[#allocation3 + $0x4] sm:$0xff]
      %v2066 = vld [vmem:[#allocation3 + $0xc] sm:$0xf]
      %s2067 = scalar_lea.vmem %s4, 32
      %v2068 = vld [vmem:[%s2067] sm:$0xf]
      %v2071 = vcombine.high %v2065, %v2065
      %2072 = vrot.lane.b32.xlu0 %v2065, 111
      %v2073 = vpop.permute.xlu0 %2072
      %2074 = vrot.lane.b32.xlu0 %v2071, 111
      %v2075 = vpop.permute.xlu0 %2074
      %2076 = vrot.lane.b32.xlu0 %v2066, 111
      %v2077 = vpop.permute.xlu0 %2076
      %v2078 = vsel %vm1982, %v2073, %v2075
      %v2079 = vsel %vm1982, %v2075, %v2077
      %v2081 = vsel %vm475, %v2068, 0
      %v2083 = vsel %vm479, %v2078, 0
      %v2085 = vsel %vm479, %v2079, 0
      %2087 = vmatprep.subr.mxu0 %v2085
      %2088 = vmatpush1.msra.mxu0 %v2083
      %2089 = vmatprep.subr.mxu0 0.0
      %2090 = vmatpush1.msra.mxu0 0.0
      %2091 = vmatprep.subr.mxu0 0.0
      %2092 = vmatpush1.msra.mxu0 0.0
      %2093 = vmatprep.subr.mxu0 0.0
      %2094 = vmatpush1.msra.mxu0 0.0
      %2095 = vmatprep.subr.mxu0 0.0
      %2096 = vmatpush1.msra.mxu0 0.0
      %2097 = vmatprep.subr.mxu0 0.0
      %2098 = vmatpush1.msra.mxu0 0.0
      %2099 = vmatprep.subr.mxu0 0.0
      %2100 = vmatpush1.msra.mxu0 0.0
      %2101 = vmatprep.subr.mxu0 0.0
      %2102 = vmatpush1.msra.mxu0 0.0
      %2103 = vmatprep.subr.mxu0 0.0
      %2104 = vmatpush1.msra.mxu0 0.0
      %2105 = vmatprep.subr.mxu0 0.0
      %2106 = vmatpush1.msra.mxu0 0.0
      %2107 = vmatprep.subr.mxu0 0.0
      %2108 = vmatpush1.msra.mxu0 0.0
      %2109 = vmatprep.subr.mxu0 0.0
      %2110 = vmatpush1.msra.mxu0 0.0
      %2111 = vmatprep.subr.mxu0 0.0
      %2112 = vmatpush1.msra.mxu0 0.0
      %2113 = vmatprep.subr.mxu0 0.0
      %2114 = vmatpush1.msra.mxu0 0.0
      %2115 = vmatprep.subr.mxu0 0.0
      %2116 = vmatpush1.msra.mxu0 0.0
      %2117 = vmatprep.subr.mxu0 0.0
      %2118 = vmatpush1.msra.mxu0 0.0
      %2119 = vmatprep.subr.mxu0 0.0
      %2120 = vmatpush1.msra.mxu0 0.0
      %2121 = vmatprep.subr.mxu0 0.0
      %2122 = vmatpush1.msra.mxu0 0.0
      %2123 = vmatprep.subr.mxu0 0.0
      %2124 = vmatpush1.msra.mxu0 0.0
      %2125 = vmatprep.subr.mxu0 0.0
      %2126 = vmatpush1.msra.mxu0 0.0
      %2127 = vmatprep.subr.mxu0 0.0
      %2128 = vmatpush1.msra.mxu0 0.0
      %2129 = vmatprep.subr.mxu0 0.0
      %2130 = vmatpush1.msra.mxu0 0.0
      %2131 = vmatprep.subr.mxu0 0.0
      %2132 = vmatpush1.msra.mxu0 0.0
      %2133 = vmatprep.subr.mxu0 0.0
      %2134 = vmatpush1.msra.mxu0 0.0
      %2135 = vmatprep.subr.mxu0 0.0
      %2136 = vmatpush1.msra.mxu0 0.0
      %2137 = vmatprep.subr.mxu0 0.0
      %2138 = vmatpush1.msra.mxu0 0.0
      %2139 = vmatprep.subr.mxu0 0.0
      %2140 = vmatpush1.msra.mxu0 0.0
      %2141 = vmatprep.subr.mxu0 0.0
      %2142 = vmatpush1.msra.mxu0 0.0
      %2143 = vmatprep.subr.mxu0 0.0
      %2144 = vmatpush1.msra.mxu0 0.0
      %2145 = vmatprep.subr.mxu0 0.0
      %2146 = vmatpush1.msra.mxu0 0.0
      %2147 = vmatprep.subr.mxu0 0.0
      %2148 = vmatpush1.msra.mxu0 0.0
      %2149 = vmatprep.subr.mxu0 0.0
      %2150 = vmatpush1.msra.mxu0 0.0
      %2151 = vmatprep.mubr.f32.mxu0 0.0
      %2152 = vmatmul.mubr.f32.gmra.mrb[0].mxu0 %v2081
      %v2153 = vpop.f32.mrb[0].mxu0
      %v2154 = vadd.f32 0.0, %v2153
      %v2155 = vpop.f32.mrb[0].mxu0
      %v2156 = vadd.f32 0.0, %v2155
      %2157 = vdwg.mxu0
      %v2158 = vadd.f32 %v2063, %v2154
      %v2159 = vadd.f32 %v2064, %v2156
      %v2161 = vlaneseq
      %v2162 = vshrl.u32 %v2161, 7
      %v2163 = vsub.s32 0, %v2162
      %v2164 = vrot.slane %v455, %v2163
      %v2165 = vlaneseq
      %v2166 = vshrl.u32 %v2165, 7
      %v2167 = vsub.s32 1, %v2166
      %v2168 = vrot.slane %v455, %v2167
      %v2171 = vmul.f32 %v2158, %v2164
      %v2172 = vmul.f32 %v2159, %v2168
      %v2173 = vadd.f32 %v1589, %v2171
      %v2174 = vadd.f32 %v1590, %v2172
      %2176 = vset.pattern.permute.xlu0 0
      %2177 = vperm.xlu0 %2176, %v456
      %v2178 = vpop.permute.xlu0 %2177
      %v2180 = vadd.f32 %v2173, %v2178
      %v2181 = vadd.f32 %v2174, %v2178
      %v2182 = vmax.f32 %v2180, 0.0
      %v2183 = vmax.f32 %v2181, 0.0
      %2184 = vst [vmem:[#allocation4] sm:$0xf] 0.0
      %2185 = vst [vmem:[#allocation4 + $0xc] sm:$0xf] 0.0
      %v2188 = vcombine.low %v2182, %v2183
      %2190 = vst [vmem:[#allocation4 + $0x4] sm:$0xff] %v2188
      %v2191 = vld [vmem:[%s7] sm:$0xf]
      %v2192 = vld [vmem:[#allocation4] sm:$0xff]
      %v2193 = vld [vmem:[#allocation4 + $0x8] sm:$0xf]
      %v2194 = vld [vmem:[%s6] sm:$0xf]
      %s2195 = scalar_lea.vmem %s6, 12
      %v2196 = vld [vmem:[%s2195] sm:$0xf]
      %v2199 = vcombine.high %v2192, %v2192
      %2200 = vrot.lane.b32.xlu0 %v2192, 1
      %v2201 = vpop.permute.xlu0 %2200
      %2202 = vrot.lane.b32.xlu0 %v2199, 1
      %v2203 = vpop.permute.xlu0 %2202
      %2204 = vrot.lane.b32.xlu0 %v2193, 1
      %v2205 = vpop.permute.xlu0 %2204
      %v2206 = vsel %vm657, %v2201, %v2203
      %v2207 = vsel %vm657, %v2203, %v2205
      %v2209 = vsel %vm475, %v2196, 0
      %v2211 = vsel %vm479, %v2206, 0
      %v2213 = vsel %vm479, %v2207, 0
      %2215 = vmatprep.subr.mxu0 %v2213
      %2216 = vmatpush1.msra.mxu0 %v2211
      %2217 = vmatprep.subr.mxu0 0.0
      %2218 = vmatpush1.msra.mxu0 0.0
      %2219 = vmatprep.subr.mxu0 0.0
      %2220 = vmatpush1.msra.mxu0 0.0
      %2221 = vmatprep.subr.mxu0 0.0
      %2222 = vmatpush1.msra.mxu0 0.0
      %2223 = vmatprep.subr.mxu0 0.0
      %2224 = vmatpush1.msra.mxu0 0.0
      %2225 = vmatprep.subr.mxu0 0.0
      %2226 = vmatpush1.msra.mxu0 0.0
      %2227 = vmatprep.subr.mxu0 0.0
      %2228 = vmatpush1.msra.mxu0 0.0
      %2229 = vmatprep.subr.mxu0 0.0
      %2230 = vmatpush1.msra.mxu0 0.0
      %2231 = vmatprep.subr.mxu0 0.0
      %2232 = vmatpush1.msra.mxu0 0.0
      %2233 = vmatprep.subr.mxu0 0.0
      %2234 = vmatpush1.msra.mxu0 0.0
      %2235 = vmatprep.subr.mxu0 0.0
      %2236 = vmatpush1.msra.mxu0 0.0
      %2237 = vmatprep.subr.mxu0 0.0
      %2238 = vmatpush1.msra.mxu0 0.0
      %2239 = vmatprep.subr.mxu0 0.0
      %2240 = vmatpush1.msra.mxu0 0.0
      %2241 = vmatprep.subr.mxu0 0.0
      %2242 = vmatpush1.msra.mxu0 0.0
      %2243 = vmatprep.subr.mxu0 0.0
      %2244 = vmatpush1.msra.mxu0 0.0
      %2245 = vmatprep.subr.mxu0 0.0
      %2246 = vmatpush1.msra.mxu0 0.0
      %2247 = vmatprep.subr.mxu0 0.0
      %2248 = vmatpush1.msra.mxu0 0.0
      %2249 = vmatprep.subr.mxu0 0.0
      %2250 = vmatpush1.msra.mxu0 0.0
      %2251 = vmatprep.subr.mxu0 0.0
      %2252 = vmatpush1.msra.mxu0 0.0
      %2253 = vmatprep.subr.mxu0 0.0
      %2254 = vmatpush1.msra.mxu0 0.0
      %2255 = vmatprep.subr.mxu0 0.0
      %2256 = vmatpush1.msra.mxu0 0.0
      %2257 = vmatprep.subr.mxu0 0.0
      %2258 = vmatpush1.msra.mxu0 0.0
      %2259 = vmatprep.subr.mxu0 0.0
      %2260 = vmatpush1.msra.mxu0 0.0
      %2261 = vmatprep.subr.mxu0 0.0
      %2262 = vmatpush1.msra.mxu0 0.0
      %2263 = vmatprep.subr.mxu0 0.0
      %2264 = vmatpush1.msra.mxu0 0.0
      %2265 = vmatprep.subr.mxu0 0.0
      %2266 = vmatpush1.msra.mxu0 0.0
      %2267 = vmatprep.subr.mxu0 0.0
      %2268 = vmatpush1.msra.mxu0 0.0
      %2269 = vmatprep.subr.mxu0 0.0
      %2270 = vmatpush1.msra.mxu0 0.0
      %2271 = vmatprep.subr.mxu0 0.0
      %2272 = vmatpush1.msra.mxu0 0.0
      %2273 = vmatprep.subr.mxu0 0.0
      %2274 = vmatpush1.msra.mxu0 0.0
      %2275 = vmatprep.subr.mxu0 0.0
      %2276 = vmatpush1.msra.mxu0 0.0
      %2277 = vmatprep.subr.mxu0 0.0
      %2278 = vmatpush1.msra.mxu0 0.0
      %2279 = vmatprep.mubr.f32.mxu0 0.0
      %2280 = vmatmul.mubr.f32.gmra.mrb[0].mxu0 %v2209
      %v2281 = vpop.f32.mrb[0].mxu0
      %v2282 = vadd.f32 0.0, %v2281
      %v2283 = vpop.f32.mrb[0].mxu0
      %v2284 = vadd.f32 0.0, %v2283
      %2285 = vdwg.mxu0
      %2286 = vrot.lane.b32.xlu0 %v2192, 17
      %v2287 = vpop.permute.xlu0 %2286
      %2288 = vrot.lane.b32.xlu0 %v2199, 17
      %v2289 = vpop.permute.xlu0 %2288
      %2290 = vrot.lane.b32.xlu0 %v2193, 17
      %v2291 = vpop.permute.xlu0 %2290
      %v2292 = vsel %vm472, %v2287, %v2289
      %v2293 = vsel %vm472, %v2289, %v2291
      %v2295 = vsel %vm475, %v2194, 0
      %v2297 = vsel %vm479, %v2292, 0
      %v2299 = vsel %vm479, %v2293, 0
      %2301 = vmatprep.subr.mxu0 %v2299
      %2302 = vmatpush1.msra.mxu0 %v2297
      %2303 = vmatprep.subr.mxu0 0.0
      %2304 = vmatpush1.msra.mxu0 0.0
      %2305 = vmatprep.subr.mxu0 0.0
      %2306 = vmatpush1.msra.mxu0 0.0
      %2307 = vmatprep.subr.mxu0 0.0
      %2308 = vmatpush1.msra.mxu0 0.0
      %2309 = vmatprep.subr.mxu0 0.0
      %2310 = vmatpush1.msra.mxu0 0.0
      %2311 = vmatprep.subr.mxu0 0.0
      %2312 = vmatpush1.msra.mxu0 0.0
      %2313 = vmatprep.subr.mxu0 0.0
      %2314 = vmatpush1.msra.mxu0 0.0
      %2315 = vmatprep.subr.mxu0 0.0
      %2316 = vmatpush1.msra.mxu0 0.0
      %2317 = vmatprep.subr.mxu0 0.0
      %2318 = vmatpush1.msra.mxu0 0.0
      %2319 = vmatprep.subr.mxu0 0.0
      %2320 = vmatpush1.msra.mxu0 0.0
      %2321 = vmatprep.subr.mxu0 0.0
      %2322 = vmatpush1.msra.mxu0 0.0
      %2323 = vmatprep.subr.mxu0 0.0
      %2324 = vmatpush1.msra.mxu0 0.0
      %2325 = vmatprep.subr.mxu0 0.0
      %2326 = vmatpush1.msra.mxu0 0.0
      %2327 = vmatprep.subr.mxu0 0.0
      %2328 = vmatpush1.msra.mxu0 0.0
      %2329 = vmatprep.subr.mxu0 0.0
      %2330 = vmatpush1.msra.mxu0 0.0
      %2331 = vmatprep.subr.mxu0 0.0
      %2332 = vmatpush1.msra.mxu0 0.0
      %2333 = vmatprep.subr.mxu0 0.0
      %2334 = vmatpush1.msra.mxu0 0.0
      %2335 = vmatprep.subr.mxu0 0.0
      %2336 = vmatpush1.msra.mxu0 0.0
      %2337 = vmatprep.subr.mxu0 0.0
      %2338 = vmatpush1.msra.mxu0 0.0
      %2339 = vmatprep.subr.mxu0 0.0
      %2340 = vmatpush1.msra.mxu0 0.0
      %2341 = vmatprep.subr.mxu0 0.0
      %2342 = vmatpush1.msra.mxu0 0.0
      %2343 = vmatprep.subr.mxu0 0.0
      %2344 = vmatpush1.msra.mxu0 0.0
      %2345 = vmatprep.subr.mxu0 0.0
      %2346 = vmatpush1.msra.mxu0 0.0
      %2347 = vmatprep.subr.mxu0 0.0
      %2348 = vmatpush1.msra.mxu0 0.0
      %2349 = vmatprep.subr.mxu0 0.0
      %2350 = vmatpush1.msra.mxu0 0.0
      %2351 = vmatprep.subr.mxu0 0.0
      %2352 = vmatpush1.msra.mxu0 0.0
      %2353 = vmatprep.subr.mxu0 0.0
      %2354 = vmatpush1.msra.mxu0 0.0
      %2355 = vmatprep.subr.mxu0 0.0
      %2356 = vmatpush1.msra.mxu0 0.0
      %2357 = vmatprep.subr.mxu0 0.0
      %2358 = vmatpush1.msra.mxu0 0.0
      %2359 = vmatprep.subr.mxu0 0.0
      %2360 = vmatpush1.msra.mxu0 0.0
      %2361 = vmatprep.subr.mxu0 0.0
      %2362 = vmatpush1.msra.mxu0 0.0
      %2363 = vmatprep.subr.mxu0 0.0
      %2364 = vmatpush1.msra.mxu0 0.0
      %2365 = vmatprep.mubr.f32.mxu0 0.0
      %2366 = vmatmul.mubr.f32.gmra.mrb[0].mxu0 %v2295
      %v2367 = vpop.f32.mrb[0].mxu0
      %v2368 = vadd.f32 %v2282, %v2367
      %v2369 = vpop.f32.mrb[0].mxu0
      %v2370 = vadd.f32 %v2284, %v2369
      %2371 = vdwg.mxu0
      %v2372 = vld [vmem:[#allocation4 + $0x4] sm:$0xff]
      %v2373 = vld [vmem:[#allocation4 + $0xc] sm:$0xf]
      %s2374 = scalar_lea.vmem %s6, 24
      %v2375 = vld [vmem:[%s2374] sm:$0xf]
      %v2378 = vcombine.high %v2372, %v2372
      %2379 = vrot.lane.b32.xlu0 %v2372, 113
      %v2380 = vpop.permute.xlu0 %2379
      %2381 = vrot.lane.b32.xlu0 %v2378, 113
      %v2382 = vpop.permute.xlu0 %2381
      %2383 = vrot.lane.b32.xlu0 %v2373, 113
      %v2384 = vpop.permute.xlu0 %2383
      %v2385 = vsel %vm848, %v2380, %v2382
      %v2386 = vsel %vm848, %v2382, %v2384
      %v2388 = vsel %vm475, %v2375, 0
      %v2390 = vsel %vm479, %v2385, 0
      %v2392 = vsel %vm479, %v2386, 0
      %2394 = vmatprep.subr.mxu0 %v2392
      %2395 = vmatpush1.msra.mxu0 %v2390
      %2396 = vmatprep.subr.mxu0 0.0
      %2397 = vmatpush1.msra.mxu0 0.0
      %2398 = vmatprep.subr.mxu0 0.0
      %2399 = vmatpush1.msra.mxu0 0.0
      %2400 = vmatprep.subr.mxu0 0.0
      %2401 = vmatpush1.msra.mxu0 0.0
      %2402 = vmatprep.subr.mxu0 0.0
      %2403 = vmatpush1.msra.mxu0 0.0
      %2404 = vmatprep.subr.mxu0 0.0
      %2405 = vmatpush1.msra.mxu0 0.0
      %2406 = vmatprep.subr.mxu0 0.0
      %2407 = vmatpush1.msra.mxu0 0.0
      %2408 = vmatprep.subr.mxu0 0.0
      %2409 = vmatpush1.msra.mxu0 0.0
      %2410 = vmatprep.subr.mxu0 0.0
      %2411 = vmatpush1.msra.mxu0 0.0
      %2412 = vmatprep.subr.mxu0 0.0
      %2413 = vmatpush1.msra.mxu0 0.0
      %2414 = vmatprep.subr.mxu0 0.0
      %2415 = vmatpush1.msra.mxu0 0.0
      %2416 = vmatprep.subr.mxu0 0.0
      %2417 = vmatpush1.msra.mxu0 0.0
      %2418 = vmatprep.subr.mxu0 0.0
      %2419 = vmatpush1.msra.mxu0 0.0
      %2420 = vmatprep.subr.mxu0 0.0
      %2421 = vmatpush1.msra.mxu0 0.0
      %2422 = vmatprep.subr.mxu0 0.0
      %2423 = vmatpush1.msra.mxu0 0.0
      %2424 = vmatprep.subr.mxu0 0.0
      %2425 = vmatpush1.msra.mxu0 0.0
      %2426 = vmatprep.subr.mxu0 0.0
      %2427 = vmatpush1.msra.mxu0 0.0
      %2428 = vmatprep.subr.mxu0 0.0
      %2429 = vmatpush1.msra.mxu0 0.0
      %2430 = vmatprep.subr.mxu0 0.0
      %2431 = vmatpush1.msra.mxu0 0.0
      %2432 = vmatprep.subr.mxu0 0.0
      %2433 = vmatpush1.msra.mxu0 0.0
      %2434 = vmatprep.subr.mxu0 0.0
      %2435 = vmatpush1.msra.mxu0 0.0
      %2436 = vmatprep.subr.mxu0 0.0
      %2437 = vmatpush1.msra.mxu0 0.0
      %2438 = vmatprep.subr.mxu0 0.0
      %2439 = vmatpush1.msra.mxu0 0.0
      %2440 = vmatprep.subr.mxu0 0.0
      %2441 = vmatpush1.msra.mxu0 0.0
      %2442 = vmatprep.subr.mxu0 0.0
      %2443 = vmatpush1.msra.mxu0 0.0
      %2444 = vmatprep.subr.mxu0 0.0
      %2445 = vmatpush1.msra.mxu0 0.0
      %2446 = vmatprep.subr.mxu0 0.0
      %2447 = vmatpush1.msra.mxu0 0.0
      %2448 = vmatprep.subr.mxu0 0.0
      %2449 = vmatpush1.msra.mxu0 0.0
      %2450 = vmatprep.subr.mxu0 0.0
      %2451 = vmatpush1.msra.mxu0 0.0
      %2452 = vmatprep.subr.mxu0 0.0
      %2453 = vmatpush1.msra.mxu0 0.0
      %2454 = vmatprep.subr.mxu0 0.0
      %2455 = vmatpush1.msra.mxu0 0.0
      %2456 = vmatprep.subr.mxu0 0.0
      %2457 = vmatpush1.msra.mxu0 0.0
      %2458 = vmatprep.mubr.f32.mxu0 0.0
      %2459 = vmatmul.mubr.f32.gmra.mrb[0].mxu0 %v2388
      %v2460 = vpop.f32.mrb[0].mxu0
      %v2461 = vadd.f32 0.0, %v2460
      %v2462 = vpop.f32.mrb[0].mxu0
      %v2463 = vadd.f32 0.0, %v2462
      %2464 = vdwg.mxu0
      %v2465 = vadd.f32 %v2368, %v2461
      %v2466 = vadd.f32 %v2370, %v2463
      %v2467 = vmul.f32 %v2465, %v1030
      %v2468 = vmul.f32 %v2466, %v1034
      %v2469 = vadd.f32 %v2467, 0.0
      %v2470 = vadd.f32 %v2468, 0.0
      %v2471 = vld [vmem:[#allocation4] sm:$0xff]
      %v2472 = vld [vmem:[#allocation4 + $0x8] sm:$0xf]
      %s2473 = scalar_lea.vmem %s6, 4
      %v2474 = vld [vmem:[%s2473] sm:$0xf]
      %v2475 = vld [vmem:[#allocation4 + $0x4] sm:$0xff]
      %s2476 = scalar_lea.vmem %s6, 16
      %v2477 = vld [vmem:[%s2476] sm:$0xf]
      %v2479 = vcombine.high %v2475, %v2475
      %v2481 = vsel %vm475, %v2477, 0
      %v2483 = vsel %vm479, %v2475, 0
      %v2485 = vsel %vm479, %v2479, 0
      %2487 = vmatprep.subr.mxu0 %v2485
      %2488 = vmatpush1.msra.mxu0 %v2483
      %2489 = vmatprep.subr.mxu0 0.0
      %2490 = vmatpush1.msra.mxu0 0.0
      %2491 = vmatprep.subr.mxu0 0.0
      %2492 = vmatpush1.msra.mxu0 0.0
      %2493 = vmatprep.subr.mxu0 0.0
      %2494 = vmatpush1.msra.mxu0 0.0
      %2495 = vmatprep.subr.mxu0 0.0
      %2496 = vmatpush1.msra.mxu0 0.0
      %2497 = vmatprep.subr.mxu0 0.0
      %2498 = vmatpush1.msra.mxu0 0.0
      %2499 = vmatprep.subr.mxu0 0.0
      %2500 = vmatpush1.msra.mxu0 0.0
      %2501 = vmatprep.subr.mxu0 0.0
      %2502 = vmatpush1.msra.mxu0 0.0
      %2503 = vmatprep.subr.mxu0 0.0
      %2504 = vmatpush1.msra.mxu0 0.0
      %2505 = vmatprep.subr.mxu0 0.0
      %2506 = vmatpush1.msra.mxu0 0.0
      %2507 = vmatprep.subr.mxu0 0.0
      %2508 = vmatpush1.msra.mxu0 0.0
      %2509 = vmatprep.subr.mxu0 0.0
      %2510 = vmatpush1.msra.mxu0 0.0
      %2511 = vmatprep.subr.mxu0 0.0
      %2512 = vmatpush1.msra.mxu0 0.0
      %2513 = vmatprep.subr.mxu0 0.0
      %2514 = vmatpush1.msra.mxu0 0.0
      %2515 = vmatprep.subr.mxu0 0.0
      %2516 = vmatpush1.msra.mxu0 0.0
      %2517 = vmatprep.subr.mxu0 0.0
      %2518 = vmatpush1.msra.mxu0 0.0
      %2519 = vmatprep.subr.mxu0 0.0
      %2520 = vmatpush1.msra.mxu0 0.0
      %2521 = vmatprep.subr.mxu0 0.0
      %2522 = vmatpush1.msra.mxu0 0.0
      %2523 = vmatprep.subr.mxu0 0.0
      %2524 = vmatpush1.msra.mxu0 0.0
      %2525 = vmatprep.subr.mxu0 0.0
      %2526 = vmatpush1.msra.mxu0 0.0
      %2527 = vmatprep.subr.mxu0 0.0
      %2528 = vmatpush1.msra.mxu0 0.0
      %2529 = vmatprep.subr.mxu0 0.0
      %2530 = vmatpush1.msra.mxu0 0.0
      %2531 = vmatprep.subr.mxu0 0.0
      %2532 = vmatpush1.msra.mxu0 0.0
      %2533 = vmatprep.subr.mxu0 0.0
      %2534 = vmatpush1.msra.mxu0 0.0
      %2535 = vmatprep.subr.mxu0 0.0
      %2536 = vmatpush1.msra.mxu0 0.0
      %2537 = vmatprep.subr.mxu0 0.0
      %2538 = vmatpush1.msra.mxu0 0.0
      %2539 = vmatprep.subr.mxu0 0.0
      %2540 = vmatpush1.msra.mxu0 0.0
      %2541 = vmatprep.subr.mxu0 0.0
      %2542 = vmatpush1.msra.mxu0 0.0
      %2543 = vmatprep.subr.mxu0 0.0
      %2544 = vmatpush1.msra.mxu0 0.0
      %2545 = vmatprep.subr.mxu0 0.0
      %2546 = vmatpush1.msra.mxu0 0.0
      %2547 = vmatprep.subr.mxu0 0.0
      %2548 = vmatpush1.msra.mxu0 0.0
      %2549 = vmatprep.subr.mxu0 0.0
      %2550 = vmatpush1.msra.mxu0 0.0
      %2551 = vmatprep.mubr.f32.mxu0 0.0
      %2552 = vmatmul.mubr.f32.gmra.mrb[0].mxu0 %v2481
      %v2553 = vpop.f32.mrb[0].mxu0
      %v2554 = vadd.f32 0.0, %v2553
      %v2555 = vpop.f32.mrb[0].mxu0
      %v2556 = vadd.f32 0.0, %v2555
      %2557 = vdwg.mxu0
      %v2560 = vcombine.high %v2471, %v2471
      %2561 = vrot.lane.b32.xlu0 %v2471, 16
      %v2562 = vpop.permute.xlu0 %2561
      %2563 = vrot.lane.b32.xlu0 %v2560, 16
      %v2564 = vpop.permute.xlu0 %2563
      %2565 = vrot.lane.b32.xlu0 %v2472, 16
      %v2566 = vpop.permute.xlu0 %2565
      %v2567 = vsel %vm1058, %v2562, %v2564
      %v2568 = vsel %vm1058, %v2564, %v2566
      %v2570 = vsel %vm475, %v2474, 0
      %v2572 = vsel %vm479, %v2567, 0
      %v2574 = vsel %vm479, %v2568, 0
      %2576 = vmatprep.subr.mxu0 %v2574
      %2577 = vmatpush1.msra.mxu0 %v2572
      %2578 = vmatprep.subr.mxu0 0.0
      %2579 = vmatpush1.msra.mxu0 0.0
      %2580 = vmatprep.subr.mxu0 0.0
      %2581 = vmatpush1.msra.mxu0 0.0
      %2582 = vmatprep.subr.mxu0 0.0
      %2583 = vmatpush1.msra.mxu0 0.0
      %2584 = vmatprep.subr.mxu0 0.0
      %2585 = vmatpush1.msra.mxu0 0.0
      %2586 = vmatprep.subr.mxu0 0.0
      %2587 = vmatpush1.msra.mxu0 0.0
      %2588 = vmatprep.subr.mxu0 0.0
      %2589 = vmatpush1.msra.mxu0 0.0
      %2590 = vmatprep.subr.mxu0 0.0
      %2591 = vmatpush1.msra.mxu0 0.0
      %2592 = vmatprep.subr.mxu0 0.0
      %2593 = vmatpush1.msra.mxu0 0.0
      %2594 = vmatprep.subr.mxu0 0.0
      %2595 = vmatpush1.msra.mxu0 0.0
      %2596 = vmatprep.subr.mxu0 0.0
      %2597 = vmatpush1.msra.mxu0 0.0
      %2598 = vmatprep.subr.mxu0 0.0
      %2599 = vmatpush1.msra.mxu0 0.0
      %2600 = vmatprep.subr.mxu0 0.0
      %2601 = vmatpush1.msra.mxu0 0.0
      %2602 = vmatprep.subr.mxu0 0.0
      %2603 = vmatpush1.msra.mxu0 0.0
      %2604 = vmatprep.subr.mxu0 0.0
      %2605 = vmatpush1.msra.mxu0 0.0
      %2606 = vmatprep.subr.mxu0 0.0
      %2607 = vmatpush1.msra.mxu0 0.0
      %2608 = vmatprep.subr.mxu0 0.0
      %2609 = vmatpush1.msra.mxu0 0.0
      %2610 = vmatprep.subr.mxu0 0.0
      %2611 = vmatpush1.msra.mxu0 0.0
      %2612 = vmatprep.subr.mxu0 0.0
      %2613 = vmatpush1.msra.mxu0 0.0
      %2614 = vmatprep.subr.mxu0 0.0
      %2615 = vmatpush1.msra.mxu0 0.0
      %2616 = vmatprep.subr.mxu0 0.0
      %2617 = vmatpush1.msra.mxu0 0.0
      %2618 = vmatprep.subr.mxu0 0.0
      %2619 = vmatpush1.msra.mxu0 0.0
      %2620 = vmatprep.subr.mxu0 0.0
      %2621 = vmatpush1.msra.mxu0 0.0
      %2622 = vmatprep.subr.mxu0 0.0
      %2623 = vmatpush1.msra.mxu0 0.0
      %2624 = vmatprep.subr.mxu0 0.0
      %2625 = vmatpush1.msra.mxu0 0.0
      %2626 = vmatprep.subr.mxu0 0.0
      %2627 = vmatpush1.msra.mxu0 0.0
      %2628 = vmatprep.subr.mxu0 0.0
      %2629 = vmatpush1.msra.mxu0 0.0
      %2630 = vmatprep.subr.mxu0 0.0
      %2631 = vmatpush1.msra.mxu0 0.0
      %2632 = vmatprep.subr.mxu0 0.0
      %2633 = vmatpush1.msra.mxu0 0.0
      %2634 = vmatprep.subr.mxu0 0.0
      %2635 = vmatpush1.msra.mxu0 0.0
      %2636 = vmatprep.subr.mxu0 0.0
      %2637 = vmatpush1.msra.mxu0 0.0
      %2638 = vmatprep.subr.mxu0 0.0
      %2639 = vmatpush1.msra.mxu0 0.0
      %2640 = vmatprep.mubr.f32.mxu0 0.0
      %2641 = vmatmul.mubr.f32.gmra.mrb[0].mxu0 %v2570
      %v2642 = vpop.f32.mrb[0].mxu0
      %v2643 = vadd.f32 %v2554, %v2642
      %v2644 = vpop.f32.mrb[0].mxu0
      %v2645 = vadd.f32 %v2556, %v2644
      %2646 = vdwg.mxu0
      %v2647 = vld [vmem:[#allocation4 + $0x4] sm:$0xff]
      %v2648 = vld [vmem:[#allocation4 + $0xc] sm:$0xf]
      %s2649 = scalar_lea.vmem %s6, 28
      %v2650 = vld [vmem:[%s2649] sm:$0xf]
      %v2653 = vcombine.high %v2647, %v2647
      %2654 = vrot.lane.b32.xlu0 %v2647, 112
      %v2655 = vpop.permute.xlu0 %2654
      %2656 = vrot.lane.b32.xlu0 %v2653, 112
      %v2657 = vpop.permute.xlu0 %2656
      %2658 = vrot.lane.b32.xlu0 %v2648, 112
      %v2659 = vpop.permute.xlu0 %2658
      %v2660 = vsel %vm1411, %v2655, %v2657
      %v2661 = vsel %vm1411, %v2657, %v2659
      %v2663 = vsel %vm475, %v2650, 0
      %v2665 = vsel %vm479, %v2660, 0
      %v2667 = vsel %vm479, %v2661, 0
      %2669 = vmatprep.subr.mxu0 %v2667
      %2670 = vmatpush1.msra.mxu0 %v2665
      %2671 = vmatprep.subr.mxu0 0.0
      %2672 = vmatpush1.msra.mxu0 0.0
      %2673 = vmatprep.subr.mxu0 0.0
      %2674 = vmatpush1.msra.mxu0 0.0
      %2675 = vmatprep.subr.mxu0 0.0
      %2676 = vmatpush1.msra.mxu0 0.0
      %2677 = vmatprep.subr.mxu0 0.0
      %2678 = vmatpush1.msra.mxu0 0.0
      %2679 = vmatprep.subr.mxu0 0.0
      %2680 = vmatpush1.msra.mxu0 0.0
      %2681 = vmatprep.subr.mxu0 0.0
      %2682 = vmatpush1.msra.mxu0 0.0
      %2683 = vmatprep.subr.mxu0 0.0
      %2684 = vmatpush1.msra.mxu0 0.0
      %2685 = vmatprep.subr.mxu0 0.0
      %2686 = vmatpush1.msra.mxu0 0.0
      %2687 = vmatprep.subr.mxu0 0.0
      %2688 = vmatpush1.msra.mxu0 0.0
      %2689 = vmatprep.subr.mxu0 0.0
      %2690 = vmatpush1.msra.mxu0 0.0
      %2691 = vmatprep.subr.mxu0 0.0
      %2692 = vmatpush1.msra.mxu0 0.0
      %2693 = vmatprep.subr.mxu0 0.0
      %2694 = vmatpush1.msra.mxu0 0.0
      %2695 = vmatprep.subr.mxu0 0.0
      %2696 = vmatpush1.msra.mxu0 0.0
      %2697 = vmatprep.subr.mxu0 0.0
      %2698 = vmatpush1.msra.mxu0 0.0
      %2699 = vmatprep.subr.mxu0 0.0
      %2700 = vmatpush1.msra.mxu0 0.0
      %2701 = vmatprep.subr.mxu0 0.0
      %2702 = vmatpush1.msra.mxu0 0.0
      %2703 = vmatprep.subr.mxu0 0.0
      %2704 = vmatpush1.msra.mxu0 0.0
      %2705 = vmatprep.subr.mxu0 0.0
      %2706 = vmatpush1.msra.mxu0 0.0
      %2707 = vmatprep.subr.mxu0 0.0
      %2708 = vmatpush1.msra.mxu0 0.0
      %2709 = vmatprep.subr.mxu0 0.0
      %2710 = vmatpush1.msra.mxu0 0.0
      %2711 = vmatprep.subr.mxu0 0.0
      %2712 = vmatpush1.msra.mxu0 0.0
      %2713 = vmatprep.subr.mxu0 0.0
      %2714 = vmatpush1.msra.mxu0 0.0
      %2715 = vmatprep.subr.mxu0 0.0
      %2716 = vmatpush1.msra.mxu0 0.0
      %2717 = vmatprep.subr.mxu0 0.0
      %2718 = vmatpush1.msra.mxu0 0.0
      %2719 = vmatprep.subr.mxu0 0.0
      %2720 = vmatpush1.msra.mxu0 0.0
      %2721 = vmatprep.subr.mxu0 0.0
      %2722 = vmatpush1.msra.mxu0 0.0
      %2723 = vmatprep.subr.mxu0 0.0
      %2724 = vmatpush1.msra.mxu0 0.0
      %2725 = vmatprep.subr.mxu0 0.0
      %2726 = vmatpush1.msra.mxu0 0.0
      %2727 = vmatprep.subr.mxu0 0.0
      %2728 = vmatpush1.msra.mxu0 0.0
      %2729 = vmatprep.subr.mxu0 0.0
      %2730 = vmatpush1.msra.mxu0 0.0
      %2731 = vmatprep.subr.mxu0 0.0
      %2732 = vmatpush1.msra.mxu0 0.0
      %2733 = vmatprep.mubr.f32.mxu0 0.0
      %2734 = vmatmul.mubr.f32.gmra.mrb[0].mxu0 %v2663
      %v2735 = vpop.f32.mrb[0].mxu0
      %v2736 = vadd.f32 0.0, %v2735
      %v2737 = vpop.f32.mrb[0].mxu0
      %v2738 = vadd.f32 0.0, %v2737
      %2739 = vdwg.mxu0
      %v2740 = vadd.f32 %v2643, %v2736
      %v2741 = vadd.f32 %v2645, %v2738
      %v2742 = vadd.f32 %v2469, %v2740
      %v2743 = vadd.f32 %v2470, %v2741
      %v2744 = vld [vmem:[#allocation4] sm:$0xff]
      %v2745 = vld [vmem:[#allocation4 + $0x8] sm:$0xf]
      %s2746 = scalar_lea.vmem %s6, 8
      %v2747 = vld [vmem:[%s2746] sm:$0xf]
      %v2748 = vld [vmem:[#allocation4 + $0x4] sm:$0xff]
      %v2749 = vld [vmem:[#allocation4 + $0xc] sm:$0xf]
      %s2750 = scalar_lea.vmem %s6, 20
      %v2751 = vld [vmem:[%s2750] sm:$0xf]
      %v2754 = vcombine.high %v2748, %v2748
      %2755 = vrot.lane.b32.xlu0 %v2748, 127
      %v2756 = vpop.permute.xlu0 %2755
      %2757 = vrot.lane.b32.xlu0 %v2754, 127
      %v2758 = vpop.permute.xlu0 %2757
      %2759 = vrot.lane.b32.xlu0 %v2749, 127
      %v2760 = vpop.permute.xlu0 %2759
      %v2761 = vsel %vm1791, %v2756, %v2758
      %v2762 = vsel %vm1791, %v2758, %v2760
      %v2764 = vsel %vm475, %v2751, 0
      %v2766 = vsel %vm479, %v2761, 0
      %v2768 = vsel %vm479, %v2762, 0
      %2770 = vmatprep.subr.mxu0 %v2768
      %2771 = vmatpush1.msra.mxu0 %v2766
      %2772 = vmatprep.subr.mxu0 0.0
      %2773 = vmatpush1.msra.mxu0 0.0
      %2774 = vmatprep.subr.mxu0 0.0
      %2775 = vmatpush1.msra.mxu0 0.0
      %2776 = vmatprep.subr.mxu0 0.0
      %2777 = vmatpush1.msra.mxu0 0.0
      %2778 = vmatprep.subr.mxu0 0.0
      %2779 = vmatpush1.msra.mxu0 0.0
      %2780 = vmatprep.subr.mxu0 0.0
      %2781 = vmatpush1.msra.mxu0 0.0
      %2782 = vmatprep.subr.mxu0 0.0
      %2783 = vmatpush1.msra.mxu0 0.0
      %2784 = vmatprep.subr.mxu0 0.0
      %2785 = vmatpush1.msra.mxu0 0.0
      %2786 = vmatprep.subr.mxu0 0.0
      %2787 = vmatpush1.msra.mxu0 0.0
      %2788 = vmatprep.subr.mxu0 0.0
      %2789 = vmatpush1.msra.mxu0 0.0
      %2790 = vmatprep.subr.mxu0 0.0
      %2791 = vmatpush1.msra.mxu0 0.0
      %2792 = vmatprep.subr.mxu0 0.0
      %2793 = vmatpush1.msra.mxu0 0.0
      %2794 = vmatprep.subr.mxu0 0.0
      %2795 = vmatpush1.msra.mxu0 0.0
      %2796 = vmatprep.subr.mxu0 0.0
      %2797 = vmatpush1.msra.mxu0 0.0
      %2798 = vmatprep.subr.mxu0 0.0
      %2799 = vmatpush1.msra.mxu0 0.0
      %2800 = vmatprep.subr.mxu0 0.0
      %2801 = vmatpush1.msra.mxu0 0.0
      %2802 = vmatprep.subr.mxu0 0.0
      %2803 = vmatpush1.msra.mxu0 0.0
      %2804 = vmatprep.subr.mxu0 0.0
      %2805 = vmatpush1.msra.mxu0 0.0
      %2806 = vmatprep.subr.mxu0 0.0
      %2807 = vmatpush1.msra.mxu0 0.0
      %2808 = vmatprep.subr.mxu0 0.0
      %2809 = vmatpush1.msra.mxu0 0.0
      %2810 = vmatprep.subr.mxu0 0.0
      %2811 = vmatpush1.msra.mxu0 0.0
      %2812 = vmatprep.subr.mxu0 0.0
      %2813 = vmatpush1.msra.mxu0 0.0
      %2814 = vmatprep.subr.mxu0 0.0
      %2815 = vmatpush1.msra.mxu0 0.0
      %2816 = vmatprep.subr.mxu0 0.0
      %2817 = vmatpush1.msra.mxu0 0.0
      %2818 = vmatprep.subr.mxu0 0.0
      %2819 = vmatpush1.msra.mxu0 0.0
      %2820 = vmatprep.subr.mxu0 0.0
      %2821 = vmatpush1.msra.mxu0 0.0
      %2822 = vmatprep.subr.mxu0 0.0
      %2823 = vmatpush1.msra.mxu0 0.0
      %2824 = vmatprep.subr.mxu0 0.0
      %2825 = vmatpush1.msra.mxu0 0.0
      %2826 = vmatprep.subr.mxu0 0.0
      %2827 = vmatpush1.msra.mxu0 0.0
      %2828 = vmatprep.subr.mxu0 0.0
      %2829 = vmatpush1.msra.mxu0 0.0
      %2830 = vmatprep.subr.mxu0 0.0
      %2831 = vmatpush1.msra.mxu0 0.0
      %2832 = vmatprep.subr.mxu0 0.0
      %2833 = vmatpush1.msra.mxu0 0.0
      %2834 = vmatprep.mubr.f32.mxu0 0.0
      %2835 = vmatmul.mubr.f32.gmra.mrb[0].mxu0 %v2764
      %v2836 = vpop.f32.mrb[0].mxu0
      %v2837 = vadd.f32 0.0, %v2836
      %v2838 = vpop.f32.mrb[0].mxu0
      %v2839 = vadd.f32 0.0, %v2838
      %2840 = vdwg.mxu0
      %v2843 = vcombine.high %v2744, %v2744
      %2844 = vrot.lane.b32.xlu0 %v2744, 15
      %v2845 = vpop.permute.xlu0 %2844
      %2846 = vrot.lane.b32.xlu0 %v2843, 15
      %v2847 = vpop.permute.xlu0 %2846
      %2848 = vrot.lane.b32.xlu0 %v2745, 15
      %v2849 = vpop.permute.xlu0 %2848
      %v2850 = vsel %vm1608, %v2845, %v2847
      %v2851 = vsel %vm1608, %v2847, %v2849
      %v2853 = vsel %vm475, %v2747, 0
      %v2855 = vsel %vm479, %v2850, 0
      %v2857 = vsel %vm479, %v2851, 0
      %2859 = vmatprep.subr.mxu0 %v2857
      %2860 = vmatpush1.msra.mxu0 %v2855
      %2861 = vmatprep.subr.mxu0 0.0
      %2862 = vmatpush1.msra.mxu0 0.0
      %2863 = vmatprep.subr.mxu0 0.0
      %2864 = vmatpush1.msra.mxu0 0.0
      %2865 = vmatprep.subr.mxu0 0.0
      %2866 = vmatpush1.msra.mxu0 0.0
      %2867 = vmatprep.subr.mxu0 0.0
      %2868 = vmatpush1.msra.mxu0 0.0
      %2869 = vmatprep.subr.mxu0 0.0
      %2870 = vmatpush1.msra.mxu0 0.0
      %2871 = vmatprep.subr.mxu0 0.0
      %2872 = vmatpush1.msra.mxu0 0.0
      %2873 = vmatprep.subr.mxu0 0.0
      %2874 = vmatpush1.msra.mxu0 0.0
      %2875 = vmatprep.subr.mxu0 0.0
      %2876 = vmatpush1.msra.mxu0 0.0
      %2877 = vmatprep.subr.mxu0 0.0
      %2878 = vmatpush1.msra.mxu0 0.0
      %2879 = vmatprep.subr.mxu0 0.0
      %2880 = vmatpush1.msra.mxu0 0.0
      %2881 = vmatprep.subr.mxu0 0.0
      %2882 = vmatpush1.msra.mxu0 0.0
      %2883 = vmatprep.subr.mxu0 0.0
      %2884 = vmatpush1.msra.mxu0 0.0
      %2885 = vmatprep.subr.mxu0 0.0
      %2886 = vmatpush1.msra.mxu0 0.0
      %2887 = vmatprep.subr.mxu0 0.0
      %2888 = vmatpush1.msra.mxu0 0.0
      %2889 = vmatprep.subr.mxu0 0.0
      %2890 = vmatpush1.msra.mxu0 0.0
      %2891 = vmatprep.subr.mxu0 0.0
      %2892 = vmatpush1.msra.mxu0 0.0
      %2893 = vmatprep.subr.mxu0 0.0
      %2894 = vmatpush1.msra.mxu0 0.0
      %2895 = vmatprep.subr.mxu0 0.0
      %2896 = vmatpush1.msra.mxu0 0.0
      %2897 = vmatprep.subr.mxu0 0.0
      %2898 = vmatpush1.msra.mxu0 0.0
      %2899 = vmatprep.subr.mxu0 0.0
      %2900 = vmatpush1.msra.mxu0 0.0
      %2901 = vmatprep.subr.mxu0 0.0
      %2902 = vmatpush1.msra.mxu0 0.0
      %2903 = vmatprep.subr.mxu0 0.0
      %2904 = vmatpush1.msra.mxu0 0.0
      %2905 = vmatprep.subr.mxu0 0.0
      %2906 = vmatpush1.msra.mxu0 0.0
      %2907 = vmatprep.subr.mxu0 0.0
      %2908 = vmatpush1.msra.mxu0 0.0
      %2909 = vmatprep.subr.mxu0 0.0
      %2910 = vmatpush1.msra.mxu0 0.0
      %2911 = vmatprep.subr.mxu0 0.0
      %2912 = vmatpush1.msra.mxu0 0.0
      %2913 = vmatprep.subr.mxu0 0.0
      %2914 = vmatpush1.msra.mxu0 0.0
      %2915 = vmatprep.subr.mxu0 0.0
      %2916 = vmatpush1.msra.mxu0 0.0
      %2917 = vmatprep.subr.mxu0 0.0
      %2918 = vmatpush1.msra.mxu0 0.0
      %2919 = vmatprep.subr.mxu0 0.0
      %2920 = vmatpush1.msra.mxu0 0.0
      %2921 = vmatprep.subr.mxu0 0.0
      %2922 = vmatpush1.msra.mxu0 0.0
      %2923 = vmatprep.mubr.f32.mxu0 0.0
      %2924 = vmatmul.mubr.f32.gmra.mrb[0].mxu0 %v2853
      %v2925 = vpop.f32.mrb[0].mxu0
      %v2926 = vadd.f32 %v2837, %v2925
      %v2927 = vpop.f32.mrb[0].mxu0
      %v2928 = vadd.f32 %v2839, %v2927
      %2929 = vdwg.mxu0
      %v2930 = vld [vmem:[#allocation4 + $0x4] sm:$0xff]
      %v2931 = vld [vmem:[#allocation4 + $0xc] sm:$0xf]
      %s2932 = scalar_lea.vmem %s6, 32
      %v2933 = vld [vmem:[%s2932] sm:$0xf]
      %v2936 = vcombine.high %v2930, %v2930
      %2937 = vrot.lane.b32.xlu0 %v2930, 111
      %v2938 = vpop.permute.xlu0 %2937
      %2939 = vrot.lane.b32.xlu0 %v2936, 111
      %v2940 = vpop.permute.xlu0 %2939
      %2941 = vrot.lane.b32.xlu0 %v2931, 111
      %v2942 = vpop.permute.xlu0 %2941
      %v2943 = vsel %vm1982, %v2938, %v2940
      %v2944 = vsel %vm1982, %v2940, %v2942
      %v2946 = vsel %vm475, %v2933, 0
      %v2948 = vsel %vm479, %v2943, 0
      %v2950 = vsel %vm479, %v2944, 0
      %2952 = vmatprep.subr.mxu0 %v2950
      %2953 = vmatpush1.msra.mxu0 %v2948
      %2954 = vmatprep.subr.mxu0 0.0
      %2955 = vmatpush1.msra.mxu0 0.0
      %2956 = vmatprep.subr.mxu0 0.0
      %2957 = vmatpush1.msra.mxu0 0.0
      %2958 = vmatprep.subr.mxu0 0.0
      %2959 = vmatpush1.msra.mxu0 0.0
      %2960 = vmatprep.subr.mxu0 0.0
      %2961 = vmatpush1.msra.mxu0 0.0
      %2962 = vmatprep.subr.mxu0 0.0
      %2963 = vmatpush1.msra.mxu0 0.0
      %2964 = vmatprep.subr.mxu0 0.0
      %2965 = vmatpush1.msra.mxu0 0.0
      %2966 = vmatprep.subr.mxu0 0.0
      %2967 = vmatpush1.msra.mxu0 0.0
      %2968 = vmatprep.subr.mxu0 0.0
      %2969 = vmatpush1.msra.mxu0 0.0
      %2970 = vmatprep.subr.mxu0 0.0
      %2971 = vmatpush1.msra.mxu0 0.0
      %2972 = vmatprep.subr.mxu0 0.0
      %2973 = vmatpush1.msra.mxu0 0.0
      %2974 = vmatprep.subr.mxu0 0.0
      %2975 = vmatpush1.msra.mxu0 0.0
      %2976 = vmatprep.subr.mxu0 0.0
      %2977 = vmatpush1.msra.mxu0 0.0
      %2978 = vmatprep.subr.mxu0 0.0
      %2979 = vmatpush1.msra.mxu0 0.0
      %2980 = vmatprep.subr.mxu0 0.0
      %2981 = vmatpush1.msra.mxu0 0.0
      %2982 = vmatprep.subr.mxu0 0.0
      %2983 = vmatpush1.msra.mxu0 0.0
      %2984 = vmatprep.subr.mxu0 0.0
      %2985 = vmatpush1.msra.mxu0 0.0
      %2986 = vmatprep.subr.mxu0 0.0
      %2987 = vmatpush1.msra.mxu0 0.0
      %2988 = vmatprep.subr.mxu0 0.0
      %2989 = vmatpush1.msra.mxu0 0.0
      %2990 = vmatprep.subr.mxu0 0.0
      %2991 = vmatpush1.msra.mxu0 0.0
      %2992 = vmatprep.subr.mxu0 0.0
      %2993 = vmatpush1.msra.mxu0 0.0
      %2994 = vmatprep.subr.mxu0 0.0
      %2995 = vmatpush1.msra.mxu0 0.0
      %2996 = vmatprep.subr.mxu0 0.0
      %2997 = vmatpush1.msra.mxu0 0.0
      %2998 = vmatprep.subr.mxu0 0.0
      %2999 = vmatpush1.msra.mxu0 0.0
      %3000 = vmatprep.subr.mxu0 0.0
      %3001 = vmatpush1.msra.mxu0 0.0
      %3002 = vmatprep.subr.mxu0 0.0
      %3003 = vmatpush1.msra.mxu0 0.0
      %3004 = vmatprep.subr.mxu0 0.0
      %3005 = vmatpush1.msra.mxu0 0.0
      %3006 = vmatprep.subr.mxu0 0.0
      %3007 = vmatpush1.msra.mxu0 0.0
      %3008 = vmatprep.subr.mxu0 0.0
      %3009 = vmatpush1.msra.mxu0 0.0
      %3010 = vmatprep.subr.mxu0 0.0
      %3011 = vmatpush1.msra.mxu0 0.0
      %3012 = vmatprep.subr.mxu0 0.0
      %3013 = vmatpush1.msra.mxu0 0.0
      %3014 = vmatprep.subr.mxu0 0.0
      %3015 = vmatpush1.msra.mxu0 0.0
      %3016 = vmatprep.mubr.f32.mxu0 0.0
      %3017 = vmatmul.mubr.f32.gmra.mrb[0].mxu0 %v2946
      %v3018 = vpop.f32.mrb[0].mxu0
      %v3019 = vadd.f32 0.0, %v3018
      %v3020 = vpop.f32.mrb[0].mxu0
      %v3021 = vadd.f32 0.0, %v3020
      %3022 = vdwg.mxu0
      %v3023 = vadd.f32 %v2926, %v3019
      %v3024 = vadd.f32 %v2928, %v3021
      %v3025 = vmul.f32 %v3023, %v2164
      %v3026 = vmul.f32 %v3024, %v2168
      %v3027 = vadd.f32 %v2742, %v3025
      %v3028 = vadd.f32 %v2743, %v3026
      %3030 = vset.pattern.permute.xlu0 0
      %3031 = vperm.xlu0 %3030, %v2191
      %v3032 = vpop.permute.xlu0 %3031
      %v3034 = vadd.f32 %v3027, %v3032
      %v3035 = vadd.f32 %v3028, %v3032
      %v3036 = vmax.f32 %v3034, 0.0
      %v3037 = vmax.f32 %v3035, 0.0
      %v3040 = vcombine.low %v3036, %v3037
      %3042 = vst [vmem:[%s349] sm:$0xff] %v3040
      %p3043 = scmp.lt.s32.totalorder %s20, 1
      %s3044 = scalar_select %p3043, %s20, 1
      %s3045 = smul.addr %s3044, 2
      %s3046 = smul.addr %s3045, 4
      %s3047 = scalar_lea.vmem %s9, %s3046
      // Predicated region
      $region57: #{up_forward.1} parent=55 // pred_check
        %p3048 = pneg %p237
      $region58: #{up_forward.1} parent=55 // pred_check_branch
        %3050 = sbr.rel (%p3048) target = $region60
      $region59: #{up_forward.1} parent=55 // pred_region
        _
      $region60: #{up_forward.1} parent=55 // pred_fallthru
        _
    $region56: #{up_forward.1} parent=5 // pred_fallthru
      _
    %p3051 = scmp.le.s32.totalorder 2, %s15
    // Predicated region
    $region61: #{up_forward.1} parent=5 // pred_check
      %p3052 = pneg %p3051
    $region62: #{up_forward.1} parent=5 // pred_check_branch
      %3054 = sbr.rel (%p3052) target = $region64
    $region63: #{up_forward.1} parent=5 // pred_region
      %s3055 = ssub.s32 %s15, 2
      // Predicated region
      $region65: #{up_forward.1} parent=63 // pred_check
        %p3056 = pneg %p243
      $region66: #{up_forward.1} parent=63 // pred_check_branch
        %3058 = sbr.rel (%p3056) target = $region68
      $region67: #{up_forward.1} parent=63 // pred_region
        %p3059 = scmp.lt.s32.totalorder %s21, 1
        %s3060 = scalar_select %p3059, %s21, 1
        %s3061 = smul.addr %s3060, 2
        %s3062 = smul.addr %s3061, 4
        %s3063 = scalar_lea.vmem %s9, %s3062
      $region68: #{up_forward.1} parent=63 // pred_fallthru
        _
    $region64: #{up_forward.1} parent=5 // pred_fallthru
      _
  $region6: #{up_forward.1} parent=0 // loop_footer
    %s19 = sadd.s32 1, %s15
  $region7: #{up_forward.1} parent=0 // loop_footer_branch
    %14 = sbr.rel target = $region3
  $region8: #{up_forward.1} parent=0 // loop_exit
    _

</llo_original>
